<compile_context>
chip_gen: v5e
topology: v5e:2x2
jax: 0.10.0
libtpu: 0.0.40
codegen_flags: <defaults>
</compile_context>

<pallas_src>
import functools
import math

import jax
import jax.numpy as jnp
from jax.experimental import pallas as pl
from jax.experimental.pallas import tpu as pltpu

LN_EPS = 1e-5                        # torch.nn.LayerNorm default
VMEM_LIMIT = 48 * 1024 * 1024        # under v7x's 64 MiB physical, plenty on v5e/v6e


# ------------------------------------------------------------------ shared in-kernel helpers

def _layer_norm(x, g, b, eps):
    mu = jnp.mean(x, axis=-1, keepdims=True)
    var = jnp.mean((x - mu) ** 2, axis=-1, keepdims=True)
    return (x - mu) * jax.lax.rsqrt(var + eps) * g + b


def _mha_core(num_heads, q, k, v, bias, wo_ref, bo):
    """q: [T, D] f32 (already scaled), k/v: [S, D] f32, bias: [T, S] additive (0 / -1e9).

    Per-head masked softmax attention with the output projection accumulated per head
    (no lane-dim concatenate).  Returns [T, D] f32 (before residual add).
    """
    T, D = q.shape
    dh = D // num_heads
    out = jnp.zeros((T, D), jnp.float32)
    for h in range(num_heads):                           # static unroll; static slices are free
        qh = q[:, h * dh:(h + 1) * dh].astype(jnp.bfloat16)
        kh = k[:, h * dh:(h + 1) * dh].astype(jnp.bfloat16)
        vh = v[:, h * dh:(h + 1) * dh].astype(jnp.bfloat16)
        # contract last dims directly (no explicit k transpose in VMEM)
        s = jax.lax.dot_general(qh, kh, (((1,), (1,)), ((), ())),
                                preferred_element_type=jnp.float32) + bias   # [T, S]
        m = jnp.max(s, axis=-1, keepdims=True)
        e = jnp.exp(s - m)
        inv = pl.reciprocal(jnp.sum(e, axis=-1, keepdims=True), approx=True)
        p = (e * inv).astype(jnp.bfloat16)
        ctx = jnp.dot(p, vh, preferred_element_type=jnp.float32)             # [T, dh]
        out = out + jnp.dot(ctx.astype(jnp.bfloat16), wo_ref[h * dh:(h + 1) * dh, :],
                            preferred_element_type=jnp.float32)              # accumulate wo per head
    return out + bo


# ------------------------------------------------------------------ self-attention sub-layer

def _self_attn_kernel(num_heads, scale, eps,
                      x_ref, kpad_ref, g_ref, b_ref,
                      wq_ref, bq_ref, wkv_ref, bkv_ref, wo_ref, bo_ref,
                      o_ref):
    """Pre-norm residual self-attention for one batch element.  x: [T, D]."""
    x = x_ref[...]                                       # [T, D] f32
    T, D = x.shape
    y = _layer_norm(x, g_ref[...], b_ref[...], eps)
    y_bf = y.astype(jnp.bfloat16)

    # scale folded into q: one [T, D] multiply instead of H x [T, S] multiplies
    q = (jnp.dot(y_bf, wq_ref[...], preferred_element_type=jnp.float32) + bq_ref[...]) * scale
    kv = jnp.dot(y_bf, wkv_ref[...], preferred_element_type=jnp.float32) + bkv_ref[...]   # [T, 2D]
    k = kv[:, :D]
    v = kv[:, D:]

    # additive mask bias built in VMEM: look-ahead (tril) AND key padding
    row = jax.lax.broadcasted_iota(jnp.int32, (T, T), 0)
    col = jax.lax.broadcasted_iota(jnp.int32, (T, T), 1)
    tril = (row >= col).astype(jnp.float32)
    mask = tril * kpad_ref[...]                          # [T,T] * [1,T]
    bias = (mask - 1.0) * 1e9                            # 0 = keep, -1e9 = masked

    out = _mha_core(num_heads, q, k, v, bias, wo_ref, bo_ref[...])
    o_ref[...] = x + out                                 # fused residual add


def self_attn_sublayer(x, key_pad, p, gamma, beta, num_heads, eps=LN_EPS):
    """x: [B, T, D], key_pad: [B, 1, T] (1 = real token, 0 = PAD) -> [B, T, D]."""
    B, T, D = x.shape
    scale = 1.0 / math.sqrt(D // num_heads)
    kernel = functools.partial(_self_attn_kernel, num_heads, scale, eps)
    return pl.pallas_call(
        kernel,
        out_shape=jax.ShapeDtypeStruct((B, T, D), jnp.float32),
        grid=(B,),
        in_specs=[
            pl.BlockSpec((None, T, D), lambda b: (b, 0, 0)),   # x (query/key/value source + residual)
            pl.BlockSpec((None, 1, T), lambda b: (b, 0, 0)),   # key pad vector
            pl.BlockSpec((1, D), lambda b: (0, 0)),            # ln gamma
            pl.BlockSpec((1, D), lambda b: (0, 0)),            # ln beta
            pl.BlockSpec((D, D), lambda b: (0, 0)),            # wq (bf16)
            pl.BlockSpec((1, D), lambda b: (0, 0)),            # bq
            pl.BlockSpec((D, 2 * D), lambda b: (0, 0)),        # wkv (bf16, fused K|V)
            pl.BlockSpec((1, 2 * D), lambda b: (0, 0)),        # bkv
            pl.BlockSpec((D, D), lambda b: (0, 0)),            # wo (bf16)
            pl.BlockSpec((1, D), lambda b: (0, 0)),            # bo
        ],
        out_specs=pl.BlockSpec((None, T, D), lambda b: (b, 0, 0)),
        compiler_params=pltpu.CompilerParams(
            dimension_semantics=("parallel",), vmem_limit_bytes=VMEM_LIMIT),
    )(x, key_pad,
      gamma.reshape(1, D), beta.reshape(1, D),
      p["wq"], p["bq"].reshape(1, D),
      p["wkv"], p["bkv"].reshape(1, 2 * D),
      p["wo"], p["bo"].reshape(1, D))


# ------------------------------------------------------------------ cross-attention sub-layer

def _cross_attn_kernel(num_heads, scale, eps,
                       x_ref, kv_ref, qpad_ref, kpad_ref, g_ref, b_ref,
                       wq_ref, bq_ref, wkv_ref, bkv_ref, wo_ref, bo_ref,
                       o_ref):
    """Pre-norm residual cross-attention for one batch element. x: [T, D], kv: [S, D]."""
    x = x_ref[...]                                       # [T, D] f32
    D = x.shape[-1]
    y = _layer_norm(x, g_ref[...], b_ref[...], eps)

    q = (jnp.dot(y.astype(jnp.bfloat16), wq_ref[...],
                 preferred_element_type=jnp.float32) + bq_ref[...]) * scale
    kv = jnp.dot(kv_ref[...].astype(jnp.bfloat16), wkv_ref[...],
                 preferred_element_type=jnp.float32) + bkv_ref[...]          # [S, 2D]
    k = kv[:, :D]
    v = kv[:, D:]

    # additive mask bias from pad outer-product (matches create_cross_mask)
    mask = qpad_ref[...] * kpad_ref[...]                 # [T,1] * [1,S] -> [T,S]
    bias = (mask - 1.0) * 1e9

    out = _mha_core(num_heads, q, k, v, bias, wo_ref, bo_ref[...])
    o_ref[...] = x + out


def cross_attn_sublayer(x, enc_out, q_pad, k_pad, p, gamma, beta, num_heads, eps=LN_EPS):
    """x: [B, T, D], enc_out: [B, S, D], q_pad: [B, T, 1], k_pad: [B, 1, S] -> [B, T, D]."""
    B, T, D = x.shape
    S = enc_out.shape[1]
    scale = 1.0 / math.sqrt(D // num_heads)
    kernel = functools.partial(_cross_attn_kernel, num_heads, scale, eps)
    return pl.pallas_call(
        kernel,
        out_shape=jax.ShapeDtypeStruct((B, T, D), jnp.float32),
        grid=(B,),
        in_specs=[
            pl.BlockSpec((None, T, D), lambda b: (b, 0, 0)),   # x (query source + residual)
            pl.BlockSpec((None, S, D), lambda b: (b, 0, 0)),   # encoder outputs (K/V source)
            pl.BlockSpec((None, T, 1), lambda b: (b, 0, 0)),   # query pad vector
            pl.BlockSpec((None, 1, S), lambda b: (b, 0, 0)),   # key pad vector
            pl.BlockSpec((1, D), lambda b: (0, 0)),            # ln gamma
            pl.BlockSpec((1, D), lambda b: (0, 0)),            # ln beta
            pl.BlockSpec((D, D), lambda b: (0, 0)),            # wq (bf16)
            pl.BlockSpec((1, D), lambda b: (0, 0)),            # bq
            pl.BlockSpec((D, 2 * D), lambda b: (0, 0)),        # wkv (bf16)
            pl.BlockSpec((1, 2 * D), lambda b: (0, 0)),        # bkv
            pl.BlockSpec((D, D), lambda b: (0, 0)),            # wo (bf16)
            pl.BlockSpec((1, D), lambda b: (0, 0)),            # bo
        ],
        out_specs=pl.BlockSpec((None, T, D), lambda b: (b, 0, 0)),
        compiler_params=pltpu.CompilerParams(
            dimension_semantics=("parallel",), vmem_limit_bytes=VMEM_LIMIT),
    )(x, enc_out, q_pad, k_pad,
      gamma.reshape(1, D), beta.reshape(1, D),
      p["wq"], p["bq"].reshape(1, D),
      p["wkv"], p["bkv"].reshape(1, 2 * D),
      p["wo"], p["bo"].reshape(1, D))


# ------------------------------------------------------------------ fused LayerNorm + FFN + residual

def _ffn_kernel(eps, x_ref, g_ref, b_ref, w1_ref, b1_ref, w2_ref, b2_ref, o_ref):
    x = x_ref[...]                                       # [tm, D] f32
    y = _layer_norm(x, g_ref[...], b_ref[...], eps)
    h = jnp.dot(y.astype(jnp.bfloat16), w1_ref[...],
                preferred_element_type=jnp.float32) + b1_ref[...]
    h = jnp.maximum(h, 0.0)                              # ReLU
    out = jnp.dot(h.astype(jnp.bfloat16), w2_ref[...],
                  preferred_element_type=jnp.float32) + b2_ref[...]
    o_ref[...] = x + out                                 # fused residual add


def ffn_sublayer(x2d, gamma, beta, w1, b1, w2, b2, eps=LN_EPS):
    """x2d: [M, D] (flattened tokens) -> [M, D].  Weights are bf16."""
    M, D = x2d.shape
    F = w1.shape[1]
    # MXU-friendly row tiling; never fall back to tiny (8-row) tiles.
    if M <= 256:
        tm, Mp = M, M                                    # single full block
    else:
        tm = 256
        Mp = pl.cdiv(M, tm) * tm                         # pad rows, slice off after
    xp = x2d if Mp == M else jnp.pad(x2d, ((0, Mp - M), (0, 0)))
    # TODO(synk): at production dff, add a second ("arbitrary") grid axis over dff with an
    #             f32 VMEM scratch accumulator so w1/w2 residency fits v7x's 64 MiB VMEM.
    out = pl.pallas_call(
        functools.partial(_ffn_kernel, eps),
        out_shape=jax.ShapeDtypeStruct((Mp, D), jnp.float32),
        grid=(Mp // tm,),
        in_specs=[
            pl.BlockSpec((tm, D), lambda i: (i, 0)),
            pl.BlockSpec((1, D), lambda i: (0, 0)),
            pl.BlockSpec((1, D), lambda i: (0, 0)),
            pl.BlockSpec((D, F), lambda i: (0, 0)),      # w1 (bf16)
            pl.BlockSpec((1, F), lambda i: (0, 0)),
            pl.BlockSpec((F, D), lambda i: (0, 0)),      # w2 (bf16)
            pl.BlockSpec((1, D), lambda i: (0, 0)),
        ],
        out_specs=pl.BlockSpec((tm, D), lambda i: (i, 0)),
        compiler_params=pltpu.CompilerParams(
            dimension_semantics=("parallel",), vmem_limit_bytes=VMEM_LIMIT),
    )(xp, gamma.reshape(1, D), beta.reshape(1, D),
      w1, b1.reshape(1, F), w2, b2.reshape(1, D))
    return out if Mp == M else out[:M]


# ------------------------------------------------------------------ model glue (plain JAX, jitted)

def positional_encoding(T, D):
    pos = jnp.arange(T, dtype=jnp.float32)[:, None]
    i = jnp.arange(D, dtype=jnp.float32)[None, :]
    angle = pos / jnp.power(10000.0, (2.0 * jnp.floor(i / 2.0)) / D)
    return jnp.where((jnp.arange(D)[None, :] % 2) == 0, jnp.sin(angle), jnp.cos(angle))


def decoder_layer(x, enc_out, dec_kpad, dec_qpad, enc_kpad, lp, num_heads):
    x = self_attn_sublayer(x, dec_kpad, lp["self_attn"],
                           lp["ln1_g"], lp["ln1_b"], num_heads)
    x = cross_attn_sublayer(x, enc_out, dec_qpad, enc_kpad, lp["enc_attn"],
                            lp["ln2_g"], lp["ln2_b"], num_heads)
    B, T, D = x.shape
    x = ffn_sublayer(x.reshape(B * T, D), lp["ln3_g"], lp["ln3_b"],
                     lp["w1"], lp["b1"], lp["w2"], lp["b2"]).reshape(B, T, D)
    return x


@functools.partial(jax.jit, static_argnums=(4,))
def decoder_forward(params, dec_inputs, enc_outputs, enc_inputs, num_heads):
    B, T = dec_inputs.shape
    S = enc_inputs.shape[1]
    D = params["embedding"].shape[1]
    x = jnp.take(params["embedding"], dec_inputs, axis=0)             # [B, T, D]
    x = x + positional_encoding(T, D)[None, :, :]
    # tiny pad vectors -- the full [T, S] additive bias is built in-kernel, never in HBM
    dec_pad = (dec_inputs != 0).astype(jnp.float32)                   # [B, T]
    enc_pad = (enc_inputs != 0).astype(jnp.float32)                   # [B, S]
    dec_kpad = dec_pad.reshape(B, 1, T)
    dec_qpad = dec_pad.reshape(B, T, 1)
    enc_kpad = enc_pad.reshape(B, 1, S)
    for lp in params["layers"]:
        x = decoder_layer(x, enc_outputs, dec_kpad, dec_qpad, enc_kpad, lp, num_heads)
    return x


# ------------------------------------------------------------------ deterministic params

def init_params(key, vocab, d_model, num_layers, num_heads, dff):
    def nrm(k, shape, scale=0.02, dtype=jnp.float32):
        return (scale * jax.random.normal(k, shape, dtype=jnp.float32)).astype(dtype)

    keys = jax.random.split(key, 1 + num_layers)
    params = {"embedding": nrm(keys[0], (vocab, d_model)), "layers": []}
    for li in range(num_layers):
        lk = jax.random.split(keys[1 + li], 8)

        def mha_params(k4):
            ks = jax.random.split(k4, 3)
            return {
                # weights stored in bf16 (cast once here, never in-kernel)
                "wq": nrm(ks[0], (d_model, d_model), dtype=jnp.bfloat16),
                "bq": jnp.zeros((d_model,), jnp.float32),
                # K and V projections fused into one [D, 2D] weight for a single matmul
                "wkv": nrm(ks[1], (d_model, 2 * d_model), dtype=jnp.bfloat16),
                "bkv": jnp.zeros((2 * d_model,), jnp.float32),
                "wo": nrm(ks[2], (d_model, d_model), dtype=jnp.bfloat16),
                "bo": jnp.zeros((d_model,), jnp.float32),
            }

        params["layers"].append({
            "self_attn": mha_params(lk[0]),
            "enc_attn": mha_params(lk[1]),
            "w1": nrm(lk[2], (d_model, dff), dtype=jnp.bfloat16),
            "b1": jnp.zeros((dff,), jnp.float32),
            "w2": nrm(lk[3], (dff, d_model), dtype=jnp.bfloat16),
            "b2": jnp.zeros((d_model,), jnp.float32),
            "ln1_g": jnp.ones((d_model,), jnp.float32), "ln1_b": jnp.zeros((d_model,), jnp.float32),
            "ln2_g": jnp.ones((d_model,), jnp.float32), "ln2_b": jnp.zeros((d_model,), jnp.float32),
            "ln3_g": jnp.ones((d_model,), jnp.float32), "ln3_b": jnp.zeros((d_model,), jnp.float32),
        })
    return params


# ------------------------------------------------------------------ main

if __name__ == "__main__":
    B, tgt_len, src_len = 2, 8, 8
    d_model, num_layers, num_heads, dff = 32, 2, 4, 64
    vocab = 50

    key = jax.random.PRNGKey(0)
    k_par, k_enc = jax.random.split(key)

    params = init_params(k_par, vocab, d_model, num_layers, num_heads, dff)

    # deterministic token ids with PAD (=0) positions to exercise the masks
    dec_inputs = jnp.array([[5, 3, 7, 2, 9, 4, 0, 0],
                            [1, 8, 6, 11, 0, 0, 0, 0]], dtype=jnp.int32)
    enc_inputs = jnp.array([[4, 12, 7, 1, 3, 0, 0, 0],
                            [9, 2, 5, 8, 6, 10, 0, 0]], dtype=jnp.int32)
    enc_outputs = 0.1 * jax.random.normal(k_enc, (B, src_len, d_model), dtype=jnp.float32)

    out = decoder_forward(params, dec_inputs, enc_outputs, enc_inputs, num_heads)
    out = jax.block_until_ready(out)
    assert out.shape == (B, tgt_len, d_model)
    assert jnp.all(jnp.isfinite(out))
    print("KERNEL_OK")
</pallas_src>

<mosaic_0001>
module attributes {stable_mosaic.version = 11 : i64} {
  func.func @_self_attn_kernel(%arg0: i32, %arg1: memref<1x8x32xf32, #tpu.memory_space<vmem>>, %arg2: memref<1x1x8xf32, #tpu.memory_space<vmem>>, %arg3: memref<1x32xf32, #tpu.memory_space<vmem>>, %arg4: memref<1x32xf32, #tpu.memory_space<vmem>>, %arg5: memref<32x32xbf16, #tpu.memory_space<vmem>>, %arg6: memref<1x32xf32, #tpu.memory_space<vmem>>, %arg7: memref<32x64xbf16, #tpu.memory_space<vmem>>, %arg8: memref<1x64xf32, #tpu.memory_space<vmem>>, %arg9: memref<32x32xbf16, #tpu.memory_space<vmem>>, %arg10: memref<1x32xf32, #tpu.memory_space<vmem>>, %arg11: memref<1x8x32xf32, #tpu.memory_space<vmem>>) attributes {dimension_semantics = [#tpu.dimension_semantics<parallel>], iteration_bounds = array<i64: 2>, scalar_prefetch = 0 : i64, scratch_operands = 0 : i64, tpu.core_type = #tpu.core_type<tc>, window_params = [{transform_indices = @transform_0, window_bounds = array<i64: 1, 8, 32>}, {transform_indices = @transform_1, window_bounds = array<i64: 1, 1, 8>}, {pipeline_mode = #tpu.pipeline_mode<synchronous>, transform_indices = @transform_2, window_bounds = array<i64: 1, 32>}, {pipeline_mode = #tpu.pipeline_mode<synchronous>, transform_indices = @transform_3, window_bounds = array<i64: 1, 32>}, {pipeline_mode = #tpu.pipeline_mode<synchronous>, transform_indices = @transform_4, window_bounds = array<i64: 32, 32>}, {pipeline_mode = #tpu.pipeline_mode<synchronous>, transform_indices = @transform_5, window_bounds = array<i64: 1, 32>}, {pipeline_mode = #tpu.pipeline_mode<synchronous>, transform_indices = @transform_6, window_bounds = array<i64: 32, 64>}, {pipeline_mode = #tpu.pipeline_mode<synchronous>, transform_indices = @transform_7, window_bounds = array<i64: 1, 64>}, {pipeline_mode = #tpu.pipeline_mode<synchronous>, transform_indices = @transform_8, window_bounds = array<i64: 32, 32>}, {pipeline_mode = #tpu.pipeline_mode<synchronous>, transform_indices = @transform_9, window_bounds = array<i64: 1, 32>}, {transform_indices = @transform_10, window_bounds = array<i64: 1, 8, 32>}]} {
    %c0 = arith.constant 0 : index
    %c0_0 = arith.constant 0 : index
    %c0_1 = arith.constant 0 : index
    %0 = vector.load %arg1[%c0, %c0_0, %c0_1] : memref<1x8x32xf32, #tpu.memory_space<vmem>>, vector<1x8x32xf32>
    %1 = vector.shape_cast %0 : vector<1x8x32xf32> to vector<8x32xf32>
    %c0_2 = arith.constant 0 : index
    %c0_3 = arith.constant 0 : index
    %2 = vector.load %arg3[%c0_2, %c0_3] : memref<1x32xf32, #tpu.memory_space<vmem>>, vector<1x32xf32>
    %c0_4 = arith.constant 0 : index
    %c0_5 = arith.constant 0 : index
    %3 = vector.load %arg4[%c0_4, %c0_5] : memref<1x32xf32, #tpu.memory_space<vmem>>, vector<1x32xf32>
    %cst = arith.constant dense<0.000000e+00> : vector<8xf32>
    %4 = vector.multi_reduction <add>, %1, %cst [1] : vector<8x32xf32> to vector<8xf32>
    %5 = vector.shape_cast %4 : vector<8xf32> to vector<8x1xf32>
    %cst_6 = arith.constant 3.200000e+01 : f32
    %6 = vector.broadcast %cst_6 : f32 to vector<8x1xf32>
    %7 = arith.divf %5, %6 : vector<8x1xf32>
    %8 = vector.broadcast %7 : vector<8x1xf32> to vector<8x32xf32>
    %9 = arith.subf %1, %8 : vector<8x32xf32>
    %10 = arith.mulf %9, %9 : vector<8x32xf32>
    %cst_7 = arith.constant dense<0.000000e+00> : vector<8xf32>
    %11 = vector.multi_reduction <add>, %10, %cst_7 [1] : vector<8x32xf32> to vector<8xf32>
    %12 = vector.shape_cast %11 : vector<8xf32> to vector<8x1xf32>
    %cst_8 = arith.constant 3.200000e+01 : f32
    %13 = vector.broadcast %cst_8 : f32 to vector<8x1xf32>
    %14 = arith.divf %12, %13 : vector<8x1xf32>
    %15 = vector.broadcast %7 : vector<8x1xf32> to vector<8x32xf32>
    %16 = arith.subf %1, %15 : vector<8x32xf32>
    %cst_9 = arith.constant 9.99999974E-6 : f32
    %17 = vector.broadcast %cst_9 : f32 to vector<8x1xf32>
    %18 = arith.addf %14, %17 : vector<8x1xf32>
    %19 = math.rsqrt %18 : vector<8x1xf32>
    %20 = vector.broadcast %19 : vector<8x1xf32> to vector<8x32xf32>
    %21 = arith.mulf %16, %20 : vector<8x32xf32>
    %22 = vector.broadcast %2 : vector<1x32xf32> to vector<8x32xf32>
    %23 = arith.mulf %21, %22 : vector<8x32xf32>
    %24 = vector.broadcast %3 : vector<1x32xf32> to vector<8x32xf32>
    %25 = arith.addf %23, %24 : vector<8x32xf32>
    %26 = arith.truncf %25 : vector<8x32xf32> to vector<8x32xbf16>
    %c0_10 = arith.constant 0 : index
    %c0_11 = arith.constant 0 : index
    %27 = vector.load %arg5[%c0_10, %c0_11] : memref<32x32xbf16, #tpu.memory_space<vmem>>, vector<32x32xbf16>
    %cst_12 = arith.constant dense<0.000000e+00> : vector<8x32xf32>
    %28 = tpu.matmul %26, %27, %cst_12 {dimension_numbers = #tpu.dot_dimension_numbers<[1], [0], [0], [1], [0, 0, 1, 1], [], []>} : vector<8x32xbf16>, vector<32x32xbf16>, vector<8x32xf32> -> vector<8x32xf32>
    %c0_13 = arith.constant 0 : index
    %c0_14 = arith.constant 0 : index
    %29 = vector.load %arg6[%c0_13, %c0_14] : memref<1x32xf32, #tpu.memory_space<vmem>>, vector<1x32xf32>
    %30 = vector.broadcast %29 : vector<1x32xf32> to vector<8x32xf32>
    %31 = arith.addf %28, %30 : vector<8x32xf32>
    %cst_15 = arith.constant 0.353553385 : f32
    %32 = vector.broadcast %cst_15 : f32 to vector<8x32xf32>
    %33 = arith.mulf %31, %32 : vector<8x32xf32>
    %c0_16 = arith.constant 0 : index
    %c0_17 = arith.constant 0 : index
    %34 = vector.load %arg7[%c0_16, %c0_17] : memref<32x64xbf16, #tpu.memory_space<vmem>>, vector<32x64xbf16>
    %cst_18 = arith.constant dense<0.000000e+00> : vector<8x64xf32>
    %35 = tpu.matmul %26, %34, %cst_18 {dimension_numbers = #tpu.dot_dimension_numbers<[1], [0], [0], [1], [0, 0, 1, 1], [], []>} : vector<8x32xbf16>, vector<32x64xbf16>, vector<8x64xf32> -> vector<8x64xf32>
    %c0_19 = arith.constant 0 : index
    %c0_20 = arith.constant 0 : index
    %36 = vector.load %arg8[%c0_19, %c0_20] : memref<1x64xf32, #tpu.memory_space<vmem>>, vector<1x64xf32>
    %37 = vector.broadcast %36 : vector<1x64xf32> to vector<8x64xf32>
    %38 = arith.addf %35, %37 : vector<8x64xf32>
    %39 = vector.extract_strided_slice %38 {offsets = [0, 0], sizes = [8, 32], strides = [1, 1]} : vector<8x64xf32> to vector<8x32xf32>
    %40 = vector.extract_strided_slice %38 {offsets = [0, 32], sizes = [8, 32], strides = [1, 1]} : vector<8x64xf32> to vector<8x32xf32>
    %41 = tpu.iota {dimensions = array<i32: 0>} : vector<8x8xi32>
    %42 = tpu.iota {dimensions = array<i32: 1>} : vector<8x8xi32>
    %43 = arith.cmpi sge, %41, %42 : vector<8x8xi32>
    %44 = arith.extui %43 : vector<8x8xi1> to vector<8x8xi32>
    %45 = arith.sitofp %44 : vector<8x8xi32> to vector<8x8xf32>
    %c0_21 = arith.constant 0 : index
    %c0_22 = arith.constant 0 : index
    %c0_23 = arith.constant 0 : index
    %46 = vector.load %arg2[%c0_21, %c0_22, %c0_23] : memref<1x1x8xf32, #tpu.memory_space<vmem>>, vector<1x1x8xf32>
    %47 = vector.shape_cast %46 : vector<1x1x8xf32> to vector<1x8xf32>
    %48 = vector.broadcast %47 : vector<1x8xf32> to vector<8x8xf32>
    %49 = arith.mulf %45, %48 : vector<8x8xf32>
    %cst_24 = arith.constant 1.000000e+00 : f32
    %50 = vector.broadcast %cst_24 : f32 to vector<8x8xf32>
    %51 = arith.subf %49, %50 : vector<8x8xf32>
    %cst_25 = arith.constant 1.000000e+09 : f32
    %52 = vector.broadcast %cst_25 : f32 to vector<8x8xf32>
    %53 = arith.mulf %51, %52 : vector<8x8xf32>
    %c0_26 = arith.constant 0 : index
    %c0_27 = arith.constant 0 : index
    %54 = vector.load %arg10[%c0_26, %c0_27] : memref<1x32xf32, #tpu.memory_space<vmem>>, vector<1x32xf32>
    %cst_28 = arith.constant 0.000000e+00 : f32
    %55 = vector.broadcast %cst_28 : f32 to vector<8x32xf32>
    %56 = vector.extract_strided_slice %33 {offsets = [0, 0], sizes = [8, 8], strides = [1, 1]} : vector<8x32xf32> to vector<8x8xf32>
    %57 = arith.truncf %56 : vector<8x8xf32> to vector<8x8xbf16>
    %58 = vector.extract_strided_slice %39 {offsets = [0, 0], sizes = [8, 8], strides = [1, 1]} : vector<8x32xf32> to vector<8x8xf32>
    %59 = arith.truncf %58 : vector<8x8xf32> to vector<8x8xbf16>
    %60 = vector.extract_strided_slice %40 {offsets = [0, 0], sizes = [8, 8], strides = [1, 1]} : vector<8x32xf32> to vector<8x8xf32>
    %61 = arith.truncf %60 : vector<8x8xf32> to vector<8x8xbf16>
    %cst_29 = arith.constant dense<0.000000e+00> : vector<8x8xf32>
    %62 = tpu.matmul %57, %59, %cst_29 {dimension_numbers = #tpu.dot_dimension_numbers<[1], [1], [0], [0], [0, 0, 1, 0], [], []>} : vector<8x8xbf16>, vector<8x8xbf16>, vector<8x8xf32> -> vector<8x8xf32>
    %63 = arith.addf %62, %53 : vector<8x8xf32>
    %cst_30 = arith.constant dense<0xFF800000> : vector<8xf32>
    %64 = vector.multi_reduction <maximumf>, %63, %cst_30 [1] : vector<8x8xf32> to vector<8xf32>
    %65 = vector.shape_cast %64 : vector<8xf32> to vector<8x1xf32>
    %66 = vector.broadcast %65 : vector<8x1xf32> to vector<8x8xf32>
    %67 = arith.subf %63, %66 : vector<8x8xf32>
    %68 = math.exp %67 : vector<8x8xf32>
    %cst_31 = arith.constant dense<0.000000e+00> : vector<8xf32>
    %69 = vector.multi_reduction <add>, %68, %cst_31 [1] : vector<8x8xf32> to vector<8xf32>
    %70 = vector.shape_cast %69 : vector<8xf32> to vector<8x1xf32>
    %71 = tpu.reciprocal %70 {approx = true} : vector<8x1xf32> -> vector<8x1xf32>
    %72 = vector.broadcast %71 : vector<8x1xf32> to vector<8x8xf32>
    %73 = arith.mulf %68, %72 : vector<8x8xf32>
    %74 = arith.truncf %73 : vector<8x8xf32> to vector<8x8xbf16>
    %cst_32 = arith.constant dense<0.000000e+00> : vector<8x8xf32>
    %75 = tpu.matmul %74, %61, %cst_32 {dimension_numbers = #tpu.dot_dimension_numbers<[1], [0], [0], [1], [0, 0, 1, 1], [], []>} : vector<8x8xbf16>, vector<8x8xbf16>, vector<8x8xf32> -> vector<8x8xf32>
    %76 = arith.truncf %75 : vector<8x8xf32> to vector<8x8xbf16>
    %c0_33 = arith.constant 0 : index
    %c0_34 = arith.constant 0 : index
    %77 = vector.load %arg9[%c0_33, %c0_34] : memref<32x32xbf16, #tpu.memory_space<vmem>>, vector<8x32xbf16>
    %cst_35 = arith.constant dense<0.000000e+00> : vector<8x32xf32>
    %78 = tpu.matmul %76, %77, %cst_35 {dimension_numbers = #tpu.dot_dimension_numbers<[1], [0], [0], [1], [0, 0, 1, 1], [], []>} : vector<8x8xbf16>, vector<8x32xbf16>, vector<8x32xf32> -> vector<8x32xf32>
    %79 = arith.addf %55, %78 : vector<8x32xf32>
    %80 = vector.extract_strided_slice %33 {offsets = [0, 8], sizes = [8, 8], strides = [1, 1]} : vector<8x32xf32> to vector<8x8xf32>
    %81 = arith.truncf %80 : vector<8x8xf32> to vector<8x8xbf16>
    %82 = vector.extract_strided_slice %39 {offsets = [0, 8], sizes = [8, 8], strides = [1, 1]} : vector<8x32xf32> to vector<8x8xf32>
    %83 = arith.truncf %82 : vector<8x8xf32> to vector<8x8xbf16>
    %84 = vector.extract_strided_slice %40 {offsets = [0, 8], sizes = [8, 8], strides = [1, 1]} : vector<8x32xf32> to vector<8x8xf32>
    %85 = arith.truncf %84 : vector<8x8xf32> to vector<8x8xbf16>
    %cst_36 = arith.constant dense<0.000000e+00> : vector<8x8xf32>
    %86 = tpu.matmul %81, %83, %cst_36 {dimension_numbers = #tpu.dot_dimension_numbers<[1], [1], [0], [0], [0, 0, 1, 0], [], []>} : vector<8x8xbf16>, vector<8x8xbf16>, vector<8x8xf32> -> vector<8x8xf32>
    %87 = arith.addf %86, %53 : vector<8x8xf32>
    %cst_37 = arith.constant dense<0xFF800000> : vector<8xf32>
    %88 = vector.multi_reduction <maximumf>, %87, %cst_37 [1] : vector<8x8xf32> to vector<8xf32>
    %89 = vector.shape_cast %88 : vector<8xf32> to vector<8x1xf32>
    %90 = vector.broadcast %89 : vector<8x1xf32> to vector<8x8xf32>
    %91 = arith.subf %87, %90 : vector<8x8xf32>
    %92 = math.exp %91 : vector<8x8xf32>
    %cst_38 = arith.constant dense<0.000000e+00> : vector<8xf32>
    %93 = vector.multi_reduction <add>, %92, %cst_38 [1] : vector<8x8xf32> to vector<8xf32>
    %94 = vector.shape_cast %93 : vector<8xf32> to vector<8x1xf32>
    %95 = tpu.reciprocal %94 {approx = true} : vector<8x1xf32> -> vector<8x1xf32>
    %96 = vector.broadcast %95 : vector<8x1xf32> to vector<8x8xf32>
    %97 = arith.mulf %92, %96 : vector<8x8xf32>
    %98 = arith.truncf %97 : vector<8x8xf32> to vector<8x8xbf16>
    %cst_39 = arith.constant dense<0.000000e+00> : vector<8x8xf32>
    %99 = tpu.matmul %98, %85, %cst_39 {dimension_numbers = #tpu.dot_dimension_numbers<[1], [0], [0], [1], [0, 0, 1, 1], [], []>} : vector<8x8xbf16>, vector<8x8xbf16>, vector<8x8xf32> -> vector<8x8xf32>
    %100 = arith.truncf %99 : vector<8x8xf32> to vector<8x8xbf16>
    %c8 = arith.constant 8 : index
    %c0_40 = arith.constant 0 : index
    %101 = vector.load %arg9[%c8, %c0_40] : memref<32x32xbf16, #tpu.memory_space<vmem>>, vector<8x32xbf16>
    %cst_41 = arith.constant dense<0.000000e+00> : vector<8x32xf32>
    %102 = tpu.matmul %100, %101, %cst_41 {dimension_numbers = #tpu.dot_dimension_numbers<[1], [0], [0], [1], [0, 0, 1, 1], [], []>} : vector<8x8xbf16>, vector<8x32xbf16>, vector<8x32xf32> -> vector<8x32xf32>
    %103 = arith.addf %79, %102 : vector<8x32xf32>
    %104 = vector.extract_strided_slice %33 {offsets = [0, 16], sizes = [8, 8], strides = [1, 1]} : vector<8x32xf32> to vector<8x8xf32>
    %105 = arith.truncf %104 : vector<8x8xf32> to vector<8x8xbf16>
    %106 = vector.extract_strided_slice %39 {offsets = [0, 16], sizes = [8, 8], strides = [1, 1]} : vector<8x32xf32> to vector<8x8xf32>
    %107 = arith.truncf %106 : vector<8x8xf32> to vector<8x8xbf16>
    %108 = vector.extract_strided_slice %40 {offsets = [0, 16], sizes = [8, 8], strides = [1, 1]} : vector<8x32xf32> to vector<8x8xf32>
    %109 = arith.truncf %108 : vector<8x8xf32> to vector<8x8xbf16>
    %cst_42 = arith.constant dense<0.000000e+00> : vector<8x8xf32>
    %110 = tpu.matmul %105, %107, %cst_42 {dimension_numbers = #tpu.dot_dimension_numbers<[1], [1], [0], [0], [0, 0, 1, 0], [], []>} : vector<8x8xbf16>, vector<8x8xbf16>, vector<8x8xf32> -> vector<8x8xf32>
    %111 = arith.addf %110, %53 : vector<8x8xf32>
    %cst_43 = arith.constant dense<0xFF800000> : vector<8xf32>
    %112 = vector.multi_reduction <maximumf>, %111, %cst_43 [1] : vector<8x8xf32> to vector<8xf32>
    %113 = vector.shape_cast %112 : vector<8xf32> to vector<8x1xf32>
    %114 = vector.broadcast %113 : vector<8x1xf32> to vector<8x8xf32>
    %115 = arith.subf %111, %114 : vector<8x8xf32>
    %116 = math.exp %115 : vector<8x8xf32>
    %cst_44 = arith.constant dense<0.000000e+00> : vector<8xf32>
    %117 = vector.multi_reduction <add>, %116, %cst_44 [1] : vector<8x8xf32> to vector<8xf32>
    %118 = vector.shape_cast %117 : vector<8xf32> to vector<8x1xf32>
    %119 = tpu.reciprocal %118 {approx = true} : vector<8x1xf32> -> vector<8x1xf32>
    %120 = vector.broadcast %119 : vector<8x1xf32> to vector<8x8xf32>
    %121 = arith.mulf %116, %120 : vector<8x8xf32>
    %122 = arith.truncf %121 : vector<8x8xf32> to vector<8x8xbf16>
    %cst_45 = arith.constant dense<0.000000e+00> : vector<8x8xf32>
    %123 = tpu.matmul %122, %109, %cst_45 {dimension_numbers = #tpu.dot_dimension_numbers<[1], [0], [0], [1], [0, 0, 1, 1], [], []>} : vector<8x8xbf16>, vector<8x8xbf16>, vector<8x8xf32> -> vector<8x8xf32>
    %124 = arith.truncf %123 : vector<8x8xf32> to vector<8x8xbf16>
    %c16 = arith.constant 16 : index
    %c0_46 = arith.constant 0 : index
    %125 = vector.load %arg9[%c16, %c0_46] : memref<32x32xbf16, #tpu.memory_space<vmem>>, vector<8x32xbf16>
    %cst_47 = arith.constant dense<0.000000e+00> : vector<8x32xf32>
    %126 = tpu.matmul %124, %125, %cst_47 {dimension_numbers = #tpu.dot_dimension_numbers<[1], [0], [0], [1], [0, 0, 1, 1], [], []>} : vector<8x8xbf16>, vector<8x32xbf16>, vector<8x32xf32> -> vector<8x32xf32>
    %127 = arith.addf %103, %126 : vector<8x32xf32>
    %128 = vector.extract_strided_slice %33 {offsets = [0, 24], sizes = [8, 8], strides = [1, 1]} : vector<8x32xf32> to vector<8x8xf32>
    %129 = arith.truncf %128 : vector<8x8xf32> to vector<8x8xbf16>
    %130 = vector.extract_strided_slice %39 {offsets = [0, 24], sizes = [8, 8], strides = [1, 1]} : vector<8x32xf32> to vector<8x8xf32>
    %131 = arith.truncf %130 : vector<8x8xf32> to vector<8x8xbf16>
    %132 = vector.extract_strided_slice %40 {offsets = [0, 24], sizes = [8, 8], strides = [1, 1]} : vector<8x32xf32> to vector<8x8xf32>
    %133 = arith.truncf %132 : vector<8x8xf32> to vector<8x8xbf16>
    %cst_48 = arith.constant dense<0.000000e+00> : vector<8x8xf32>
    %134 = tpu.matmul %129, %131, %cst_48 {dimension_numbers = #tpu.dot_dimension_numbers<[1], [1], [0], [0], [0, 0, 1, 0], [], []>} : vector<8x8xbf16>, vector<8x8xbf16>, vector<8x8xf32> -> vector<8x8xf32>
    %135 = arith.addf %134, %53 : vector<8x8xf32>
    %cst_49 = arith.constant dense<0xFF800000> : vector<8xf32>
    %136 = vector.multi_reduction <maximumf>, %135, %cst_49 [1] : vector<8x8xf32> to vector<8xf32>
    %137 = vector.shape_cast %136 : vector<8xf32> to vector<8x1xf32>
    %138 = vector.broadcast %137 : vector<8x1xf32> to vector<8x8xf32>
    %139 = arith.subf %135, %138 : vector<8x8xf32>
    %140 = math.exp %139 : vector<8x8xf32>
    %cst_50 = arith.constant dense<0.000000e+00> : vector<8xf32>
    %141 = vector.multi_reduction <add>, %140, %cst_50 [1] : vector<8x8xf32> to vector<8xf32>
    %142 = vector.shape_cast %141 : vector<8xf32> to vector<8x1xf32>
    %143 = tpu.reciprocal %142 {approx = true} : vector<8x1xf32> -> vector<8x1xf32>
    %144 = vector.broadcast %143 : vector<8x1xf32> to vector<8x8xf32>
    %145 = arith.mulf %140, %144 : vector<8x8xf32>
    %146 = arith.truncf %145 : vector<8x8xf32> to vector<8x8xbf16>
    %cst_51 = arith.constant dense<0.000000e+00> : vector<8x8xf32>
    %147 = tpu.matmul %146, %133, %cst_51 {dimension_numbers = #tpu.dot_dimension_numbers<[1], [0], [0], [1], [0, 0, 1, 1], [], []>} : vector<8x8xbf16>, vector<8x8xbf16>, vector<8x8xf32> -> vector<8x8xf32>
    %148 = arith.truncf %147 : vector<8x8xf32> to vector<8x8xbf16>
    %c24 = arith.constant 24 : index
    %c0_52 = arith.constant 0 : index
    %149 = vector.load %arg9[%c24, %c0_52] : memref<32x32xbf16, #tpu.memory_space<vmem>>, vector<8x32xbf16>
    %cst_53 = arith.constant dense<0.000000e+00> : vector<8x32xf32>
    %150 = tpu.matmul %148, %149, %cst_53 {dimension_numbers = #tpu.dot_dimension_numbers<[1], [0], [0], [1], [0, 0, 1, 1], [], []>} : vector<8x8xbf16>, vector<8x32xbf16>, vector<8x32xf32> -> vector<8x32xf32>
    %151 = arith.addf %127, %150 : vector<8x32xf32>
    %152 = vector.broadcast %54 : vector<1x32xf32> to vector<8x32xf32>
    %153 = arith.addf %151, %152 : vector<8x32xf32>
    %154 = arith.addf %1, %153 : vector<8x32xf32>
    %c0_54 = arith.constant 0 : index
    %c0_55 = arith.constant 0 : index
    %c0_56 = arith.constant 0 : index
    %155 = vector.load %arg11[%c0_54, %c0_55, %c0_56] : memref<1x8x32xf32, #tpu.memory_space<vmem>>, vector<1x8x32xf32>
    %156 = vector.shape_cast %155 : vector<1x8x32xf32> to vector<8x32xf32>
    %157 = vector.shape_cast %154 : vector<8x32xf32> to vector<1x8x32xf32>
    tpu.vector_store %arg11[%c0_54, %c0_55, %c0_56], %157 {strides = array<i32>} : memref<1x8x32xf32, #tpu.memory_space<vmem>>, vector<1x8x32xf32>,
    return
  }
  func.func @transform_0(%arg0: i32) -> (i32, i32, i32) {
    %c0_i32 = arith.constant 0 : i32
    %c0_i32_0 = arith.constant 0 : i32
    %c0_i32_1 = arith.constant 0 : i32
    return %arg0, %c0_i32, %c0_i32_0 : i32, i32, i32
  }
  func.func @transform_1(%arg0: i32) -> (i32, i32, i32) {
    %c0_i32 = arith.constant 0 : i32
    %c0_i32_0 = arith.constant 0 : i32
    %c0_i32_1 = arith.constant 0 : i32
    return %arg0, %c0_i32, %c0_i32_0 : i32, i32, i32
  }
  func.func @transform_2(%arg0: i32) -> (i32, i32) {
    %c0_i32 = arith.constant 0 : i32
    %c0_i32_0 = arith.constant 0 : i32
    %c0_i32_1 = arith.constant 0 : i32
    return %c0_i32, %c0_i32_0 : i32, i32
  }
  func.func @transform_3(%arg0: i32) -> (i32, i32) {
    %c0_i32 = arith.constant 0 : i32
    %c0_i32_0 = arith.constant 0 : i32
    %c0_i32_1 = arith.constant 0 : i32
    return %c0_i32, %c0_i32_0 : i32, i32
  }
  func.func @transform_4(%arg0: i32) -> (i32, i32) {
    %c0_i32 = arith.constant 0 : i32
    %c0_i32_0 = arith.constant 0 : i32
    %c0_i32_1 = arith.constant 0 : i32
    return %c0_i32, %c0_i32_0 : i32, i32
  }
  func.func @transform_5(%arg0: i32) -> (i32, i32) {
    %c0_i32 = arith.constant 0 : i32
    %c0_i32_0 = arith.constant 0 : i32
    %c0_i32_1 = arith.constant 0 : i32
    return %c0_i32, %c0_i32_0 : i32, i32
  }
  func.func @transform_6(%arg0: i32) -> (i32, i32) {
    %c0_i32 = arith.constant 0 : i32
    %c0_i32_0 = arith.constant 0 : i32
    %c0_i32_1 = arith.constant 0 : i32
    return %c0_i32, %c0_i32_0 : i32, i32
  }
  func.func @transform_7(%arg0: i32) -> (i32, i32) {
    %c0_i32 = arith.constant 0 : i32
    %c0_i32_0 = arith.constant 0 : i32
    %c0_i32_1 = arith.constant 0 : i32
    return %c0_i32, %c0_i32_0 : i32, i32
  }
  func.func @transform_8(%arg0: i32) -> (i32, i32) {
    %c0_i32 = arith.constant 0 : i32
    %c0_i32_0 = arith.constant 0 : i32
    %c0_i32_1 = arith.constant 0 : i32
    return %c0_i32, %c0_i32_0 : i32, i32
  }
  func.func @transform_9(%arg0: i32) -> (i32, i32) {
    %c0_i32 = arith.constant 0 : i32
    %c0_i32_0 = arith.constant 0 : i32
    %c0_i32_1 = arith.constant 0 : i32
    return %c0_i32, %c0_i32_0 : i32, i32
  }
  func.func @transform_10(%arg0: i32) -> (i32, i32, i32) {
    %c0_i32 = arith.constant 0 : i32
    %c0_i32_0 = arith.constant 0 : i32
    %c0_i32_1 = arith.constant 0 : i32
    return %arg0, %c0_i32, %c0_i32_0 : i32, i32, i32
  }
}

module attributes {stable_mosaic.version = 11 : i64} {
  func.func @_cross_attn_kernel(%arg0: i32, %arg1: memref<1x8x32xf32, #tpu.memory_space<vmem>>, %arg2: memref<1x8x32xf32, #tpu.memory_space<vmem>>, %arg3: memref<1x8x1xf32, #tpu.memory_space<vmem>>, %arg4: memref<1x1x8xf32, #tpu.memory_space<vmem>>, %arg5: memref<1x32xf32, #tpu.memory_space<vmem>>, %arg6: memref<1x32xf32, #tpu.memory_space<vmem>>, %arg7: memref<32x32xbf16, #tpu.memory_space<vmem>>, %arg8: memref<1x32xf32, #tpu.memory_space<vmem>>, %arg9: memref<32x64xbf16, #tpu.memory_space<vmem>>, %arg10: memref<1x64xf32, #tpu.memory_space<vmem>>, %arg11: memref<32x32xbf16, #tpu.memory_space<vmem>>, %arg12: memref<1x32xf32, #tpu.memory_space<vmem>>, %arg13: memref<1x8x32xf32, #tpu.memory_space<vmem>>) attributes {dimension_semantics = [#tpu.dimension_semantics<parallel>], iteration_bounds = array<i64: 2>, scalar_prefetch = 0 : i64, scratch_operands = 0 : i64, tpu.core_type = #tpu.core_type<tc>, window_params = [{transform_indices = @transform_0, window_bounds = array<i64: 1, 8, 32>}, {transform_indices = @transform_1, window_bounds = array<i64: 1, 8, 32>}, {transform_indices = @transform_2, window_bounds = array<i64: 1, 8, 1>}, {transform_indices = @transform_3, window_bounds = array<i64: 1, 1, 8>}, {pipeline_mode = #tpu.pipeline_mode<synchronous>, transform_indices = @transform_4, window_bounds = array<i64: 1, 32>}, {pipeline_mode = #tpu.pipeline_mode<synchronous>, transform_indices = @transform_5, window_bounds = array<i64: 1, 32>}, {pipeline_mode = #tpu.pipeline_mode<synchronous>, transform_indices = @transform_6, window_bounds = array<i64: 32, 32>}, {pipeline_mode = #tpu.pipeline_mode<synchronous>, transform_indices = @transform_7, window_bounds = array<i64: 1, 32>}, {pipeline_mode = #tpu.pipeline_mode<synchronous>, transform_indices = @transform_8, window_bounds = array<i64: 32, 64>}, {pipeline_mode = #tpu.pipeline_mode<synchronous>, transform_indices = @transform_9, window_bounds = array<i64: 1, 64>}, {pipeline_mode = #tpu.pipeline_mode<synchronous>, transform_indices = @transform_10, window_bounds = array<i64: 32, 32>}, {pipeline_mode = #tpu.pipeline_mode<synchronous>, transform_indices = @transform_11, window_bounds = array<i64: 1, 32>}, {transform_indices = @transform_12, window_bounds = array<i64: 1, 8, 32>}]} {
    %c0 = arith.constant 0 : index
    %c0_0 = arith.constant 0 : index
    %c0_1 = arith.constant 0 : index
    %0 = vector.load %arg1[%c0, %c0_0, %c0_1] : memref<1x8x32xf32, #tpu.memory_space<vmem>>, vector<1x8x32xf32>
    %1 = vector.shape_cast %0 : vector<1x8x32xf32> to vector<8x32xf32>
    %c0_2 = arith.constant 0 : index
    %c0_3 = arith.constant 0 : index
    %2 = vector.load %arg5[%c0_2, %c0_3] : memref<1x32xf32, #tpu.memory_space<vmem>>, vector<1x32xf32>
    %c0_4 = arith.constant 0 : index
    %c0_5 = arith.constant 0 : index
    %3 = vector.load %arg6[%c0_4, %c0_5] : memref<1x32xf32, #tpu.memory_space<vmem>>, vector<1x32xf32>
    %cst = arith.constant dense<0.000000e+00> : vector<8xf32>
    %4 = vector.multi_reduction <add>, %1, %cst [1] : vector<8x32xf32> to vector<8xf32>
    %5 = vector.shape_cast %4 : vector<8xf32> to vector<8x1xf32>
    %cst_6 = arith.constant 3.200000e+01 : f32
    %6 = vector.broadcast %cst_6 : f32 to vector<8x1xf32>
    %7 = arith.divf %5, %6 : vector<8x1xf32>
    %8 = vector.broadcast %7 : vector<8x1xf32> to vector<8x32xf32>
    %9 = arith.subf %1, %8 : vector<8x32xf32>
    %10 = arith.mulf %9, %9 : vector<8x32xf32>
    %cst_7 = arith.constant dense<0.000000e+00> : vector<8xf32>
    %11 = vector.multi_reduction <add>, %10, %cst_7 [1] : vector<8x32xf32> to vector<8xf32>
    %12 = vector.shape_cast %11 : vector<8xf32> to vector<8x1xf32>
    %cst_8 = arith.constant 3.200000e+01 : f32
    %13 = vector.broadcast %cst_8 : f32 to vector<8x1xf32>
    %14 = arith.divf %12, %13 : vector<8x1xf32>
    %15 = vector.broadcast %7 : vector<8x1xf32> to vector<8x32xf32>
    %16 = arith.subf %1, %15 : vector<8x32xf32>
    %cst_9 = arith.constant 9.99999974E-6 : f32
    %17 = vector.broadcast %cst_9 : f32 to vector<8x1xf32>
    %18 = arith.addf %14, %17 : vector<8x1xf32>
    %19 = math.rsqrt %18 : vector<8x1xf32>
    %20 = vector.broadcast %19 : vector<8x1xf32> to vector<8x32xf32>
    %21 = arith.mulf %16, %20 : vector<8x32xf32>
    %22 = vector.broadcast %2 : vector<1x32xf32> to vector<8x32xf32>
    %23 = arith.mulf %21, %22 : vector<8x32xf32>
    %24 = vector.broadcast %3 : vector<1x32xf32> to vector<8x32xf32>
    %25 = arith.addf %23, %24 : vector<8x32xf32>
    %26 = arith.truncf %25 : vector<8x32xf32> to vector<8x32xbf16>
    %c0_10 = arith.constant 0 : index
    %c0_11 = arith.constant 0 : index
    %27 = vector.load %arg7[%c0_10, %c0_11] : memref<32x32xbf16, #tpu.memory_space<vmem>>, vector<32x32xbf16>
    %cst_12 = arith.constant dense<0.000000e+00> : vector<8x32xf32>
    %28 = tpu.matmul %26, %27, %cst_12 {dimension_numbers = #tpu.dot_dimension_numbers<[1], [0], [0], [1], [0, 0, 1, 1], [], []>} : vector<8x32xbf16>, vector<32x32xbf16>, vector<8x32xf32> -> vector<8x32xf32>
    %c0_13 = arith.constant 0 : index
    %c0_14 = arith.constant 0 : index
    %29 = vector.load %arg8[%c0_13, %c0_14] : memref<1x32xf32, #tpu.memory_space<vmem>>, vector<1x32xf32>
    %30 = vector.broadcast %29 : vector<1x32xf32> to vector<8x32xf32>
    %31 = arith.addf %28, %30 : vector<8x32xf32>
    %cst_15 = arith.constant 0.353553385 : f32
    %32 = vector.broadcast %cst_15 : f32 to vector<8x32xf32>
    %33 = arith.mulf %31, %32 : vector<8x32xf32>
    %c0_16 = arith.constant 0 : index
    %c0_17 = arith.constant 0 : index
    %c0_18 = arith.constant 0 : index
    %34 = vector.load %arg2[%c0_16, %c0_17, %c0_18] : memref<1x8x32xf32, #tpu.memory_space<vmem>>, vector<1x8x32xf32>
    %35 = vector.shape_cast %34 : vector<1x8x32xf32> to vector<8x32xf32>
    %36 = arith.truncf %35 : vector<8x32xf32> to vector<8x32xbf16>
    %c0_19 = arith.constant 0 : index
    %c0_20 = arith.constant 0 : index
    %37 = vector.load %arg9[%c0_19, %c0_20] : memref<32x64xbf16, #tpu.memory_space<vmem>>, vector<32x64xbf16>
    %cst_21 = arith.constant dense<0.000000e+00> : vector<8x64xf32>
    %38 = tpu.matmul %36, %37, %cst_21 {dimension_numbers = #tpu.dot_dimension_numbers<[1], [0], [0], [1], [0, 0, 1, 1], [], []>} : vector<8x32xbf16>, vector<32x64xbf16>, vector<8x64xf32> -> vector<8x64xf32>
    %c0_22 = arith.constant 0 : index
    %c0_23 = arith.constant 0 : index
    %39 = vector.load %arg10[%c0_22, %c0_23] : memref<1x64xf32, #tpu.memory_space<vmem>>, vector<1x64xf32>
    %40 = vector.broadcast %39 : vector<1x64xf32> to vector<8x64xf32>
    %41 = arith.addf %38, %40 : vector<8x64xf32>
    %42 = vector.extract_strided_slice %41 {offsets = [0, 0], sizes = [8, 32], strides = [1, 1]} : vector<8x64xf32> to vector<8x32xf32>
    %43 = vector.extract_strided_slice %41 {offsets = [0, 32], sizes = [8, 32], strides = [1, 1]} : vector<8x64xf32> to vector<8x32xf32>
    %c0_24 = arith.constant 0 : index
    %c0_25 = arith.constant 0 : index
    %c0_26 = arith.constant 0 : index
    %44 = vector.load %arg3[%c0_24, %c0_25, %c0_26] : memref<1x8x1xf32, #tpu.memory_space<vmem>>, vector<1x8x1xf32>
    %45 = vector.shape_cast %44 : vector<1x8x1xf32> to vector<8x1xf32>
    %c0_27 = arith.constant 0 : index
    %c0_28 = arith.constant 0 : index
    %c0_29 = arith.constant 0 : index
    %46 = vector.load %arg4[%c0_27, %c0_28, %c0_29] : memref<1x1x8xf32, #tpu.memory_space<vmem>>, vector<1x1x8xf32>
    %47 = vector.shape_cast %46 : vector<1x1x8xf32> to vector<1x8xf32>
    %48 = vector.broadcast %45 : vector<8x1xf32> to vector<8x8xf32>
    %49 = vector.broadcast %47 : vector<1x8xf32> to vector<8x8xf32>
    %50 = arith.mulf %48, %49 : vector<8x8xf32>
    %cst_30 = arith.constant 1.000000e+00 : f32
    %51 = vector.broadcast %cst_30 : f32 to vector<8x8xf32>
    %52 = arith.subf %50, %51 : vector<8x8xf32>
    %cst_31 = arith.constant 1.000000e+09 : f32
    %53 = vector.broadcast %cst_31 : f32 to vector<8x8xf32>
    %54 = arith.mulf %52, %53 : vector<8x8xf32>
    %c0_32 = arith.constant 0 : index
    %c0_33 = arith.constant 0 : index
    %55 = vector.load %arg12[%c0_32, %c0_33] : memref<1x32xf32, #tpu.memory_space<vmem>>, vector<1x32xf32>
    %cst_34 = arith.constant 0.000000e+00 : f32
    %56 = vector.broadcast %cst_34 : f32 to vector<8x32xf32>
    %57 = vector.extract_strided_slice %33 {offsets = [0, 0], sizes = [8, 8], strides = [1, 1]} : vector<8x32xf32> to vector<8x8xf32>
    %58 = arith.truncf %57 : vector<8x8xf32> to vector<8x8xbf16>
    %59 = vector.extract_strided_slice %42 {offsets = [0, 0], sizes = [8, 8], strides = [1, 1]} : vector<8x32xf32> to vector<8x8xf32>
    %60 = arith.truncf %59 : vector<8x8xf32> to vector<8x8xbf16>
    %61 = vector.extract_strided_slice %43 {offsets = [0, 0], sizes = [8, 8], strides = [1, 1]} : vector<8x32xf32> to vector<8x8xf32>
    %62 = arith.truncf %61 : vector<8x8xf32> to vector<8x8xbf16>
    %cst_35 = arith.constant dense<0.000000e+00> : vector<8x8xf32>
    %63 = tpu.matmul %58, %60, %cst_35 {dimension_numbers = #tpu.dot_dimension_numbers<[1], [1], [0], [0], [0, 0, 1, 0], [], []>} : vector<8x8xbf16>, vector<8x8xbf16>, vector<8x8xf32> -> vector<8x8xf32>
    %64 = arith.addf %63, %54 : vector<8x8xf32>
    %cst_36 = arith.constant dense<0xFF800000> : vector<8xf32>
    %65 = vector.multi_reduction <maximumf>, %64, %cst_36 [1] : vector<8x8xf32> to vector<8xf32>
    %66 = vector.shape_cast %65 : vector<8xf32> to vector<8x1xf32>
    %67 = vector.broadcast %66 : vector<8x1xf32> to vector<8x8xf32>
    %68 = arith.subf %64, %67 : vector<8x8xf32>
    %69 = math.exp %68 : vector<8x8xf32>
    %cst_37 = arith.constant dense<0.000000e+00> : vector<8xf32>
    %70 = vector.multi_reduction <add>, %69, %cst_37 [1] : vector<8x8xf32> to vector<8xf32>
    %71 = vector.shape_cast %70 : vector<8xf32> to vector<8x1xf32>
    %72 = tpu.reciprocal %71 {approx = true} : vector<8x1xf32> -> vector<8x1xf32>
    %73 = vector.broadcast %72 : vector<8x1xf32> to vector<8x8xf32>
    %74 = arith.mulf %69, %73 : vector<8x8xf32>
    %75 = arith.truncf %74 : vector<8x8xf32> to vector<8x8xbf16>
    %cst_38 = arith.constant dense<0.000000e+00> : vector<8x8xf32>
    %76 = tpu.matmul %75, %62, %cst_38 {dimension_numbers = #tpu.dot_dimension_numbers<[1], [0], [0], [1], [0, 0, 1, 1], [], []>} : vector<8x8xbf16>, vector<8x8xbf16>, vector<8x8xf32> -> vector<8x8xf32>
    %77 = arith.truncf %76 : vector<8x8xf32> to vector<8x8xbf16>
    %c0_39 = arith.constant 0 : index
    %c0_40 = arith.constant 0 : index
    %78 = vector.load %arg11[%c0_39, %c0_40] : memref<32x32xbf16, #tpu.memory_space<vmem>>, vector<8x32xbf16>
    %cst_41 = arith.constant dense<0.000000e+00> : vector<8x32xf32>
    %79 = tpu.matmul %77, %78, %cst_41 {dimension_numbers = #tpu.dot_dimension_numbers<[1], [0], [0], [1], [0, 0, 1, 1], [], []>} : vector<8x8xbf16>, vector<8x32xbf16>, vector<8x32xf32> -> vector<8x32xf32>
    %80 = arith.addf %56, %79 : vector<8x32xf32>
    %81 = vector.extract_strided_slice %33 {offsets = [0, 8], sizes = [8, 8], strides = [1, 1]} : vector<8x32xf32> to vector<8x8xf32>
    %82 = arith.truncf %81 : vector<8x8xf32> to vector<8x8xbf16>
    %83 = vector.extract_strided_slice %42 {offsets = [0, 8], sizes = [8, 8], strides = [1, 1]} : vector<8x32xf32> to vector<8x8xf32>
    %84 = arith.truncf %83 : vector<8x8xf32> to vector<8x8xbf16>
    %85 = vector.extract_strided_slice %43 {offsets = [0, 8], sizes = [8, 8], strides = [1, 1]} : vector<8x32xf32> to vector<8x8xf32>
    %86 = arith.truncf %85 : vector<8x8xf32> to vector<8x8xbf16>
    %cst_42 = arith.constant dense<0.000000e+00> : vector<8x8xf32>
    %87 = tpu.matmul %82, %84, %cst_42 {dimension_numbers = #tpu.dot_dimension_numbers<[1], [1], [0], [0], [0, 0, 1, 0], [], []>} : vector<8x8xbf16>, vector<8x8xbf16>, vector<8x8xf32> -> vector<8x8xf32>
    %88 = arith.addf %87, %54 : vector<8x8xf32>
    %cst_43 = arith.constant dense<0xFF800000> : vector<8xf32>
    %89 = vector.multi_reduction <maximumf>, %88, %cst_43 [1] : vector<8x8xf32> to vector<8xf32>
    %90 = vector.shape_cast %89 : vector<8xf32> to vector<8x1xf32>
    %91 = vector.broadcast %90 : vector<8x1xf32> to vector<8x8xf32>
    %92 = arith.subf %88, %91 : vector<8x8xf32>
    %93 = math.exp %92 : vector<8x8xf32>
    %cst_44 = arith.constant dense<0.000000e+00> : vector<8xf32>
    %94 = vector.multi_reduction <add>, %93, %cst_44 [1] : vector<8x8xf32> to vector<8xf32>
    %95 = vector.shape_cast %94 : vector<8xf32> to vector<8x1xf32>
    %96 = tpu.reciprocal %95 {approx = true} : vector<8x1xf32> -> vector<8x1xf32>
    %97 = vector.broadcast %96 : vector<8x1xf32> to vector<8x8xf32>
    %98 = arith.mulf %93, %97 : vector<8x8xf32>
    %99 = arith.truncf %98 : vector<8x8xf32> to vector<8x8xbf16>
    %cst_45 = arith.constant dense<0.000000e+00> : vector<8x8xf32>
    %100 = tpu.matmul %99, %86, %cst_45 {dimension_numbers = #tpu.dot_dimension_numbers<[1], [0], [0], [1], [0, 0, 1, 1], [], []>} : vector<8x8xbf16>, vector<8x8xbf16>, vector<8x8xf32> -> vector<8x8xf32>
    %101 = arith.truncf %100 : vector<8x8xf32> to vector<8x8xbf16>
    %c8 = arith.constant 8 : index
    %c0_46 = arith.constant 0 : index
    %102 = vector.load %arg11[%c8, %c0_46] : memref<32x32xbf16, #tpu.memory_space<vmem>>, vector<8x32xbf16>
    %cst_47 = arith.constant dense<0.000000e+00> : vector<8x32xf32>
    %103 = tpu.matmul %101, %102, %cst_47 {dimension_numbers = #tpu.dot_dimension_numbers<[1], [0], [0], [1], [0, 0, 1, 1], [], []>} : vector<8x8xbf16>, vector<8x32xbf16>, vector<8x32xf32> -> vector<8x32xf32>
    %104 = arith.addf %80, %103 : vector<8x32xf32>
    %105 = vector.extract_strided_slice %33 {offsets = [0, 16], sizes = [8, 8], strides = [1, 1]} : vector<8x32xf32> to vector<8x8xf32>
    %106 = arith.truncf %105 : vector<8x8xf32> to vector<8x8xbf16>
    %107 = vector.extract_strided_slice %42 {offsets = [0, 16], sizes = [8, 8], strides = [1, 1]} : vector<8x32xf32> to vector<8x8xf32>
    %108 = arith.truncf %107 : vector<8x8xf32> to vector<8x8xbf16>
    %109 = vector.extract_strided_slice %43 {offsets = [0, 16], sizes = [8, 8], strides = [1, 1]} : vector<8x32xf32> to vector<8x8xf32>
    %110 = arith.truncf %109 : vector<8x8xf32> to vector<8x8xbf16>
    %cst_48 = arith.constant dense<0.000000e+00> : vector<8x8xf32>
    %111 = tpu.matmul %106, %108, %cst_48 {dimension_numbers = #tpu.dot_dimension_numbers<[1], [1], [0], [0], [0, 0, 1, 0], [], []>} : vector<8x8xbf16>, vector<8x8xbf16>, vector<8x8xf32> -> vector<8x8xf32>
    %112 = arith.addf %111, %54 : vector<8x8xf32>
    %cst_49 = arith.constant dense<0xFF800000> : vector<8xf32>
    %113 = vector.multi_reduction <maximumf>, %112, %cst_49 [1] : vector<8x8xf32> to vector<8xf32>
    %114 = vector.shape_cast %113 : vector<8xf32> to vector<8x1xf32>
    %115 = vector.broadcast %114 : vector<8x1xf32> to vector<8x8xf32>
    %116 = arith.subf %112, %115 : vector<8x8xf32>
    %117 = math.exp %116 : vector<8x8xf32>
    %cst_50 = arith.constant dense<0.000000e+00> : vector<8xf32>
    %118 = vector.multi_reduction <add>, %117, %cst_50 [1] : vector<8x8xf32> to vector<8xf32>
    %119 = vector.shape_cast %118 : vector<8xf32> to vector<8x1xf32>
    %120 = tpu.reciprocal %119 {approx = true} : vector<8x1xf32> -> vector<8x1xf32>
    %121 = vector.broadcast %120 : vector<8x1xf32> to vector<8x8xf32>
    %122 = arith.mulf %117, %121 : vector<8x8xf32>
    %123 = arith.truncf %122 : vector<8x8xf32> to vector<8x8xbf16>
    %cst_51 = arith.constant dense<0.000000e+00> : vector<8x8xf32>
    %124 = tpu.matmul %123, %110, %cst_51 {dimension_numbers = #tpu.dot_dimension_numbers<[1], [0], [0], [1], [0, 0, 1, 1], [], []>} : vector<8x8xbf16>, vector<8x8xbf16>, vector<8x8xf32> -> vector<8x8xf32>
    %125 = arith.truncf %124 : vector<8x8xf32> to vector<8x8xbf16>
    %c16 = arith.constant 16 : index
    %c0_52 = arith.constant 0 : index
    %126 = vector.load %arg11[%c16, %c0_52] : memref<32x32xbf16, #tpu.memory_space<vmem>>, vector<8x32xbf16>
    %cst_53 = arith.constant dense<0.000000e+00> : vector<8x32xf32>
    %127 = tpu.matmul %125, %126, %cst_53 {dimension_numbers = #tpu.dot_dimension_numbers<[1], [0], [0], [1], [0, 0, 1, 1], [], []>} : vector<8x8xbf16>, vector<8x32xbf16>, vector<8x32xf32> -> vector<8x32xf32>
    %128 = arith.addf %104, %127 : vector<8x32xf32>
    %129 = vector.extract_strided_slice %33 {offsets = [0, 24], sizes = [8, 8], strides = [1, 1]} : vector<8x32xf32> to vector<8x8xf32>
    %130 = arith.truncf %129 : vector<8x8xf32> to vector<8x8xbf16>
    %131 = vector.extract_strided_slice %42 {offsets = [0, 24], sizes = [8, 8], strides = [1, 1]} : vector<8x32xf32> to vector<8x8xf32>
    %132 = arith.truncf %131 : vector<8x8xf32> to vector<8x8xbf16>
    %133 = vector.extract_strided_slice %43 {offsets = [0, 24], sizes = [8, 8], strides = [1, 1]} : vector<8x32xf32> to vector<8x8xf32>
    %134 = arith.truncf %133 : vector<8x8xf32> to vector<8x8xbf16>
    %cst_54 = arith.constant dense<0.000000e+00> : vector<8x8xf32>
    %135 = tpu.matmul %130, %132, %cst_54 {dimension_numbers = #tpu.dot_dimension_numbers<[1], [1], [0], [0], [0, 0, 1, 0], [], []>} : vector<8x8xbf16>, vector<8x8xbf16>, vector<8x8xf32> -> vector<8x8xf32>
    %136 = arith.addf %135, %54 : vector<8x8xf32>
    %cst_55 = arith.constant dense<0xFF800000> : vector<8xf32>
    %137 = vector.multi_reduction <maximumf>, %136, %cst_55 [1] : vector<8x8xf32> to vector<8xf32>
    %138 = vector.shape_cast %137 : vector<8xf32> to vector<8x1xf32>
    %139 = vector.broadcast %138 : vector<8x1xf32> to vector<8x8xf32>
    %140 = arith.subf %136, %139 : vector<8x8xf32>
    %141 = math.exp %140 : vector<8x8xf32>
    %cst_56 = arith.constant dense<0.000000e+00> : vector<8xf32>
    %142 = vector.multi_reduction <add>, %141, %cst_56 [1] : vector<8x8xf32> to vector<8xf32>
    %143 = vector.shape_cast %142 : vector<8xf32> to vector<8x1xf32>
    %144 = tpu.reciprocal %143 {approx = true} : vector<8x1xf32> -> vector<8x1xf32>
    %145 = vector.broadcast %144 : vector<8x1xf32> to vector<8x8xf32>
    %146 = arith.mulf %141, %145 : vector<8x8xf32>
    %147 = arith.truncf %146 : vector<8x8xf32> to vector<8x8xbf16>
    %cst_57 = arith.constant dense<0.000000e+00> : vector<8x8xf32>
    %148 = tpu.matmul %147, %134, %cst_57 {dimension_numbers = #tpu.dot_dimension_numbers<[1], [0], [0], [1], [0, 0, 1, 1], [], []>} : vector<8x8xbf16>, vector<8x8xbf16>, vector<8x8xf32> -> vector<8x8xf32>
    %149 = arith.truncf %148 : vector<8x8xf32> to vector<8x8xbf16>
    %c24 = arith.constant 24 : index
    %c0_58 = arith.constant 0 : index
    %150 = vector.load %arg11[%c24, %c0_58] : memref<32x32xbf16, #tpu.memory_space<vmem>>, vector<8x32xbf16>
    %cst_59 = arith.constant dense<0.000000e+00> : vector<8x32xf32>
    %151 = tpu.matmul %149, %150, %cst_59 {dimension_numbers = #tpu.dot_dimension_numbers<[1], [0], [0], [1], [0, 0, 1, 1], [], []>} : vector<8x8xbf16>, vector<8x32xbf16>, vector<8x32xf32> -> vector<8x32xf32>
    %152 = arith.addf %128, %151 : vector<8x32xf32>
    %153 = vector.broadcast %55 : vector<1x32xf32> to vector<8x32xf32>
    %154 = arith.addf %152, %153 : vector<8x32xf32>
    %155 = arith.addf %1, %154 : vector<8x32xf32>
    %c0_60 = arith.constant 0 : index
    %c0_61 = arith.constant 0 : index
    %c0_62 = arith.constant 0 : index
    %156 = vector.load %arg13[%c0_60, %c0_61, %c0_62] : memref<1x8x32xf32, #tpu.memory_space<vmem>>, vector<1x8x32xf32>
    %157 = vector.shape_cast %156 : vector<1x8x32xf32> to vector<8x32xf32>
    %158 = vector.shape_cast %155 : vector<8x32xf32> to vector<1x8x32xf32>
    tpu.vector_store %arg13[%c0_60, %c0_61, %c0_62], %158 {strides = array<i32>} : memref<1x8x32xf32, #tpu.memory_space<vmem>>, vector<1x8x32xf32>,
    return
  }
  func.func @transform_0(%arg0: i32) -> (i32, i32, i32) {
    %c0_i32 = arith.constant 0 : i32
    %c0_i32_0 = arith.constant 0 : i32
    %c0_i32_1 = arith.constant 0 : i32
    return %arg0, %c0_i32, %c0_i32_0 : i32, i32, i32
  }
  func.func @transform_1(%arg0: i32) -> (i32, i32, i32) {
    %c0_i32 = arith.constant 0 : i32
    %c0_i32_0 = arith.constant 0 : i32
    %c0_i32_1 = arith.constant 0 : i32
    return %arg0, %c0_i32, %c0_i32_0 : i32, i32, i32
  }
  func.func @transform_2(%arg0: i32) -> (i32, i32, i32) {
    %c0_i32 = arith.constant 0 : i32
    %c0_i32_0 = arith.constant 0 : i32
    %c0_i32_1 = arith.constant 0 : i32
    return %arg0, %c0_i32, %c0_i32_0 : i32, i32, i32
  }
  func.func @transform_3(%arg0: i32) -> (i32, i32, i32) {
    %c0_i32 = arith.constant 0 : i32
    %c0_i32_0 = arith.constant 0 : i32
    %c0_i32_1 = arith.constant 0 : i32
    return %arg0, %c0_i32, %c0_i32_0 : i32, i32, i32
  }
  func.func @transform_4(%arg0: i32) -> (i32, i32) {
    %c0_i32 = arith.constant 0 : i32
    %c0_i32_0 = arith.constant 0 : i32
    %c0_i32_1 = arith.constant 0 : i32
    return %c0_i32, %c0_i32_0 : i32, i32
  }
  func.func @transform_5(%arg0: i32) -> (i32, i32) {
    %c0_i32 = arith.constant 0 : i32
    %c0_i32_0 = arith.constant 0 : i32
    %c0_i32_1 = arith.constant 0 : i32
    return %c0_i32, %c0_i32_0 : i32, i32
  }
  func.func @transform_6(%arg0: i32) -> (i32, i32) {
    %c0_i32 = arith.constant 0 : i32
    %c0_i32_0 = arith.constant 0 : i32
    %c0_i32_1 = arith.constant 0 : i32
    return %c0_i32, %c0_i32_0 : i32, i32
  }
  func.func @transform_7(%arg0: i32) -> (i32, i32) {
    %c0_i32 = arith.constant 0 : i32
    %c0_i32_0 = arith.constant 0 : i32
    %c0_i32_1 = arith.constant 0 : i32
    return %c0_i32, %c0_i32_0 : i32, i32
  }
  func.func @transform_8(%arg0: i32) -> (i32, i32) {
    %c0_i32 = arith.constant 0 : i32
    %c0_i32_0 = arith.constant 0 : i32
    %c0_i32_1 = arith.constant 0 : i32
    return %c0_i32, %c0_i32_0 : i32, i32
  }
  func.func @transform_9(%arg0: i32) -> (i32, i32) {
    %c0_i32 = arith.constant 0 : i32
    %c0_i32_0 = arith.constant 0 : i32
    %c0_i32_1 = arith.constant 0 : i32
    return %c0_i32, %c0_i32_0 : i32, i32
  }
  func.func @transform_10(%arg0: i32) -> (i32, i32) {
    %c0_i32 = arith.constant 0 : i32
    %c0_i32_0 = arith.constant 0 : i32
    %c0_i32_1 = arith.constant 0 : i32
    return %c0_i32, %c0_i32_0 : i32, i32
  }
  func.func @transform_11(%arg0: i32) -> (i32, i32) {
    %c0_i32 = arith.constant 0 : i32
    %c0_i32_0 = arith.constant 0 : i32
    %c0_i32_1 = arith.constant 0 : i32
    return %c0_i32, %c0_i32_0 : i32, i32
  }
  func.func @transform_12(%arg0: i32) -> (i32, i32, i32) {
    %c0_i32 = arith.constant 0 : i32
    %c0_i32_0 = arith.constant 0 : i32
    %c0_i32_1 = arith.constant 0 : i32
    return %arg0, %c0_i32, %c0_i32_0 : i32, i32, i32
  }
}

module attributes {stable_mosaic.version = 11 : i64} {
  func.func @_ffn_kernel(%arg0: i32, %arg1: memref<16x32xf32, #tpu.memory_space<vmem>>, %arg2: memref<1x32xf32, #tpu.memory_space<vmem>>, %arg3: memref<1x32xf32, #tpu.memory_space<vmem>>, %arg4: memref<32x64xbf16, #tpu.memory_space<vmem>>, %arg5: memref<1x64xf32, #tpu.memory_space<vmem>>, %arg6: memref<64x32xbf16, #tpu.memory_space<vmem>>, %arg7: memref<1x32xf32, #tpu.memory_space<vmem>>, %arg8: memref<16x32xf32, #tpu.memory_space<vmem>>) attributes {dimension_semantics = [#tpu.dimension_semantics<parallel>], iteration_bounds = array<i64: 1>, scalar_prefetch = 0 : i64, scratch_operands = 0 : i64, tpu.core_type = #tpu.core_type<tc>, window_params = [{transform_indices = @transform_0, window_bounds = array<i64: 16, 32>}, {pipeline_mode = #tpu.pipeline_mode<synchronous>, transform_indices = @transform_1, window_bounds = array<i64: 1, 32>}, {pipeline_mode = #tpu.pipeline_mode<synchronous>, transform_indices = @transform_2, window_bounds = array<i64: 1, 32>}, {pipeline_mode = #tpu.pipeline_mode<synchronous>, transform_indices = @transform_3, window_bounds = array<i64: 32, 64>}, {pipeline_mode = #tpu.pipeline_mode<synchronous>, transform_indices = @transform_4, window_bounds = array<i64: 1, 64>}, {pipeline_mode = #tpu.pipeline_mode<synchronous>, transform_indices = @transform_5, window_bounds = array<i64: 64, 32>}, {pipeline_mode = #tpu.pipeline_mode<synchronous>, transform_indices = @transform_6, window_bounds = array<i64: 1, 32>}, {transform_indices = @transform_7, window_bounds = array<i64: 16, 32>}]} {
    %c0 = arith.constant 0 : index
    %c0_0 = arith.constant 0 : index
    %0 = vector.load %arg1[%c0, %c0_0] : memref<16x32xf32, #tpu.memory_space<vmem>>, vector<16x32xf32>
    %c0_1 = arith.constant 0 : index
    %c0_2 = arith.constant 0 : index
    %1 = vector.load %arg2[%c0_1, %c0_2] : memref<1x32xf32, #tpu.memory_space<vmem>>, vector<1x32xf32>
    %c0_3 = arith.constant 0 : index
    %c0_4 = arith.constant 0 : index
    %2 = vector.load %arg3[%c0_3, %c0_4] : memref<1x32xf32, #tpu.memory_space<vmem>>, vector<1x32xf32>
    %cst = arith.constant dense<0.000000e+00> : vector<16xf32>
    %3 = vector.multi_reduction <add>, %0, %cst [1] : vector<16x32xf32> to vector<16xf32>
    %4 = vector.shape_cast %3 : vector<16xf32> to vector<16x1xf32>
    %cst_5 = arith.constant 3.200000e+01 : f32
    %5 = vector.broadcast %cst_5 : f32 to vector<16x1xf32>
    %6 = arith.divf %4, %5 : vector<16x1xf32>
    %7 = vector.broadcast %6 : vector<16x1xf32> to vector<16x32xf32>
    %8 = arith.subf %0, %7 : vector<16x32xf32>
    %9 = arith.mulf %8, %8 : vector<16x32xf32>
    %cst_6 = arith.constant dense<0.000000e+00> : vector<16xf32>
    %10 = vector.multi_reduction <add>, %9, %cst_6 [1] : vector<16x32xf32> to vector<16xf32>
    %11 = vector.shape_cast %10 : vector<16xf32> to vector<16x1xf32>
    %cst_7 = arith.constant 3.200000e+01 : f32
    %12 = vector.broadcast %cst_7 : f32 to vector<16x1xf32>
    %13 = arith.divf %11, %12 : vector<16x1xf32>
    %14 = vector.broadcast %6 : vector<16x1xf32> to vector<16x32xf32>
    %15 = arith.subf %0, %14 : vector<16x32xf32>
    %cst_8 = arith.constant 9.99999974E-6 : f32
    %16 = vector.broadcast %cst_8 : f32 to vector<16x1xf32>
    %17 = arith.addf %13, %16 : vector<16x1xf32>
    %18 = math.rsqrt %17 : vector<16x1xf32>
    %19 = vector.broadcast %18 : vector<16x1xf32> to vector<16x32xf32>
    %20 = arith.mulf %15, %19 : vector<16x32xf32>
    %21 = vector.broadcast %1 : vector<1x32xf32> to vector<16x32xf32>
    %22 = arith.mulf %20, %21 : vector<16x32xf32>
    %23 = vector.broadcast %2 : vector<1x32xf32> to vector<16x32xf32>
    %24 = arith.addf %22, %23 : vector<16x32xf32>
    %25 = arith.truncf %24 : vector<16x32xf32> to vector<16x32xbf16>
    %c0_9 = arith.constant 0 : index
    %c0_10 = arith.constant 0 : index
    %26 = vector.load %arg4[%c0_9, %c0_10] : memref<32x64xbf16, #tpu.memory_space<vmem>>, vector<32x64xbf16>
    %cst_11 = arith.constant dense<0.000000e+00> : vector<16x64xf32>
    %27 = tpu.matmul %25, %26, %cst_11 {dimension_numbers = #tpu.dot_dimension_numbers<[1], [0], [0], [1], [0, 0, 1, 1], [], []>} : vector<16x32xbf16>, vector<32x64xbf16>, vector<16x64xf32> -> vector<16x64xf32>
    %c0_12 = arith.constant 0 : index
    %c0_13 = arith.constant 0 : index
    %28 = vector.load %arg5[%c0_12, %c0_13] : memref<1x64xf32, #tpu.memory_space<vmem>>, vector<1x64xf32>
    %29 = vector.broadcast %28 : vector<1x64xf32> to vector<16x64xf32>
    %30 = arith.addf %27, %29 : vector<16x64xf32>
    %cst_14 = arith.constant 0.000000e+00 : f32
    %31 = vector.broadcast %cst_14 : f32 to vector<16x64xf32>
    %32 = arith.maximumf %30, %31 : vector<16x64xf32>
    %33 = arith.truncf %32 : vector<16x64xf32> to vector<16x64xbf16>
    %c0_15 = arith.constant 0 : index
    %c0_16 = arith.constant 0 : index
    %34 = vector.load %arg6[%c0_15, %c0_16] : memref<64x32xbf16, #tpu.memory_space<vmem>>, vector<64x32xbf16>
    %cst_17 = arith.constant dense<0.000000e+00> : vector<16x32xf32>
    %35 = tpu.matmul %33, %34, %cst_17 {dimension_numbers = #tpu.dot_dimension_numbers<[1], [0], [0], [1], [0, 0, 1, 1], [], []>} : vector<16x64xbf16>, vector<64x32xbf16>, vector<16x32xf32> -> vector<16x32xf32>
    %c0_18 = arith.constant 0 : index
    %c0_19 = arith.constant 0 : index
    %36 = vector.load %arg7[%c0_18, %c0_19] : memref<1x32xf32, #tpu.memory_space<vmem>>, vector<1x32xf32>
    %37 = vector.broadcast %36 : vector<1x32xf32> to vector<16x32xf32>
    %38 = arith.addf %35, %37 : vector<16x32xf32>
    %39 = arith.addf %0, %38 : vector<16x32xf32>
    %c0_20 = arith.constant 0 : index
    %c0_21 = arith.constant 0 : index
    %40 = vector.load %arg8[%c0_20, %c0_21] : memref<16x32xf32, #tpu.memory_space<vmem>>, vector<16x32xf32>
    tpu.vector_store %arg8[%c0_20, %c0_21], %39 {strides = array<i32>} : memref<16x32xf32, #tpu.memory_space<vmem>>, vector<16x32xf32>,
    return
  }
  func.func @transform_0(%arg0: i32) -> (i32, i32) {
    %c0_i32 = arith.constant 0 : i32
    %c0_i32_0 = arith.constant 0 : i32
    return %arg0, %c0_i32 : i32, i32
  }
  func.func @transform_1(%arg0: i32) -> (i32, i32) {
    %c0_i32 = arith.constant 0 : i32
    %c0_i32_0 = arith.constant 0 : i32
    %c0_i32_1 = arith.constant 0 : i32
    return %c0_i32, %c0_i32_0 : i32, i32
  }
  func.func @transform_2(%arg0: i32) -> (i32, i32) {
    %c0_i32 = arith.constant 0 : i32
    %c0_i32_0 = arith.constant 0 : i32
    %c0_i32_1 = arith.constant 0 : i32
    return %c0_i32, %c0_i32_0 : i32, i32
  }
  func.func @transform_3(%arg0: i32) -> (i32, i32) {
    %c0_i32 = arith.constant 0 : i32
    %c0_i32_0 = arith.constant 0 : i32
    %c0_i32_1 = arith.constant 0 : i32
    return %c0_i32, %c0_i32_0 : i32, i32
  }
  func.func @transform_4(%arg0: i32) -> (i32, i32) {
    %c0_i32 = arith.constant 0 : i32
    %c0_i32_0 = arith.constant 0 : i32
    %c0_i32_1 = arith.constant 0 : i32
    return %c0_i32, %c0_i32_0 : i32, i32
  }
  func.func @transform_5(%arg0: i32) -> (i32, i32) {
    %c0_i32 = arith.constant 0 : i32
    %c0_i32_0 = arith.constant 0 : i32
    %c0_i32_1 = arith.constant 0 : i32
    return %c0_i32, %c0_i32_0 : i32, i32
  }
  func.func @transform_6(%arg0: i32) -> (i32, i32) {
    %c0_i32 = arith.constant 0 : i32
    %c0_i32_0 = arith.constant 0 : i32
    %c0_i32_1 = arith.constant 0 : i32
    return %c0_i32, %c0_i32_0 : i32, i32
  }
  func.func @transform_7(%arg0: i32) -> (i32, i32) {
    %c0_i32 = arith.constant 0 : i32
    %c0_i32_0 = arith.constant 0 : i32
    return %arg0, %c0_i32 : i32, i32
  }
}

module attributes {stable_mosaic.version = 11 : i64} {
  func.func @_cross_attn_kernel(%arg0: i32, %arg1: memref<1x8x32xf32, #tpu.memory_space<vmem>>, %arg2: memref<1x8x32xf32, #tpu.memory_space<vmem>>, %arg3: memref<1x8x1xf32, #tpu.memory_space<vmem>>, %arg4: memref<1x1x8xf32, #tpu.memory_space<vmem>>, %arg5: memref<1x32xf32, #tpu.memory_space<vmem>>, %arg6: memref<1x32xf32, #tpu.memory_space<vmem>>, %arg7: memref<32x32xbf16, #tpu.memory_space<vmem>>, %arg8: memref<1x32xf32, #tpu.memory_space<vmem>>, %arg9: memref<32x64xbf16, #tpu.memory_space<vmem>>, %arg10: memref<1x64xf32, #tpu.memory_space<vmem>>, %arg11: memref<32x32xbf16, #tpu.memory_space<vmem>>, %arg12: memref<1x32xf32, #tpu.memory_space<vmem>>, %arg13: memref<1x8x32xf32, #tpu.memory_space<vmem>>) attributes {dimension_semantics = [#tpu.dimension_semantics<parallel>], iteration_bounds = array<i64: 2>, scalar_prefetch = 0 : i64, scratch_operands = 0 : i64, tpu.core_type = #tpu.core_type<tc>, window_params = [{transform_indices = @transform_0, window_bounds = array<i64: 1, 8, 32>}, {transform_indices = @transform_1, window_bounds = array<i64: 1, 8, 32>}, {transform_indices = @transform_2, window_bounds = array<i64: 1, 8, 1>}, {transform_indices = @transform_3, window_bounds = array<i64: 1, 1, 8>}, {pipeline_mode = #tpu.pipeline_mode<synchronous>, transform_indices = @transform_4, window_bounds = array<i64: 1, 32>}, {pipeline_mode = #tpu.pipeline_mode<synchronous>, transform_indices = @transform_5, window_bounds = array<i64: 1, 32>}, {pipeline_mode = #tpu.pipeline_mode<synchronous>, transform_indices = @transform_6, window_bounds = array<i64: 32, 32>}, {pipeline_mode = #tpu.pipeline_mode<synchronous>, transform_indices = @transform_7, window_bounds = array<i64: 1, 32>}, {pipeline_mode = #tpu.pipeline_mode<synchronous>, transform_indices = @transform_8, window_bounds = array<i64: 32, 64>}, {pipeline_mode = #tpu.pipeline_mode<synchronous>, transform_indices = @transform_9, window_bounds = array<i64: 1, 64>}, {pipeline_mode = #tpu.pipeline_mode<synchronous>, transform_indices = @transform_10, window_bounds = array<i64: 32, 32>}, {pipeline_mode = #tpu.pipeline_mode<synchronous>, transform_indices = @transform_11, window_bounds = array<i64: 1, 32>}, {transform_indices = @transform_12, window_bounds = array<i64: 1, 8, 32>}]} {
    %c0 = arith.constant 0 : index
    %c0_0 = arith.constant 0 : index
    %c0_1 = arith.constant 0 : index
    %0 = vector.load %arg1[%c0, %c0_0, %c0_1] : memref<1x8x32xf32, #tpu.memory_space<vmem>>, vector<1x8x32xf32>
    %1 = vector.shape_cast %0 : vector<1x8x32xf32> to vector<8x32xf32>
    %c0_2 = arith.constant 0 : index
    %c0_3 = arith.constant 0 : index
    %2 = vector.load %arg5[%c0_2, %c0_3] : memref<1x32xf32, #tpu.memory_space<vmem>>, vector<1x32xf32>
    %c0_4 = arith.constant 0 : index
    %c0_5 = arith.constant 0 : index
    %3 = vector.load %arg6[%c0_4, %c0_5] : memref<1x32xf32, #tpu.memory_space<vmem>>, vector<1x32xf32>
    %cst = arith.constant dense<0.000000e+00> : vector<8xf32>
    %4 = vector.multi_reduction <add>, %1, %cst [1] : vector<8x32xf32> to vector<8xf32>
    %5 = vector.shape_cast %4 : vector<8xf32> to vector<8x1xf32>
    %cst_6 = arith.constant 3.200000e+01 : f32
    %6 = vector.broadcast %cst_6 : f32 to vector<8x1xf32>
    %7 = arith.divf %5, %6 : vector<8x1xf32>
    %8 = vector.broadcast %7 : vector<8x1xf32> to vector<8x32xf32>
    %9 = arith.subf %1, %8 : vector<8x32xf32>
    %10 = arith.mulf %9, %9 : vector<8x32xf32>
    %cst_7 = arith.constant dense<0.000000e+00> : vector<8xf32>
    %11 = vector.multi_reduction <add>, %10, %cst_7 [1] : vector<8x32xf32> to vector<8xf32>
    %12 = vector.shape_cast %11 : vector<8xf32> to vector<8x1xf32>
    %cst_8 = arith.constant 3.200000e+01 : f32
    %13 = vector.broadcast %cst_8 : f32 to vector<8x1xf32>
    %14 = arith.divf %12, %13 : vector<8x1xf32>
    %15 = vector.broadcast %7 : vector<8x1xf32> to vector<8x32xf32>
    %16 = arith.subf %1, %15 : vector<8x32xf32>
    %cst_9 = arith.constant 9.99999974E-6 : f32
    %17 = vector.broadcast %cst_9 : f32 to vector<8x1xf32>
    %18 = arith.addf %14, %17 : vector<8x1xf32>
    %19 = math.rsqrt %18 : vector<8x1xf32>
    %20 = vector.broadcast %19 : vector<8x1xf32> to vector<8x32xf32>
    %21 = arith.mulf %16, %20 : vector<8x32xf32>
    %22 = vector.broadcast %2 : vector<1x32xf32> to vector<8x32xf32>
    %23 = arith.mulf %21, %22 : vector<8x32xf32>
    %24 = vector.broadcast %3 : vector<1x32xf32> to vector<8x32xf32>
    %25 = arith.addf %23, %24 : vector<8x32xf32>
    %26 = arith.truncf %25 : vector<8x32xf32> to vector<8x32xbf16>
    %c0_10 = arith.constant 0 : index
    %c0_11 = arith.constant 0 : index
    %27 = vector.load %arg7[%c0_10, %c0_11] : memref<32x32xbf16, #tpu.memory_space<vmem>>, vector<32x32xbf16>
    %cst_12 = arith.constant dense<0.000000e+00> : vector<8x32xf32>
    %28 = tpu.matmul %26, %27, %cst_12 {dimension_numbers = #tpu.dot_dimension_numbers<[1], [0], [0], [1], [0, 0, 1, 1], [], []>} : vector<8x32xbf16>, vector<32x32xbf16>, vector<8x32xf32> -> vector<8x32xf32>
    %c0_13 = arith.constant 0 : index
    %c0_14 = arith.constant 0 : index
    %29 = vector.load %arg8[%c0_13, %c0_14] : memref<1x32xf32, #tpu.memory_space<vmem>>, vector<1x32xf32>
    %30 = vector.broadcast %29 : vector<1x32xf32> to vector<8x32xf32>
    %31 = arith.addf %28, %30 : vector<8x32xf32>
    %cst_15 = arith.constant 0.353553385 : f32
    %32 = vector.broadcast %cst_15 : f32 to vector<8x32xf32>
    %33 = arith.mulf %31, %32 : vector<8x32xf32>
    %c0_16 = arith.constant 0 : index
    %c0_17 = arith.constant 0 : index
    %c0_18 = arith.constant 0 : index
    %34 = vector.load %arg2[%c0_16, %c0_17, %c0_18] : memref<1x8x32xf32, #tpu.memory_space<vmem>>, vector<1x8x32xf32>
    %35 = vector.shape_cast %34 : vector<1x8x32xf32> to vector<8x32xf32>
    %36 = arith.truncf %35 : vector<8x32xf32> to vector<8x32xbf16>
    %c0_19 = arith.constant 0 : index
    %c0_20 = arith.constant 0 : index
    %37 = vector.load %arg9[%c0_19, %c0_20] : memref<32x64xbf16, #tpu.memory_space<vmem>>, vector<32x64xbf16>
    %cst_21 = arith.constant dense<0.000000e+00> : vector<8x64xf32>
    %38 = tpu.matmul %36, %37, %cst_21 {dimension_numbers = #tpu.dot_dimension_numbers<[1], [0], [0], [1], [0, 0, 1, 1], [], []>} : vector<8x32xbf16>, vector<32x64xbf16>, vector<8x64xf32> -> vector<8x64xf32>
    %c0_22 = arith.constant 0 : index
    %c0_23 = arith.constant 0 : index
    %39 = vector.load %arg10[%c0_22, %c0_23] : memref<1x64xf32, #tpu.memory_space<vmem>>, vector<1x64xf32>
    %40 = vector.broadcast %39 : vector<1x64xf32> to vector<8x64xf32>
    %41 = arith.addf %38, %40 : vector<8x64xf32>
    %42 = vector.extract_strided_slice %41 {offsets = [0, 0], sizes = [8, 32], strides = [1, 1]} : vector<8x64xf32> to vector<8x32xf32>
    %43 = vector.extract_strided_slice %41 {offsets = [0, 32], sizes = [8, 32], strides = [1, 1]} : vector<8x64xf32> to vector<8x32xf32>
    %c0_24 = arith.constant 0 : index
    %c0_25 = arith.constant 0 : index
    %c0_26 = arith.constant 0 : index
    %44 = vector.load %arg3[%c0_24, %c0_25, %c0_26] : memref<1x8x1xf32, #tpu.memory_space<vmem>>, vector<1x8x1xf32>
    %45 = vector.shape_cast %44 : vector<1x8x1xf32> to vector<8x1xf32>
    %c0_27 = arith.constant 0 : index
    %c0_28 = arith.constant 0 : index
    %c0_29 = arith.constant 0 : index
    %46 = vector.load %arg4[%c0_27, %c0_28, %c0_29] : memref<1x1x8xf32, #tpu.memory_space<vmem>>, vector<1x1x8xf32>
    %47 = vector.shape_cast %46 : vector<1x1x8xf32> to vector<1x8xf32>
    %48 = vector.broadcast %45 : vector<8x1xf32> to vector<8x8xf32>
    %49 = vector.broadcast %47 : vector<1x8xf32> to vector<8x8xf32>
    %50 = arith.mulf %48, %49 : vector<8x8xf32>
    %cst_30 = arith.constant 1.000000e+00 : f32
    %51 = vector.broadcast %cst_30 : f32 to vector<8x8xf32>
    %52 = arith.subf %50, %51 : vector<8x8xf32>
    %cst_31 = arith.constant 1.000000e+09 : f32
    %53 = vector.broadcast %cst_31 : f32 to vector<8x8xf32>
    %54 = arith.mulf %52, %53 : vector<8x8xf32>
    %c0_32 = arith.constant 0 : index
    %c0_33 = arith.constant 0 : index
    %55 = vector.load %arg12[%c0_32, %c0_33] : memref<1x32xf32, #tpu.memory_space<vmem>>, vector<1x32xf32>
    %cst_34 = arith.constant 0.000000e+00 : f32
    %56 = vector.broadcast %cst_34 : f32 to vector<8x32xf32>
    %57 = vector.extract_strided_slice %33 {offsets = [0, 0], sizes = [8, 8], strides = [1, 1]} : vector<8x32xf32> to vector<8x8xf32>
    %58 = arith.truncf %57 : vector<8x8xf32> to vector<8x8xbf16>
    %59 = vector.extract_strided_slice %42 {offsets = [0, 0], sizes = [8, 8], strides = [1, 1]} : vector<8x32xf32> to vector<8x8xf32>
    %60 = arith.truncf %59 : vector<8x8xf32> to vector<8x8xbf16>
    %61 = vector.extract_strided_slice %43 {offsets = [0, 0], sizes = [8, 8], strides = [1, 1]} : vector<8x32xf32> to vector<8x8xf32>
    %62 = arith.truncf %61 : vector<8x8xf32> to vector<8x8xbf16>
    %cst_35 = arith.constant dense<0.000000e+00> : vector<8x8xf32>
    %63 = tpu.matmul %58, %60, %cst_35 {dimension_numbers = #tpu.dot_dimension_numbers<[1], [1], [0], [0], [0, 0, 1, 0], [], []>} : vector<8x8xbf16>, vector<8x8xbf16>, vector<8x8xf32> -> vector<8x8xf32>
    %64 = arith.addf %63, %54 : vector<8x8xf32>
    %cst_36 = arith.constant dense<0xFF800000> : vector<8xf32>
    %65 = vector.multi_reduction <maximumf>, %64, %cst_36 [1] : vector<8x8xf32> to vector<8xf32>
    %66 = vector.shape_cast %65 : vector<8xf32> to vector<8x1xf32>
    %67 = vector.broadcast %66 : vector<8x1xf32> to vector<8x8xf32>
    %68 = arith.subf %64, %67 : vector<8x8xf32>
    %69 = math.exp %68 : vector<8x8xf32>
    %cst_37 = arith.constant dense<0.000000e+00> : vector<8xf32>
    %70 = vector.multi_reduction <add>, %69, %cst_37 [1] : vector<8x8xf32> to vector<8xf32>
    %71 = vector.shape_cast %70 : vector<8xf32> to vector<8x1xf32>
    %72 = tpu.reciprocal %71 {approx = true} : vector<8x1xf32> -> vector<8x1xf32>
    %73 = vector.broadcast %72 : vector<8x1xf32> to vector<8x8xf32>
    %74 = arith.mulf %69, %73 : vector<8x8xf32>
    %75 = arith.truncf %74 : vector<8x8xf32> to vector<8x8xbf16>
    %cst_38 = arith.constant dense<0.000000e+00> : vector<8x8xf32>
    %76 = tpu.matmul %75, %62, %cst_38 {dimension_numbers = #tpu.dot_dimension_numbers<[1], [0], [0], [1], [0, 0, 1, 1], [], []>} : vector<8x8xbf16>, vector<8x8xbf16>, vector<8x8xf32> -> vector<8x8xf32>
    %77 = arith.truncf %76 : vector<8x8xf32> to vector<8x8xbf16>
    %c0_39 = arith.constant 0 : index
    %c0_40 = arith.constant 0 : index
    %78 = vector.load %arg11[%c0_39, %c0_40] : memref<32x32xbf16, #tpu.memory_space<vmem>>, vector<8x32xbf16>
    %cst_41 = arith.constant dense<0.000000e+00> : vector<8x32xf32>
    %79 = tpu.matmul %77, %78, %cst_41 {dimension_numbers = #tpu.dot_dimension_numbers<[1], [0], [0], [1], [0, 0, 1, 1], [], []>} : vector<8x8xbf16>, vector<8x32xbf16>, vector<8x32xf32> -> vector<8x32xf32>
    %80 = arith.addf %56, %79 : vector<8x32xf32>
    %81 = vector.extract_strided_slice %33 {offsets = [0, 8], sizes = [8, 8], strides = [1, 1]} : vector<8x32xf32> to vector<8x8xf32>
    %82 = arith.truncf %81 : vector<8x8xf32> to vector<8x8xbf16>
    %83 = vector.extract_strided_slice %42 {offsets = [0, 8], sizes = [8, 8], strides = [1, 1]} : vector<8x32xf32> to vector<8x8xf32>
    %84 = arith.truncf %83 : vector<8x8xf32> to vector<8x8xbf16>
    %85 = vector.extract_strided_slice %43 {offsets = [0, 8], sizes = [8, 8], strides = [1, 1]} : vector<8x32xf32> to vector<8x8xf32>
    %86 = arith.truncf %85 : vector<8x8xf32> to vector<8x8xbf16>
    %cst_42 = arith.constant dense<0.000000e+00> : vector<8x8xf32>
    %87 = tpu.matmul %82, %84, %cst_42 {dimension_numbers = #tpu.dot_dimension_numbers<[1], [1], [0], [0], [0, 0, 1, 0], [], []>} : vector<8x8xbf16>, vector<8x8xbf16>, vector<8x8xf32> -> vector<8x8xf32>
    %88 = arith.addf %87, %54 : vector<8x8xf32>
    %cst_43 = arith.constant dense<0xFF800000> : vector<8xf32>
    %89 = vector.multi_reduction <maximumf>, %88, %cst_43 [1] : vector<8x8xf32> to vector<8xf32>
    %90 = vector.shape_cast %89 : vector<8xf32> to vector<8x1xf32>
    %91 = vector.broadcast %90 : vector<8x1xf32> to vector<8x8xf32>
    %92 = arith.subf %88, %91 : vector<8x8xf32>
    %93 = math.exp %92 : vector<8x8xf32>
    %cst_44 = arith.constant dense<0.000000e+00> : vector<8xf32>
    %94 = vector.multi_reduction <add>, %93, %cst_44 [1] : vector<8x8xf32> to vector<8xf32>
    %95 = vector.shape_cast %94 : vector<8xf32> to vector<8x1xf32>
    %96 = tpu.reciprocal %95 {approx = true} : vector<8x1xf32> -> vector<8x1xf32>
    %97 = vector.broadcast %96 : vector<8x1xf32> to vector<8x8xf32>
    %98 = arith.mulf %93, %97 : vector<8x8xf32>
    %99 = arith.truncf %98 : vector<8x8xf32> to vector<8x8xbf16>
    %cst_45 = arith.constant dense<0.000000e+00> : vector<8x8xf32>
    %100 = tpu.matmul %99, %86, %cst_45 {dimension_numbers = #tpu.dot_dimension_numbers<[1], [0], [0], [1], [0, 0, 1, 1], [], []>} : vector<8x8xbf16>, vector<8x8xbf16>, vector<8x8xf32> -> vector<8x8xf32>
    %101 = arith.truncf %100 : vector<8x8xf32> to vector<8x8xbf16>
    %c8 = arith.constant 8 : index
    %c0_46 = arith.constant 0 : index
    %102 = vector.load %arg11[%c8, %c0_46] : memref<32x32xbf16, #tpu.memory_space<vmem>>, vector<8x32xbf16>
    %cst_47 = arith.constant dense<0.000000e+00> : vector<8x32xf32>
    %103 = tpu.matmul %101, %102, %cst_47 {dimension_numbers = #tpu.dot_dimension_numbers<[1], [0], [0], [1], [0, 0, 1, 1], [], []>} : vector<8x8xbf16>, vector<8x32xbf16>, vector<8x32xf32> -> vector<8x32xf32>
    %104 = arith.addf %80, %103 : vector<8x32xf32>
    %105 = vector.extract_strided_slice %33 {offsets = [0, 16], sizes = [8, 8], strides = [1, 1]} : vector<8x32xf32> to vector<8x8xf32>
    %106 = arith.truncf %105 : vector<8x8xf32> to vector<8x8xbf16>
    %107 = vector.extract_strided_slice %42 {offsets = [0, 16], sizes = [8, 8], strides = [1, 1]} : vector<8x32xf32> to vector<8x8xf32>
    %108 = arith.truncf %107 : vector<8x8xf32> to vector<8x8xbf16>
    %109 = vector.extract_strided_slice %43 {offsets = [0, 16], sizes = [8, 8], strides = [1, 1]} : vector<8x32xf32> to vector<8x8xf32>
    %110 = arith.truncf %109 : vector<8x8xf32> to vector<8x8xbf16>
    %cst_48 = arith.constant dense<0.000000e+00> : vector<8x8xf32>
    %111 = tpu.matmul %106, %108, %cst_48 {dimension_numbers = #tpu.dot_dimension_numbers<[1], [1], [0], [0], [0, 0, 1, 0], [], []>} : vector<8x8xbf16>, vector<8x8xbf16>, vector<8x8xf32> -> vector<8x8xf32>
    %112 = arith.addf %111, %54 : vector<8x8xf32>
    %cst_49 = arith.constant dense<0xFF800000> : vector<8xf32>
    %113 = vector.multi_reduction <maximumf>, %112, %cst_49 [1] : vector<8x8xf32> to vector<8xf32>
    %114 = vector.shape_cast %113 : vector<8xf32> to vector<8x1xf32>
    %115 = vector.broadcast %114 : vector<8x1xf32> to vector<8x8xf32>
    %116 = arith.subf %112, %115 : vector<8x8xf32>
    %117 = math.exp %116 : vector<8x8xf32>
    %cst_50 = arith.constant dense<0.000000e+00> : vector<8xf32>
    %118 = vector.multi_reduction <add>, %117, %cst_50 [1] : vector<8x8xf32> to vector<8xf32>
    %119 = vector.shape_cast %118 : vector<8xf32> to vector<8x1xf32>
    %120 = tpu.reciprocal %119 {approx = true} : vector<8x1xf32> -> vector<8x1xf32>
    %121 = vector.broadcast %120 : vector<8x1xf32> to vector<8x8xf32>
    %122 = arith.mulf %117, %121 : vector<8x8xf32>
    %123 = arith.truncf %122 : vector<8x8xf32> to vector<8x8xbf16>
    %cst_51 = arith.constant dense<0.000000e+00> : vector<8x8xf32>
    %124 = tpu.matmul %123, %110, %cst_51 {dimension_numbers = #tpu.dot_dimension_numbers<[1], [0], [0], [1], [0, 0, 1, 1], [], []>} : vector<8x8xbf16>, vector<8x8xbf16>, vector<8x8xf32> -> vector<8x8xf32>
    %125 = arith.truncf %124 : vector<8x8xf32> to vector<8x8xbf16>
    %c16 = arith.constant 16 : index
    %c0_52 = arith.constant 0 : index
    %126 = vector.load %arg11[%c16, %c0_52] : memref<32x32xbf16, #tpu.memory_space<vmem>>, vector<8x32xbf16>
    %cst_53 = arith.constant dense<0.000000e+00> : vector<8x32xf32>
    %127 = tpu.matmul %125, %126, %cst_53 {dimension_numbers = #tpu.dot_dimension_numbers<[1], [0], [0], [1], [0, 0, 1, 1], [], []>} : vector<8x8xbf16>, vector<8x32xbf16>, vector<8x32xf32> -> vector<8x32xf32>
    %128 = arith.addf %104, %127 : vector<8x32xf32>
    %129 = vector.extract_strided_slice %33 {offsets = [0, 24], sizes = [8, 8], strides = [1, 1]} : vector<8x32xf32> to vector<8x8xf32>
    %130 = arith.truncf %129 : vector<8x8xf32> to vector<8x8xbf16>
    %131 = vector.extract_strided_slice %42 {offsets = [0, 24], sizes = [8, 8], strides = [1, 1]} : vector<8x32xf32> to vector<8x8xf32>
    %132 = arith.truncf %131 : vector<8x8xf32> to vector<8x8xbf16>
    %133 = vector.extract_strided_slice %43 {offsets = [0, 24], sizes = [8, 8], strides = [1, 1]} : vector<8x32xf32> to vector<8x8xf32>
    %134 = arith.truncf %133 : vector<8x8xf32> to vector<8x8xbf16>
    %cst_54 = arith.constant dense<0.000000e+00> : vector<8x8xf32>
    %135 = tpu.matmul %130, %132, %cst_54 {dimension_numbers = #tpu.dot_dimension_numbers<[1], [1], [0], [0], [0, 0, 1, 0], [], []>} : vector<8x8xbf16>, vector<8x8xbf16>, vector<8x8xf32> -> vector<8x8xf32>
    %136 = arith.addf %135, %54 : vector<8x8xf32>
    %cst_55 = arith.constant dense<0xFF800000> : vector<8xf32>
    %137 = vector.multi_reduction <maximumf>, %136, %cst_55 [1] : vector<8x8xf32> to vector<8xf32>
    %138 = vector.shape_cast %137 : vector<8xf32> to vector<8x1xf32>
    %139 = vector.broadcast %138 : vector<8x1xf32> to vector<8x8xf32>
    %140 = arith.subf %136, %139 : vector<8x8xf32>
    %141 = math.exp %140 : vector<8x8xf32>
    %cst_56 = arith.constant dense<0.000000e+00> : vector<8xf32>
    %142 = vector.multi_reduction <add>, %141, %cst_56 [1] : vector<8x8xf32> to vector<8xf32>
    %143 = vector.shape_cast %142 : vector<8xf32> to vector<8x1xf32>
    %144 = tpu.reciprocal %143 {approx = true} : vector<8x1xf32> -> vector<8x1xf32>
    %145 = vector.broadcast %144 : vector<8x1xf32> to vector<8x8xf32>
    %146 = arith.mulf %141, %145 : vector<8x8xf32>
    %147 = arith.truncf %146 : vector<8x8xf32> to vector<8x8xbf16>
    %cst_57 = arith.constant dense<0.000000e+00> : vector<8x8xf32>
    %148 = tpu.matmul %147, %134, %cst_57 {dimension_numbers = #tpu.dot_dimension_numbers<[1], [0], [0], [1], [0, 0, 1, 1], [], []>} : vector<8x8xbf16>, vector<8x8xbf16>, vector<8x8xf32> -> vector<8x8xf32>
    %149 = arith.truncf %148 : vector<8x8xf32> to vector<8x8xbf16>
    %c24 = arith.constant 24 : index
    %c0_58 = arith.constant 0 : index
    %150 = vector.load %arg11[%c24, %c0_58] : memref<32x32xbf16, #tpu.memory_space<vmem>>, vector<8x32xbf16>
    %cst_59 = arith.constant dense<0.000000e+00> : vector<8x32xf32>
    %151 = tpu.matmul %149, %150, %cst_59 {dimension_numbers = #tpu.dot_dimension_numbers<[1], [0], [0], [1], [0, 0, 1, 1], [], []>} : vector<8x8xbf16>, vector<8x32xbf16>, vector<8x32xf32> -> vector<8x32xf32>
    %152 = arith.addf %128, %151 : vector<8x32xf32>
    %153 = vector.broadcast %55 : vector<1x32xf32> to vector<8x32xf32>
    %154 = arith.addf %152, %153 : vector<8x32xf32>
    %155 = arith.addf %1, %154 : vector<8x32xf32>
    %c0_60 = arith.constant 0 : index
    %c0_61 = arith.constant 0 : index
    %c0_62 = arith.constant 0 : index
    %156 = vector.load %arg13[%c0_60, %c0_61, %c0_62] : memref<1x8x32xf32, #tpu.memory_space<vmem>>, vector<1x8x32xf32>
    %157 = vector.shape_cast %156 : vector<1x8x32xf32> to vector<8x32xf32>
    %158 = vector.shape_cast %155 : vector<8x32xf32> to vector<1x8x32xf32>
    tpu.vector_store %arg13[%c0_60, %c0_61, %c0_62], %158 {strides = array<i32>} : memref<1x8x32xf32, #tpu.memory_space<vmem>>, vector<1x8x32xf32>,
    return
  }
  func.func @transform_0(%arg0: i32) -> (i32, i32, i32) {
    %c0_i32 = arith.constant 0 : i32
    %c0_i32_0 = arith.constant 0 : i32
    %c0_i32_1 = arith.constant 0 : i32
    return %arg0, %c0_i32, %c0_i32_0 : i32, i32, i32
  }
  func.func @transform_1(%arg0: i32) -> (i32, i32, i32) {
    %c0_i32 = arith.constant 0 : i32
    %c0_i32_0 = arith.constant 0 : i32
    %c0_i32_1 = arith.constant 0 : i32
    return %arg0, %c0_i32, %c0_i32_0 : i32, i32, i32
  }
  func.func @transform_2(%arg0: i32) -> (i32, i32, i32) {
    %c0_i32 = arith.constant 0 : i32
    %c0_i32_0 = arith.constant 0 : i32
    %c0_i32_1 = arith.constant 0 : i32
    return %arg0, %c0_i32, %c0_i32_0 : i32, i32, i32
  }
  func.func @transform_3(%arg0: i32) -> (i32, i32, i32) {
    %c0_i32 = arith.constant 0 : i32
    %c0_i32_0 = arith.constant 0 : i32
    %c0_i32_1 = arith.constant 0 : i32
    return %arg0, %c0_i32, %c0_i32_0 : i32, i32, i32
  }
  func.func @transform_4(%arg0: i32) -> (i32, i32) {
    %c0_i32 = arith.constant 0 : i32
    %c0_i32_0 = arith.constant 0 : i32
    %c0_i32_1 = arith.constant 0 : i32
    return %c0_i32, %c0_i32_0 : i32, i32
  }
  func.func @transform_5(%arg0: i32) -> (i32, i32) {
    %c0_i32 = arith.constant 0 : i32
    %c0_i32_0 = arith.constant 0 : i32
    %c0_i32_1 = arith.constant 0 : i32
    return %c0_i32, %c0_i32_0 : i32, i32
  }
  func.func @transform_6(%arg0: i32) -> (i32, i32) {
    %c0_i32 = arith.constant 0 : i32
    %c0_i32_0 = arith.constant 0 : i32
    %c0_i32_1 = arith.constant 0 : i32
    return %c0_i32, %c0_i32_0 : i32, i32
  }
  func.func @transform_7(%arg0: i32) -> (i32, i32) {
    %c0_i32 = arith.constant 0 : i32
    %c0_i32_0 = arith.constant 0 : i32
    %c0_i32_1 = arith.constant 0 : i32
    return %c0_i32, %c0_i32_0 : i32, i32
  }
  func.func @transform_8(%arg0: i32) -> (i32, i32) {
    %c0_i32 = arith.constant 0 : i32
    %c0_i32_0 = arith.constant 0 : i32
    %c0_i32_1 = arith.constant 0 : i32
    return %c0_i32, %c0_i32_0 : i32, i32
  }
  func.func @transform_9(%arg0: i32) -> (i32, i32) {
    %c0_i32 = arith.constant 0 : i32
    %c0_i32_0 = arith.constant 0 : i32
    %c0_i32_1 = arith.constant 0 : i32
    return %c0_i32, %c0_i32_0 : i32, i32
  }
  func.func @transform_10(%arg0: i32) -> (i32, i32) {
    %c0_i32 = arith.constant 0 : i32
    %c0_i32_0 = arith.constant 0 : i32
    %c0_i32_1 = arith.constant 0 : i32
    return %c0_i32, %c0_i32_0 : i32, i32
  }
  func.func @transform_11(%arg0: i32) -> (i32, i32) {
    %c0_i32 = arith.constant 0 : i32
    %c0_i32_0 = arith.constant 0 : i32
    %c0_i32_1 = arith.constant 0 : i32
    return %c0_i32, %c0_i32_0 : i32, i32
  }
  func.func @transform_12(%arg0: i32) -> (i32, i32, i32) {
    %c0_i32 = arith.constant 0 : i32
    %c0_i32_0 = arith.constant 0 : i32
    %c0_i32_1 = arith.constant 0 : i32
    return %arg0, %c0_i32, %c0_i32_0 : i32, i32, i32
  }
}

module attributes {stable_mosaic.version = 11 : i64} {
  func.func @_ffn_kernel(%arg0: i32, %arg1: memref<16x32xf32, #tpu.memory_space<vmem>>, %arg2: memref<1x32xf32, #tpu.memory_space<vmem>>, %arg3: memref<1x32xf32, #tpu.memory_space<vmem>>, %arg4: memref<32x64xbf16, #tpu.memory_space<vmem>>, %arg5: memref<1x64xf32, #tpu.memory_space<vmem>>, %arg6: memref<64x32xbf16, #tpu.memory_space<vmem>>, %arg7: memref<1x32xf32, #tpu.memory_space<vmem>>, %arg8: memref<16x32xf32, #tpu.memory_space<vmem>>) attributes {dimension_semantics = [#tpu.dimension_semantics<parallel>], iteration_bounds = array<i64: 1>, scalar_prefetch = 0 : i64, scratch_operands = 0 : i64, tpu.core_type = #tpu.core_type<tc>, window_params = [{transform_indices = @transform_0, window_bounds = array<i64: 16, 32>}, {pipeline_mode = #tpu.pipeline_mode<synchronous>, transform_indices = @transform_1, window_bounds = array<i64: 1, 32>}, {pipeline_mode = #tpu.pipeline_mode<synchronous>, transform_indices = @transform_2, window_bounds = array<i64: 1, 32>}, {pipeline_mode = #tpu.pipeline_mode<synchronous>, transform_indices = @transform_3, window_bounds = array<i64: 32, 64>}, {pipeline_mode = #tpu.pipeline_mode<synchronous>, transform_indices = @transform_4, window_bounds = array<i64: 1, 64>}, {pipeline_mode = #tpu.pipeline_mode<synchronous>, transform_indices = @transform_5, window_bounds = array<i64: 64, 32>}, {pipeline_mode = #tpu.pipeline_mode<synchronous>, transform_indices = @transform_6, window_bounds = array<i64: 1, 32>}, {transform_indices = @transform_7, window_bounds = array<i64: 16, 32>}]} {
    %c0 = arith.constant 0 : index
    %c0_0 = arith.constant 0 : index
    %0 = vector.load %arg1[%c0, %c0_0] : memref<16x32xf32, #tpu.memory_space<vmem>>, vector<16x32xf32>
    %c0_1 = arith.constant 0 : index
    %c0_2 = arith.constant 0 : index
    %1 = vector.load %arg2[%c0_1, %c0_2] : memref<1x32xf32, #tpu.memory_space<vmem>>, vector<1x32xf32>
    %c0_3 = arith.constant 0 : index
    %c0_4 = arith.constant 0 : index
    %2 = vector.load %arg3[%c0_3, %c0_4] : memref<1x32xf32, #tpu.memory_space<vmem>>, vector<1x32xf32>
    %cst = arith.constant dense<0.000000e+00> : vector<16xf32>
    %3 = vector.multi_reduction <add>, %0, %cst [1] : vector<16x32xf32> to vector<16xf32>
    %4 = vector.shape_cast %3 : vector<16xf32> to vector<16x1xf32>
    %cst_5 = arith.constant 3.200000e+01 : f32
    %5 = vector.broadcast %cst_5 : f32 to vector<16x1xf32>
    %6 = arith.divf %4, %5 : vector<16x1xf32>
    %7 = vector.broadcast %6 : vector<16x1xf32> to vector<16x32xf32>
    %8 = arith.subf %0, %7 : vector<16x32xf32>
    %9 = arith.mulf %8, %8 : vector<16x32xf32>
    %cst_6 = arith.constant dense<0.000000e+00> : vector<16xf32>
    %10 = vector.multi_reduction <add>, %9, %cst_6 [1] : vector<16x32xf32> to vector<16xf32>
    %11 = vector.shape_cast %10 : vector<16xf32> to vector<16x1xf32>
    %cst_7 = arith.constant 3.200000e+01 : f32
    %12 = vector.broadcast %cst_7 : f32 to vector<16x1xf32>
    %13 = arith.divf %11, %12 : vector<16x1xf32>
    %14 = vector.broadcast %6 : vector<16x1xf32> to vector<16x32xf32>
    %15 = arith.subf %0, %14 : vector<16x32xf32>
    %cst_8 = arith.constant 9.99999974E-6 : f32
    %16 = vector.broadcast %cst_8 : f32 to vector<16x1xf32>
    %17 = arith.addf %13, %16 : vector<16x1xf32>
    %18 = math.rsqrt %17 : vector<16x1xf32>
    %19 = vector.broadcast %18 : vector<16x1xf32> to vector<16x32xf32>
    %20 = arith.mulf %15, %19 : vector<16x32xf32>
    %21 = vector.broadcast %1 : vector<1x32xf32> to vector<16x32xf32>
    %22 = arith.mulf %20, %21 : vector<16x32xf32>
    %23 = vector.broadcast %2 : vector<1x32xf32> to vector<16x32xf32>
    %24 = arith.addf %22, %23 : vector<16x32xf32>
    %25 = arith.truncf %24 : vector<16x32xf32> to vector<16x32xbf16>
    %c0_9 = arith.constant 0 : index
    %c0_10 = arith.constant 0 : index
    %26 = vector.load %arg4[%c0_9, %c0_10] : memref<32x64xbf16, #tpu.memory_space<vmem>>, vector<32x64xbf16>
    %cst_11 = arith.constant dense<0.000000e+00> : vector<16x64xf32>
    %27 = tpu.matmul %25, %26, %cst_11 {dimension_numbers = #tpu.dot_dimension_numbers<[1], [0], [0], [1], [0, 0, 1, 1], [], []>} : vector<16x32xbf16>, vector<32x64xbf16>, vector<16x64xf32> -> vector<16x64xf32>
    %c0_12 = arith.constant 0 : index
    %c0_13 = arith.constant 0 : index
    %28 = vector.load %arg5[%c0_12, %c0_13] : memref<1x64xf32, #tpu.memory_space<vmem>>, vector<1x64xf32>
    %29 = vector.broadcast %28 : vector<1x64xf32> to vector<16x64xf32>
    %30 = arith.addf %27, %29 : vector<16x64xf32>
    %cst_14 = arith.constant 0.000000e+00 : f32
    %31 = vector.broadcast %cst_14 : f32 to vector<16x64xf32>
    %32 = arith.maximumf %30, %31 : vector<16x64xf32>
    %33 = arith.truncf %32 : vector<16x64xf32> to vector<16x64xbf16>
    %c0_15 = arith.constant 0 : index
    %c0_16 = arith.constant 0 : index
    %34 = vector.load %arg6[%c0_15, %c0_16] : memref<64x32xbf16, #tpu.memory_space<vmem>>, vector<64x32xbf16>
    %cst_17 = arith.constant dense<0.000000e+00> : vector<16x32xf32>
    %35 = tpu.matmul %33, %34, %cst_17 {dimension_numbers = #tpu.dot_dimension_numbers<[1], [0], [0], [1], [0, 0, 1, 1], [], []>} : vector<16x64xbf16>, vector<64x32xbf16>, vector<16x32xf32> -> vector<16x32xf32>
    %c0_18 = arith.constant 0 : index
    %c0_19 = arith.constant 0 : index
    %36 = vector.load %arg7[%c0_18, %c0_19] : memref<1x32xf32, #tpu.memory_space<vmem>>, vector<1x32xf32>
    %37 = vector.broadcast %36 : vector<1x32xf32> to vector<16x32xf32>
    %38 = arith.addf %35, %37 : vector<16x32xf32>
    %39 = arith.addf %0, %38 : vector<16x32xf32>
    %c0_20 = arith.constant 0 : index
    %c0_21 = arith.constant 0 : index
    %40 = vector.load %arg8[%c0_20, %c0_21] : memref<16x32xf32, #tpu.memory_space<vmem>>, vector<16x32xf32>
    tpu.vector_store %arg8[%c0_20, %c0_21], %39 {strides = array<i32>} : memref<16x32xf32, #tpu.memory_space<vmem>>, vector<16x32xf32>,
    return
  }
  func.func @transform_0(%arg0: i32) -> (i32, i32) {
    %c0_i32 = arith.constant 0 : i32
    %c0_i32_0 = arith.constant 0 : i32
    return %arg0, %c0_i32 : i32, i32
  }
  func.func @transform_1(%arg0: i32) -> (i32, i32) {
    %c0_i32 = arith.constant 0 : i32
    %c0_i32_0 = arith.constant 0 : i32
    %c0_i32_1 = arith.constant 0 : i32
    return %c0_i32, %c0_i32_0 : i32, i32
  }
  func.func @transform_2(%arg0: i32) -> (i32, i32) {
    %c0_i32 = arith.constant 0 : i32
    %c0_i32_0 = arith.constant 0 : i32
    %c0_i32_1 = arith.constant 0 : i32
    return %c0_i32, %c0_i32_0 : i32, i32
  }
  func.func @transform_3(%arg0: i32) -> (i32, i32) {
    %c0_i32 = arith.constant 0 : i32
    %c0_i32_0 = arith.constant 0 : i32
    %c0_i32_1 = arith.constant 0 : i32
    return %c0_i32, %c0_i32_0 : i32, i32
  }
  func.func @transform_4(%arg0: i32) -> (i32, i32) {
    %c0_i32 = arith.constant 0 : i32
    %c0_i32_0 = arith.constant 0 : i32
    %c0_i32_1 = arith.constant 0 : i32
    return %c0_i32, %c0_i32_0 : i32, i32
  }
  func.func @transform_5(%arg0: i32) -> (i32, i32) {
    %c0_i32 = arith.constant 0 : i32
    %c0_i32_0 = arith.constant 0 : i32
    %c0_i32_1 = arith.constant 0 : i32
    return %c0_i32, %c0_i32_0 : i32, i32
  }
  func.func @transform_6(%arg0: i32) -> (i32, i32) {
    %c0_i32 = arith.constant 0 : i32
    %c0_i32_0 = arith.constant 0 : i32
    %c0_i32_1 = arith.constant 0 : i32
    return %c0_i32, %c0_i32_0 : i32, i32
  }
  func.func @transform_7(%arg0: i32) -> (i32, i32) {
    %c0_i32 = arith.constant 0 : i32
    %c0_i32_0 = arith.constant 0 : i32
    return %arg0, %c0_i32 : i32, i32
  }
}

</mosaic_0001>

<llo_original>
// kernel: decoder_forward.8
$region0: #{decoder_forward.8}
  #allocation0 [shape = 'u32[]', space=smem, size = 0x4, offset = 0x4, fixed_abs, tag = 'smem constant byte address 0x4 - core index']
  #allocation1 [shape = 'u32[72,128]{1,0:T(1,128)}', space=vmem, size = 0x9000, scoped, tag = 'internal scratch']
  %s0 = inlined_call_operand.vmem [shape: f32[16,32], index: 0, kind: input, shape index: {}]
  %s1 = inlined_call_operand.vmem [shape: f32[1,32], index: 1, kind: input, shape index: {}]
  %s2 = inlined_call_operand.vmem [shape: f32[1,32], index: 2, kind: input, shape index: {}]
  %s3 = inlined_call_operand.vmem [shape: bf16[32,64], index: 3, kind: input, shape index: {}]
  %s4 = inlined_call_operand.vmem [shape: f32[1,64], index: 4, kind: input, shape index: {}]
  %s5 = inlined_call_operand.vmem [shape: bf16[64,32], index: 5, kind: input, shape index: {}]
  %s6 = inlined_call_operand.vmem [shape: f32[1,32], index: 6, kind: input, shape index: {}]
  %s7 = inlined_call_operand.vmem [shape: f32[16,32], index: 7, kind: output, shape index: {}]
  %s8 = sld [smem:[#allocation0]]
  $region38: #{decoder_forward.8} parent=0
    _
  %s10 = ssub.s32 1, %s8
  %s11 = scalar_select 0, %s10, %s8
  // Predicated region
  $region2: #{decoder_forward.8} parent=0 // pred_check
    _
  $region3: #{decoder_forward.8} parent=0 // pred_check_branch
    %13 = sbr.rel (0) target = $region5
  $region4: #{decoder_forward.8} parent=0 // pred_region
    _
  $region5: #{decoder_forward.8} parent=0 // pred_fallthru
    _
  // Predicated region
  $region6: #{decoder_forward.8} parent=0 // pred_check
    _
  $region7: #{decoder_forward.8} parent=0 // pred_check_branch
    %15 = sbr.rel (0) target = $region9
  $region8: #{decoder_forward.8} parent=0 // pred_region
    _
  $region9: #{decoder_forward.8} parent=0 // pred_fallthru
    _
  // Predicated region
  $region10: #{decoder_forward.8} parent=0 // pred_check
    _
  $region11: #{decoder_forward.8} parent=0 // pred_check_branch
    %17 = sbr.rel (0) target = $region13
  $region12: #{decoder_forward.8} parent=0 // pred_region
    _
  $region13: #{decoder_forward.8} parent=0 // pred_fallthru
    _
  // Predicated region
  $region14: #{decoder_forward.8} parent=0 // pred_check
    _
  $region15: #{decoder_forward.8} parent=0 // pred_check_branch
    %19 = sbr.rel (0) target = $region17
  $region16: #{decoder_forward.8} parent=0 // pred_region
    _
  $region17: #{decoder_forward.8} parent=0 // pred_fallthru
    _
  // Predicated region
  $region18: #{decoder_forward.8} parent=0 // pred_check
    _
  $region19: #{decoder_forward.8} parent=0 // pred_check_branch
    %21 = sbr.rel (0) target = $region21
  $region20: #{decoder_forward.8} parent=0 // pred_region
    _
  $region21: #{decoder_forward.8} parent=0 // pred_fallthru
    _
  // Predicated region
  $region22: #{decoder_forward.8} parent=0 // pred_check
    _
  $region23: #{decoder_forward.8} parent=0 // pred_check_branch
    %23 = sbr.rel (0) target = $region25
  $region24: #{decoder_forward.8} parent=0 // pred_region
    _
  $region25: #{decoder_forward.8} parent=0 // pred_fallthru
    _
  // Predicated region
  $region26: #{decoder_forward.8} parent=0 // pred_check
    _
  $region27: #{decoder_forward.8} parent=0 // pred_check_branch
    %25 = sbr.rel (0) target = $region29
  $region28: #{decoder_forward.8} parent=0 // pred_region
    _
  $region29: #{decoder_forward.8} parent=0 // pred_fallthru
    _
  %v27 = vld [vmem:[%s0] sm:$0xff]
  %v28 = vld [vmem:[%s0 + $0x8] sm:$0xff]
  %v29 = vld [vmem:[%s1] sm:$0x1]
  %v30 = vld [vmem:[%s2] sm:$0x1]
  %vm31 = vcmask 261120
  %v32 = vsel %vm31, %v27, 0.0
  %33 = vadd.xlane.f32.xlu0 %v32
  %v34 = vpop.xlane.xlu0 %33
  %v35 = vsel %vm31, %v28, 0.0
  %36 = vadd.xlane.f32.xlu0 %v35
  %v37 = vpop.xlane.xlu0 %36
  %v38 = vrcp.pop 32.0
  %v39 = vmul.f32 32.0, %v38
  %v40 = vsub.f32 1.0, %v39
  %v41 = vmul.f32 %v38, %v40
  %v42 = vadd.f32 %v38, %v41
  %vm43 = vweird.f32 %v38
  %v44 = vsel %vm43, %v38, %v42
  %v45 = vmul.f32 %v34, %v44
  %v46 = vmul.f32 %v37, %v44
  %v47 = vsub.f32 %v27, %v45
  %v48 = vsub.f32 %v28, %v46
  %v49 = vmul.f32 %v47, %v47
  %v50 = vmul.f32 %v48, %v48
  %v51 = vsel %vm31, %v49, 0.0
  %52 = vadd.xlane.f32.xlu0 %v51
  %v53 = vpop.xlane.xlu0 %52
  %v54 = vsel %vm31, %v50, 0.0
  %55 = vadd.xlane.f32.xlu0 %v54
  %v56 = vpop.xlane.xlu0 %55
  %v57 = vmul.f32 %v53, %v44
  %v58 = vmul.f32 %v56, %v44
  %v59 = vadd.f32 %v57, 1e-05
  %v60 = vadd.f32 %v58, 1e-05
  %v61 = vrsqrt.pop %v59
  %v62 = vmul.f32 %v61, %v59
  %v63 = vmul.f32 %v62, %v61
  %v64 = vmul.f32 0.5, %v63
  %v65 = vsub.f32 1.5, %v64
  %v66 = vmul.f32 %v61, %v65
  %vm67 = vweird.f32 %v59
  %vm68 = vweird.f32 %v61
  %vm69 = vmor %vm67, %vm68
  %v70 = vsel %vm69, %v61, %v66
  %v71 = vrsqrt.pop %v60
  %v72 = vmul.f32 %v71, %v60
  %v73 = vmul.f32 %v72, %v71
  %v74 = vmul.f32 0.5, %v73
  %v75 = vsub.f32 1.5, %v74
  %v76 = vmul.f32 %v71, %v75
  %vm77 = vweird.f32 %v60
  %vm78 = vweird.f32 %v71
  %vm79 = vmor %vm77, %vm78
  %v80 = vsel %vm79, %v71, %v76
  %v81 = vmul.f32 %v47, %v70
  %v82 = vmul.f32 %v48, %v80
  %v84 = vperm.slane %v29, 0
  %v86 = vmul.f32 %v81, %v84
  %v87 = vmul.f32 %v82, %v84
  %v89 = vperm.slane %v30, 0
  %v91 = vadd.f32 %v86, %v89
  %v92 = vadd.f32 %v87, %v89
  %v93 = vpack.c.bf16 %v92, %v91
  %v94 = vld [vmem:[%s3] sm:$0xf]
  %v95 = vld [vmem:[%s3 + $0x4] sm:$0xf]
  %v96 = vld [vmem:[%s3 + $0x8] sm:$0xf]
  %v97 = vld [vmem:[%s3 + $0xc] sm:$0xf]
  %v98 = vld [vmem:[%s4] sm:$0x1]
  %v100 = vperm.slane %v98, 0
  %v106 = vunpack.c.l.b16 %v94
  %v107 = vunpack.c.l.b16 %v95
  %v108 = vunpack.c.l.b16 %v96
  %v109 = vunpack.c.l.b16 %v97
  %v110 = vpack.c.b16 %v107, %v106
  %v111 = vpack.c.b16 %v109, %v108
  %v115 = vsel %vm31, %v93, 0
  %117 = vmatpush.bf16.msra.mxu0 0
  %118 = vmatpush.bf16.msra.mxu0 0
  %119 = vmatpush.bf16.msra.mxu0 0
  %120 = vmatpush.bf16.msra.mxu0 0
  %121 = vmatpush.bf16.msra.mxu0 0
  %122 = vmatpush.bf16.msra.mxu0 0
  %123 = vmatpush.bf16.msra.mxu0 %v111
  %124 = vmatpush.bf16.msra.mxu0 %v110
  %125 = vmatmul.bf16.gmra.mxu0 %v115
  %v126 = vpop.f32.mrf.mxu0
  %v127 = vadd.f32 %v100, %v126
  %v128 = vpop.f32.mrf.mxu0
  %v129 = vadd.f32 %v100, %v128
  %130 = vdwg.mxu0
  %v131 = vmax.f32 %v127, 0.0
  %v132 = vmax.f32 %v129, 0.0
  %v133 = vpack.c.bf16 %v132, %v131
  %v134 = vld [vmem:[%s5] sm:$0xf]
  %v135 = vld [vmem:[%s5 + $0x4] sm:$0xf]
  %v136 = vld [vmem:[%s5 + $0x8] sm:$0xf]
  %v137 = vld [vmem:[%s5 + $0xc] sm:$0xf]
  %v138 = vld [vmem:[%s5 + $0x10] sm:$0xf]
  %v139 = vld [vmem:[%s5 + $0x14] sm:$0xf]
  %v140 = vld [vmem:[%s5 + $0x18] sm:$0xf]
  %v141 = vld [vmem:[%s5 + $0x1c] sm:$0xf]
  %v142 = vld [vmem:[%s6] sm:$0x1]
  %v144 = vperm.slane %v142, 0
  %v154 = vunpack.c.l.b16 %v134
  %v155 = vunpack.c.l.b16 %v135
  %v156 = vunpack.c.l.b16 %v136
  %v157 = vunpack.c.l.b16 %v137
  %v158 = vunpack.c.l.b16 %v138
  %v159 = vunpack.c.l.b16 %v139
  %v160 = vunpack.c.l.b16 %v140
  %v161 = vunpack.c.l.b16 %v141
  %v162 = vpack.c.b16 %v155, %v154
  %v163 = vpack.c.b16 %v157, %v156
  %v164 = vpack.c.b16 %v159, %v158
  %v165 = vpack.c.b16 %v161, %v160
  %vm170 = vcmask 523264
  %v172 = vsel %vm170, %v133, 0
  %174 = vmatpush.bf16.msra.mxu0 0
  %175 = vmatpush.bf16.msra.mxu0 0
  %176 = vmatpush.bf16.msra.mxu0 0
  %177 = vmatpush.bf16.msra.mxu0 0
  %178 = vmatpush.bf16.msra.mxu0 %v165
  %179 = vmatpush.bf16.msra.mxu0 %v164
  %180 = vmatpush.bf16.msra.mxu0 %v163
  %181 = vmatpush.bf16.msra.mxu0 %v162
  %182 = vmatmul.bf16.gmra.mxu0 %v172
  %v183 = vpop.f32.mrf.mxu0
  %v184 = vadd.f32 %v144, %v183
  %v185 = vpop.f32.mrf.mxu0
  %v186 = vadd.f32 %v144, %v185
  %187 = vdwg.mxu0
  %v188 = vadd.f32 %v27, %v184
  %v189 = vadd.f32 %v28, %v186
  %190 = vst.msk [vmem:[%s7] sm:$0xff] %vm31, %v188
  %191 = vst.msk [vmem:[%s7 + $0x8] sm:$0xff] %vm31, %v189
  // Predicated region
  $region30: #{decoder_forward.8} parent=0 // pred_check
    _
  $region31: #{decoder_forward.8} parent=0 // pred_check_branch
    %193 = sbr.rel (0) target = $region33
  $region32: #{decoder_forward.8} parent=0 // pred_region
    _
  $region33: #{decoder_forward.8} parent=0 // pred_fallthru
    _
  // Predicated region
  $region34: #{decoder_forward.8} parent=0 // pred_check
    _
  $region35: #{decoder_forward.8} parent=0 // pred_check_branch
    %195 = sbr.rel (0) target = $region37
  $region36: #{decoder_forward.8} parent=0 // pred_region
    _
  $region37: #{decoder_forward.8} parent=0 // pred_fallthru
    _

// kernel: decoder_forward.7
$region0: #{decoder_forward.7}
  #allocation0 [shape = 'u32[]', space=smem, size = 0x4, offset = 0x4, fixed_abs, tag = 'smem constant byte address 0x4 - core index']
  #allocation1 [shape = 'u32[72,128]{1,0:T(1,128)}', space=vmem, size = 0x9000, scoped, tag = 'internal scratch']
  %s0 = inlined_call_operand.vmem [shape: f32[2,8,32], index: 0, kind: input, shape index: {}]
  %s1 = inlined_call_operand.vmem [shape: f32[2,8,32], index: 1, kind: input, shape index: {}]
  %s2 = inlined_call_operand.vmem [shape: f32[2,8,1], index: 2, kind: input, shape index: {}]
  %s3 = inlined_call_operand.vmem [shape: f32[2,1,8], index: 3, kind: input, shape index: {}]
  %s4 = inlined_call_operand.vmem [shape: f32[1,32], index: 4, kind: input, shape index: {}]
  %s5 = inlined_call_operand.vmem [shape: f32[1,32], index: 5, kind: input, shape index: {}]
  %s6 = inlined_call_operand.vmem [shape: bf16[32,32], index: 6, kind: input, shape index: {}]
  %s7 = inlined_call_operand.vmem [shape: f32[1,32], index: 7, kind: input, shape index: {}]
  %s8 = inlined_call_operand.vmem [shape: bf16[32,64], index: 8, kind: input, shape index: {}]
  %s9 = inlined_call_operand.vmem [shape: f32[1,64], index: 9, kind: input, shape index: {}]
  %s10 = inlined_call_operand.vmem [shape: bf16[32,32], index: 10, kind: input, shape index: {}]
  %s11 = inlined_call_operand.vmem [shape: f32[1,32], index: 11, kind: input, shape index: {}]
  %s12 = inlined_call_operand.vmem [shape: f32[2,8,32], index: 12, kind: output, shape index: {}]
  %s13 = sld [smem:[#allocation0]]
  $region81: #{decoder_forward.7} parent=0
    _
  %s15 = ssub.s32 1, %s13
  %s16 = scalar_select 0, %s15, %s13
  loop: start=0, step=1, limit=4
  $region2: #{decoder_forward.7} parent=0 // loop_pre_header
    _
  $region3: #{decoder_forward.7} parent=0 // loop_header
    %s18 = sphi 0, %s22
    %p19 = scmp.ge.s32.totalorder %s18, 4
    %s28 = sphi 0, %s30
    %s31 = sphi 0, %s28
    %s32 = sphi 0, %s31
    %s48 = sphi 0, %s32
    %s54 = sphi 0, %s56
    %s57 = sphi 0, %s54
    %s58 = sphi 0, %s57
    %s74 = sphi 0, %s58
    %s80 = sphi 0, %s82
    %s83 = sphi 0, %s80
    %s84 = sphi 0, %s83
    %s100 = sphi 0, %s84
    %s106 = sphi 0, %s108
    %s109 = sphi 0, %s106
    %s110 = sphi 0, %s109
    %s126 = sphi 0, %s110
    %s130 = sphi 0, %s130
    %s132 = sphi 0, %s130
    %s133 = sphi 0, %s132
    %s147 = sphi 0, %s133
    %s151 = sphi 0, %s151
    %s153 = sphi 0, %s151
    %s154 = sphi 0, %s153
    %s168 = sphi 0, %s154
    %s172 = sphi 0, %s172
    %s174 = sphi 0, %s172
    %s175 = sphi 0, %s174
    %s189 = sphi 0, %s175
    %s193 = sphi 0, %s193
    %s195 = sphi 0, %s193
    %s196 = sphi 0, %s195
    %s210 = sphi 0, %s196
    %s214 = sphi 0, %s214
    %s216 = sphi 0, %s214
    %s217 = sphi 0, %s216
    %s231 = sphi 0, %s217
    %s235 = sphi 0, %s235
    %s237 = sphi 0, %s235
    %s238 = sphi 0, %s237
    %s252 = sphi 0, %s238
    %s256 = sphi 0, %s256
    %s258 = sphi 0, %s256
    %s259 = sphi 0, %s258
    %s273 = sphi 0, %s259
    %s277 = sphi 0, %s277
    %s279 = sphi 0, %s277
    %s280 = sphi 0, %s279
    %s294 = sphi 0, %s280
    %s300 = sphi 0, %s302
    %s303 = sphi 0, %s300
    %s304 = sphi 0, %s303
    %s320 = sphi 0, %s304
  $region4: #{decoder_forward.7} parent=0 // loop_header_branch
    %21 = sbr.rel (%p19) target = $region8
  $region5: #{decoder_forward.7} parent=0 // loop_body
    %s23 = ssub.s32 %s18, 1
    %s24 = ssub.s32 %s18, 2
    %s25 = sadd.s32 %s18, 1
    %s26 = ssub.s32 %s18, %s25
    %p27 = scmp.eq.s32.totalorder %s26, 0
    %s29 = sadd.s32 %s28, 1
    %s30 = scalar_select %p27, %s28, %s29
    %p33 = pneg %p27
    %p34 = scmp.eq.s32.totalorder %s18, 1
    %p35 = por %p33, %p34
    %p36 = scmp.ne.s32.totalorder %s28, %s31
    %p37 = scmp.eq.s32.totalorder %s18, 0
    %p38 = por %p36, %p37
    %p39 = scmp.ne.s32.totalorder %s28, %s31
    %p40 = scmp.eq.s32.totalorder %s23, 1
    %p41 = por %p39, %p40
    %p42 = scmp.ne.s32.totalorder %s31, %s32
    %p43 = scmp.eq.s32.totalorder %s23, 0
    %p44 = por %p42, %p43
    %p45 = scmp.ne.s32.totalorder %s31, %s32
    %p46 = scmp.eq.s32.totalorder %s24, 1
    %p47 = por %p45, %p46
    %p49 = scmp.ne.s32.totalorder %s32, %s48
    %p50 = scmp.eq.s32.totalorder %s24, 0
    %p51 = por %p49, %p50
    %s52 = ssub.s32 %s18, %s25
    %p53 = scmp.eq.s32.totalorder %s52, 0
    %s55 = sadd.s32 %s54, 1
    %s56 = scalar_select %p53, %s54, %s55
    %p59 = pneg %p53
    %p60 = scmp.eq.s32.totalorder %s18, 1
    %p61 = por %p59, %p60
    %p62 = scmp.ne.s32.totalorder %s54, %s57
    %p63 = scmp.eq.s32.totalorder %s18, 0
    %p64 = por %p62, %p63
    %p65 = scmp.ne.s32.totalorder %s54, %s57
    %p66 = scmp.eq.s32.totalorder %s23, 1
    %p67 = por %p65, %p66
    %p68 = scmp.ne.s32.totalorder %s57, %s58
    %p69 = scmp.eq.s32.totalorder %s23, 0
    %p70 = por %p68, %p69
    %p71 = scmp.ne.s32.totalorder %s57, %s58
    %p72 = scmp.eq.s32.totalorder %s24, 1
    %p73 = por %p71, %p72
    %p75 = scmp.ne.s32.totalorder %s58, %s74
    %p76 = scmp.eq.s32.totalorder %s24, 0
    %p77 = por %p75, %p76
    %s78 = ssub.s32 %s18, %s25
    %p79 = scmp.eq.s32.totalorder %s78, 0
    %s81 = sadd.s32 %s80, 1
    %s82 = scalar_select %p79, %s80, %s81
    %p85 = pneg %p79
    %p86 = scmp.eq.s32.totalorder %s18, 1
    %p87 = por %p85, %p86
    %p88 = scmp.ne.s32.totalorder %s80, %s83
    %p89 = scmp.eq.s32.totalorder %s18, 0
    %p90 = por %p88, %p89
    %p91 = scmp.ne.s32.totalorder %s80, %s83
    %p92 = scmp.eq.s32.totalorder %s23, 1
    %p93 = por %p91, %p92
    %p94 = scmp.ne.s32.totalorder %s83, %s84
    %p95 = scmp.eq.s32.totalorder %s23, 0
    %p96 = por %p94, %p95
    %p97 = scmp.ne.s32.totalorder %s83, %s84
    %p98 = scmp.eq.s32.totalorder %s24, 1
    %p99 = por %p97, %p98
    %p101 = scmp.ne.s32.totalorder %s84, %s100
    %p102 = scmp.eq.s32.totalorder %s24, 0
    %p103 = por %p101, %p102
    %s104 = ssub.s32 %s18, %s25
    %p105 = scmp.eq.s32.totalorder %s104, 0
    %s107 = sadd.s32 %s106, 1
    %s108 = scalar_select %p105, %s106, %s107
    %p111 = pneg %p105
    %p112 = scmp.eq.s32.totalorder %s18, 1
    %p113 = por %p111, %p112
    %p114 = scmp.ne.s32.totalorder %s106, %s109
    %p115 = scmp.eq.s32.totalorder %s18, 0
    %p116 = por %p114, %p115
    %p117 = scmp.ne.s32.totalorder %s106, %s109
    %p118 = scmp.eq.s32.totalorder %s23, 1
    %p119 = por %p117, %p118
    %p120 = scmp.ne.s32.totalorder %s109, %s110
    %p121 = scmp.eq.s32.totalorder %s23, 0
    %p122 = por %p120, %p121
    %p123 = scmp.ne.s32.totalorder %s109, %s110
    %p124 = scmp.eq.s32.totalorder %s24, 1
    %p125 = por %p123, %p124
    %p127 = scmp.ne.s32.totalorder %s110, %s126
    %p128 = scmp.eq.s32.totalorder %s24, 0
    %p129 = por %p127, %p128
    %s131 = sadd.s32 %s130, 1
    %p134 = scmp.eq.s32.totalorder %s18, 1
    %p135 = scmp.ne.s32.totalorder %s130, %s132
    %p136 = scmp.eq.s32.totalorder %s18, 0
    %p137 = por %p135, %p136
    %p138 = scmp.ne.s32.totalorder %s130, %s132
    %p139 = scmp.eq.s32.totalorder %s23, 1
    %p140 = por %p138, %p139
    %p141 = scmp.ne.s32.totalorder %s132, %s133
    %p142 = scmp.eq.s32.totalorder %s23, 0
    %p143 = por %p141, %p142
    %p144 = scmp.ne.s32.totalorder %s132, %s133
    %p145 = scmp.eq.s32.totalorder %s24, 1
    %p146 = por %p144, %p145
    %p148 = scmp.ne.s32.totalorder %s133, %s147
    %p149 = scmp.eq.s32.totalorder %s24, 0
    %p150 = por %p148, %p149
    %s152 = sadd.s32 %s151, 1
    %p155 = scmp.eq.s32.totalorder %s18, 1
    %p156 = scmp.ne.s32.totalorder %s151, %s153
    %p157 = scmp.eq.s32.totalorder %s18, 0
    %p158 = por %p156, %p157
    %p159 = scmp.ne.s32.totalorder %s151, %s153
    %p160 = scmp.eq.s32.totalorder %s23, 1
    %p161 = por %p159, %p160
    %p162 = scmp.ne.s32.totalorder %s153, %s154
    %p163 = scmp.eq.s32.totalorder %s23, 0
    %p164 = por %p162, %p163
    %p165 = scmp.ne.s32.totalorder %s153, %s154
    %p166 = scmp.eq.s32.totalorder %s24, 1
    %p167 = por %p165, %p166
    %p169 = scmp.ne.s32.totalorder %s154, %s168
    %p170 = scmp.eq.s32.totalorder %s24, 0
    %p171 = por %p169, %p170
    %s173 = sadd.s32 %s172, 1
    %p176 = scmp.eq.s32.totalorder %s18, 1
    %p177 = scmp.ne.s32.totalorder %s172, %s174
    %p178 = scmp.eq.s32.totalorder %s18, 0
    %p179 = por %p177, %p178
    %p180 = scmp.ne.s32.totalorder %s172, %s174
    %p181 = scmp.eq.s32.totalorder %s23, 1
    %p182 = por %p180, %p181
    %p183 = scmp.ne.s32.totalorder %s174, %s175
    %p184 = scmp.eq.s32.totalorder %s23, 0
    %p185 = por %p183, %p184
    %p186 = scmp.ne.s32.totalorder %s174, %s175
    %p187 = scmp.eq.s32.totalorder %s24, 1
    %p188 = por %p186, %p187
    %p190 = scmp.ne.s32.totalorder %s175, %s189
    %p191 = scmp.eq.s32.totalorder %s24, 0
    %p192 = por %p190, %p191
    %s194 = sadd.s32 %s193, 1
    %p197 = scmp.eq.s32.totalorder %s18, 1
    %p198 = scmp.ne.s32.totalorder %s193, %s195
    %p199 = scmp.eq.s32.totalorder %s18, 0
    %p200 = por %p198, %p199
    %p201 = scmp.ne.s32.totalorder %s193, %s195
    %p202 = scmp.eq.s32.totalorder %s23, 1
    %p203 = por %p201, %p202
    %p204 = scmp.ne.s32.totalorder %s195, %s196
    %p205 = scmp.eq.s32.totalorder %s23, 0
    %p206 = por %p204, %p205
    %p207 = scmp.ne.s32.totalorder %s195, %s196
    %p208 = scmp.eq.s32.totalorder %s24, 1
    %p209 = por %p207, %p208
    %p211 = scmp.ne.s32.totalorder %s196, %s210
    %p212 = scmp.eq.s32.totalorder %s24, 0
    %p213 = por %p211, %p212
    %s215 = sadd.s32 %s214, 1
    %p218 = scmp.eq.s32.totalorder %s18, 1
    %p219 = scmp.ne.s32.totalorder %s214, %s216
    %p220 = scmp.eq.s32.totalorder %s18, 0
    %p221 = por %p219, %p220
    %p222 = scmp.ne.s32.totalorder %s214, %s216
    %p223 = scmp.eq.s32.totalorder %s23, 1
    %p224 = por %p222, %p223
    %p225 = scmp.ne.s32.totalorder %s216, %s217
    %p226 = scmp.eq.s32.totalorder %s23, 0
    %p227 = por %p225, %p226
    %p228 = scmp.ne.s32.totalorder %s216, %s217
    %p229 = scmp.eq.s32.totalorder %s24, 1
    %p230 = por %p228, %p229
    %p232 = scmp.ne.s32.totalorder %s217, %s231
    %p233 = scmp.eq.s32.totalorder %s24, 0
    %p234 = por %p232, %p233
    %s236 = sadd.s32 %s235, 1
    %p239 = scmp.eq.s32.totalorder %s18, 1
    %p240 = scmp.ne.s32.totalorder %s235, %s237
    %p241 = scmp.eq.s32.totalorder %s18, 0
    %p242 = por %p240, %p241
    %p243 = scmp.ne.s32.totalorder %s235, %s237
    %p244 = scmp.eq.s32.totalorder %s23, 1
    %p245 = por %p243, %p244
    %p246 = scmp.ne.s32.totalorder %s237, %s238
    %p247 = scmp.eq.s32.totalorder %s23, 0
    %p248 = por %p246, %p247
    %p249 = scmp.ne.s32.totalorder %s237, %s238
    %p250 = scmp.eq.s32.totalorder %s24, 1
    %p251 = por %p249, %p250
    %p253 = scmp.ne.s32.totalorder %s238, %s252
    %p254 = scmp.eq.s32.totalorder %s24, 0
    %p255 = por %p253, %p254
    %s257 = sadd.s32 %s256, 1
    %p260 = scmp.eq.s32.totalorder %s18, 1
    %p261 = scmp.ne.s32.totalorder %s256, %s258
    %p262 = scmp.eq.s32.totalorder %s18, 0
    %p263 = por %p261, %p262
    %p264 = scmp.ne.s32.totalorder %s256, %s258
    %p265 = scmp.eq.s32.totalorder %s23, 1
    %p266 = por %p264, %p265
    %p267 = scmp.ne.s32.totalorder %s258, %s259
    %p268 = scmp.eq.s32.totalorder %s23, 0
    %p269 = por %p267, %p268
    %p270 = scmp.ne.s32.totalorder %s258, %s259
    %p271 = scmp.eq.s32.totalorder %s24, 1
    %p272 = por %p270, %p271
    %p274 = scmp.ne.s32.totalorder %s259, %s273
    %p275 = scmp.eq.s32.totalorder %s24, 0
    %p276 = por %p274, %p275
    %s278 = sadd.s32 %s277, 1
    %p281 = scmp.eq.s32.totalorder %s18, 1
    %p282 = scmp.ne.s32.totalorder %s277, %s279
    %p283 = scmp.eq.s32.totalorder %s18, 0
    %p284 = por %p282, %p283
    %p285 = scmp.ne.s32.totalorder %s277, %s279
    %p286 = scmp.eq.s32.totalorder %s23, 1
    %p287 = por %p285, %p286
    %p288 = scmp.ne.s32.totalorder %s279, %s280
    %p289 = scmp.eq.s32.totalorder %s23, 0
    %p290 = por %p288, %p289
    %p291 = scmp.ne.s32.totalorder %s279, %s280
    %p292 = scmp.eq.s32.totalorder %s24, 1
    %p293 = por %p291, %p292
    %p295 = scmp.ne.s32.totalorder %s280, %s294
    %p296 = scmp.eq.s32.totalorder %s24, 0
    %p297 = por %p295, %p296
    %s298 = ssub.s32 %s18, %s25
    %p299 = scmp.eq.s32.totalorder %s298, 0
    %s301 = sadd.s32 %s300, 1
    %s302 = scalar_select %p299, %s300, %s301
    %p305 = pneg %p299
    %p306 = scmp.eq.s32.totalorder %s18, 1
    %p307 = por %p305, %p306
    %p308 = scmp.ne.s32.totalorder %s300, %s303
    %p309 = scmp.eq.s32.totalorder %s18, 0
    %p310 = por %p308, %p309
    %p311 = scmp.ne.s32.totalorder %s300, %s303
    %p312 = scmp.eq.s32.totalorder %s23, 1
    %p313 = por %p311, %p312
    %p314 = scmp.ne.s32.totalorder %s303, %s304
    %p315 = scmp.eq.s32.totalorder %s23, 0
    %p316 = por %p314, %p315
    %p317 = scmp.ne.s32.totalorder %s303, %s304
    %p318 = scmp.eq.s32.totalorder %s24, 1
    %p319 = por %p317, %p318
    %p321 = scmp.ne.s32.totalorder %s304, %s320
    %p322 = scmp.eq.s32.totalorder %s24, 0
    %p323 = por %p321, %p322
    %p324 = scmp.le.s32.totalorder 1, %s18
    %p325 = scmp.lt.s32.totalorder %s18, 3
    %p326 = pnand %p324, %p325
    %p327 = pneg %p326
    // Predicated region
    $region9: #{decoder_forward.7} parent=5 // pred_check
      _
    $region10: #{decoder_forward.7} parent=5 // pred_check_branch
      %329 = sbr.rel (%p326) target = $region12
    $region11: #{decoder_forward.7} parent=5 // pred_region
      %s330 = ssub.s32 %s18, 1
      // Predicated region
      $region13: #{decoder_forward.7} parent=11 // pred_check
        %p331 = pneg %p143
      $region14: #{decoder_forward.7} parent=11 // pred_check_branch
        %333 = sbr.rel (%p331) target = $region16
      $region15: #{decoder_forward.7} parent=11 // pred_region
        _
      $region16: #{decoder_forward.7} parent=11 // pred_fallthru
        _
      // Predicated region
      $region17: #{decoder_forward.7} parent=11 // pred_check
        %p334 = pneg %p164
      $region18: #{decoder_forward.7} parent=11 // pred_check_branch
        %336 = sbr.rel (%p334) target = $region20
      $region19: #{decoder_forward.7} parent=11 // pred_region
        _
      $region20: #{decoder_forward.7} parent=11 // pred_fallthru
        _
      // Predicated region
      $region21: #{decoder_forward.7} parent=11 // pred_check
        %p337 = pneg %p185
      $region22: #{decoder_forward.7} parent=11 // pred_check_branch
        %339 = sbr.rel (%p337) target = $region24
      $region23: #{decoder_forward.7} parent=11 // pred_region
        _
      $region24: #{decoder_forward.7} parent=11 // pred_fallthru
        _
      // Predicated region
      $region25: #{decoder_forward.7} parent=11 // pred_check
        %p340 = pneg %p206
      $region26: #{decoder_forward.7} parent=11 // pred_check_branch
        %342 = sbr.rel (%p340) target = $region28
      $region27: #{decoder_forward.7} parent=11 // pred_region
        _
      $region28: #{decoder_forward.7} parent=11 // pred_fallthru
        _
      // Predicated region
      $region29: #{decoder_forward.7} parent=11 // pred_check
        %p343 = pneg %p227
      $region30: #{decoder_forward.7} parent=11 // pred_check_branch
        %345 = sbr.rel (%p343) target = $region32
      $region31: #{decoder_forward.7} parent=11 // pred_region
        _
      $region32: #{decoder_forward.7} parent=11 // pred_fallthru
        _
      // Predicated region
      $region33: #{decoder_forward.7} parent=11 // pred_check
        %p346 = pneg %p248
      $region34: #{decoder_forward.7} parent=11 // pred_check_branch
        %348 = sbr.rel (%p346) target = $region36
      $region35: #{decoder_forward.7} parent=11 // pred_region
        _
      $region36: #{decoder_forward.7} parent=11 // pred_fallthru
        _
      // Predicated region
      $region37: #{decoder_forward.7} parent=11 // pred_check
        %p349 = pneg %p269
      $region38: #{decoder_forward.7} parent=11 // pred_check_branch
        %351 = sbr.rel (%p349) target = $region40
      $region39: #{decoder_forward.7} parent=11 // pred_region
        _
      $region40: #{decoder_forward.7} parent=11 // pred_fallthru
        _
      // Predicated region
      $region41: #{decoder_forward.7} parent=11 // pred_check
        %p352 = pneg %p290
      $region42: #{decoder_forward.7} parent=11 // pred_check_branch
        %354 = sbr.rel (%p352) target = $region44
      $region43: #{decoder_forward.7} parent=11 // pred_region
        _
      $region44: #{decoder_forward.7} parent=11 // pred_fallthru
        _
    $region12: #{decoder_forward.7} parent=5 // pred_fallthru
      _
    %p355 = scmp.lt.s32.totalorder %s18, 2
    // Predicated region
    $region45: #{decoder_forward.7} parent=5 // pred_check
      %p356 = pneg %p355
    $region46: #{decoder_forward.7} parent=5 // pred_check_branch
      %358 = sbr.rel (%p356) target = $region48
    $region47: #{decoder_forward.7} parent=5 // pred_region
      // Predicated region
      $region49: #{decoder_forward.7} parent=47 // pred_check
        %p359 = pneg %p38
      $region50: #{decoder_forward.7} parent=47 // pred_check_branch
        %361 = sbr.rel (%p359) target = $region52
      $region51: #{decoder_forward.7} parent=47 // pred_region
        %p362 = scmp.lt.s32.totalorder %s18, 1
        %s363 = scalar_select %p362, %s18, 1
        %s364 = smul.addr %s363, 8
        %s365 = scalar_lea.vmem %s0, %s364
      $region52: #{decoder_forward.7} parent=47 // pred_fallthru
        _
      // Predicated region
      $region53: #{decoder_forward.7} parent=47 // pred_check
        %p366 = pneg %p64
      $region54: #{decoder_forward.7} parent=47 // pred_check_branch
        %368 = sbr.rel (%p366) target = $region56
      $region55: #{decoder_forward.7} parent=47 // pred_region
        %p369 = scmp.lt.s32.totalorder %s18, 1
        %s370 = scalar_select %p369, %s18, 1
        %s371 = smul.addr %s370, 8
        %s372 = scalar_lea.vmem %s1, %s371
      $region56: #{decoder_forward.7} parent=47 // pred_fallthru
        _
      // Predicated region
      $region57: #{decoder_forward.7} parent=47 // pred_check
        %p373 = pneg %p90
      $region58: #{decoder_forward.7} parent=47 // pred_check_branch
        %375 = sbr.rel (%p373) target = $region60
      $region59: #{decoder_forward.7} parent=47 // pred_region
        %p376 = scmp.lt.s32.totalorder %s18, 1
        %s377 = scalar_select %p376, %s18, 1
        %s378 = smul.addr %s377, 8
        %s379 = scalar_lea.vmem %s2, %s378
      $region60: #{decoder_forward.7} parent=47 // pred_fallthru
        _
      // Predicated region
      $region61: #{decoder_forward.7} parent=47 // pred_check
        %p380 = pneg %p116
      $region62: #{decoder_forward.7} parent=47 // pred_check_branch
        %382 = sbr.rel (%p380) target = $region64
      $region63: #{decoder_forward.7} parent=47 // pred_region
        %p383 = scmp.lt.s32.totalorder %s18, 1
        %s384 = scalar_select %p383, %s18, 1
        %s385 = scalar_lea.vmem %s3, %s384
      $region64: #{decoder_forward.7} parent=47 // pred_fallthru
        _
    $region48: #{decoder_forward.7} parent=5 // pred_fallthru
      _
    %p386 = scmp.le.s32.totalorder 1, %s18
    %p387 = scmp.lt.s32.totalorder %s18, 3
    %p388 = pnand %p386, %p387
    %p389 = pneg %p388
    // Predicated region
    $region65: #{decoder_forward.7} parent=5 // pred_check
      _
    $region66: #{decoder_forward.7} parent=5 // pred_check_branch
      %391 = sbr.rel (%p388) target = $region68
    $region67: #{decoder_forward.7} parent=5 // pred_region
      %s392 = ssub.s32 %s18, 1
      %p393 = scmp.lt.s32.totalorder %s23, 1
      %s394 = scalar_select %p393, %s23, 1
      %s395 = smul.addr %s394, 8
      %s396 = scalar_lea.vmem %s0, %s395
      %p397 = pneg %p44
      %p398 = pneg %p41
      %p399 = scmp.lt.s32.totalorder %s23, 1
      %s400 = scalar_select %p399, %s23, 1
      %s401 = smul.addr %s400, 8
      %s402 = scalar_lea.vmem %s1, %s401
      %p403 = pneg %p70
      %p404 = pneg %p67
      %p405 = scmp.lt.s32.totalorder %s23, 1
      %s406 = scalar_select %p405, %s23, 1
      %s407 = smul.addr %s406, 8
      %s408 = scalar_lea.vmem %s2, %s407
      %p409 = pneg %p96
      %p410 = pneg %p93
      %p411 = scmp.lt.s32.totalorder %s23, 1
      %s412 = scalar_select %p411, %s23, 1
      %s413 = scalar_lea.vmem %s3, %s412
      %p414 = pneg %p122
      %p415 = pneg %p119
      %p416 = pneg %p143
      %p417 = pneg %p140
      %p418 = pneg %p164
      %p419 = pneg %p161
      %p420 = pneg %p185
      %p421 = pneg %p182
      %p422 = pneg %p206
      %p423 = pneg %p203
      %p424 = pneg %p227
      %p425 = pneg %p224
      %p426 = pneg %p248
      %p427 = pneg %p245
      %p428 = pneg %p269
      %p429 = pneg %p266
      %p430 = pneg %p290
      %p431 = pneg %p287
      %p432 = pneg %p316
      %p433 = pneg %p313
      %p434 = scmp.lt.s32.totalorder %s23, 1
      %s435 = scalar_select %p434, %s23, 1
      %s436 = smul.addr %s435, 8
      %s437 = scalar_lea.vmem %s12, %s436
      %p438 = scmp.lt.s32.totalorder %s23, 1
      %s439 = scalar_select %p438, %s23, 1
      %s440 = smul.addr %s439, 8
      %s441 = scalar_lea.vmem %s0, %s440
      %p442 = scmp.lt.s32.totalorder %s23, 1
      %s443 = scalar_select %p442, %s23, 1
      %s444 = smul.addr %s443, 8
      %s445 = scalar_lea.vmem %s1, %s444
      %p446 = scmp.lt.s32.totalorder %s23, 1
      %s447 = scalar_select %p446, %s23, 1
      %s448 = smul.addr %s447, 8
      %s449 = scalar_lea.vmem %s2, %s448
      %p450 = scmp.lt.s32.totalorder %s23, 1
      %s451 = scalar_select %p450, %s23, 1
      %s452 = scalar_lea.vmem %s3, %s451
      %p453 = scmp.lt.s32.totalorder %s23, 1
      %s454 = scalar_select %p453, %s23, 1
      %s455 = smul.addr %s454, 8
      %s456 = scalar_lea.vmem %s12, %s455
      %v458 = vld [vmem:[%s441] sm:$0xff]
      %v459 = vld [vmem:[%s4] sm:$0x1]
      %v460 = vld [vmem:[%s5] sm:$0x1]
      %vm461 = vcmask 261120
      %v462 = vsel %vm461, %v458, 0.0
      %463 = vadd.xlane.f32.xlu0 %v462
      %v464 = vpop.xlane.xlu0 %463
      %v465 = vrcp.pop 32.0
      %v466 = vmul.f32 32.0, %v465
      %v467 = vsub.f32 1.0, %v466
      %v468 = vmul.f32 %v465, %v467
      %v469 = vadd.f32 %v465, %v468
      %vm470 = vweird.f32 %v465
      %v471 = vsel %vm470, %v465, %v469
      %v472 = vmul.f32 %v464, %v471
      %v473 = vsub.f32 %v458, %v472
      %v474 = vmul.f32 %v473, %v473
      %v475 = vsel %vm461, %v474, 0.0
      %476 = vadd.xlane.f32.xlu0 %v475
      %v477 = vpop.xlane.xlu0 %476
      %v478 = vmul.f32 %v477, %v471
      %v479 = vadd.f32 %v478, 1e-05
      %v480 = vrsqrt.pop %v479
      %v481 = vmul.f32 %v480, %v479
      %v482 = vmul.f32 %v481, %v480
      %v483 = vmul.f32 0.5, %v482
      %v484 = vsub.f32 1.5, %v483
      %v485 = vmul.f32 %v480, %v484
      %vm486 = vweird.f32 %v479
      %vm487 = vweird.f32 %v480
      %vm488 = vmor %vm486, %vm487
      %v489 = vsel %vm488, %v480, %v485
      %v490 = vmul.f32 %v473, %v489
      %v492 = vperm.slane %v459, 0
      %v494 = vmul.f32 %v490, %v492
      %v496 = vperm.slane %v460, 0
      %v498 = vadd.f32 %v494, %v496
      %v499 = vpack.c.bf16 %v498, %v498
      %v500 = vld [vmem:[%s6] sm:$0xf]
      %v501 = vld [vmem:[%s6 + $0x4] sm:$0xf]
      %v502 = vld [vmem:[%s6 + $0x8] sm:$0xf]
      %v503 = vld [vmem:[%s6 + $0xc] sm:$0xf]
      %v504 = vld [vmem:[%s7] sm:$0x1]
      %v506 = vperm.slane %v504, 0
      %v512 = vunpack.c.l.b16 %v500
      %v513 = vunpack.c.l.b16 %v501
      %v514 = vunpack.c.l.b16 %v502
      %v515 = vunpack.c.l.b16 %v503
      %v516 = vpack.c.b16 %v513, %v512
      %v517 = vpack.c.b16 %v515, %v514
      %v521 = vsel %vm461, %v499, 0
      %523 = vmatpush.bf16.msra.mxu0 0
      %524 = vmatpush.bf16.msra.mxu0 0
      %525 = vmatpush.bf16.msra.mxu0 0
      %526 = vmatpush.bf16.msra.mxu0 0
      %527 = vmatpush.bf16.msra.mxu0 0
      %528 = vmatpush.bf16.msra.mxu0 0
      %529 = vmatpush.bf16.msra.mxu0 %v517
      %530 = vmatpush.bf16.msra.mxu0 %v516
      %531 = vmatmul.bf16.gmra.mxu0 %v521
      %v532 = vpop.f32.mrf.mxu0
      %v533 = vadd.f32 %v506, %v532
      %v534 = vpop.f32.mrf.mxu0
      %535 = vdwg.mxu0
      %v536 = vmul.f32 %v533, 0.35355338
      %v537 = vld [vmem:[%s445] sm:$0xff]
      %v538 = vpack.c.bf16 %v537, %v537
      %v539 = vld [vmem:[%s8] sm:$0xf]
      %v540 = vld [vmem:[%s8 + $0x4] sm:$0xf]
      %v541 = vld [vmem:[%s8 + $0x8] sm:$0xf]
      %v542 = vld [vmem:[%s8 + $0xc] sm:$0xf]
      %v543 = vld [vmem:[%s9] sm:$0x1]
      %v545 = vperm.slane %v543, 0
      %v551 = vunpack.c.l.b16 %v539
      %v552 = vunpack.c.l.b16 %v540
      %v553 = vunpack.c.l.b16 %v541
      %v554 = vunpack.c.l.b16 %v542
      %v555 = vpack.c.b16 %v552, %v551
      %v556 = vpack.c.b16 %v554, %v553
      %v560 = vsel %vm461, %v538, 0
      %562 = vmatpush.bf16.msra.mxu0 0
      %563 = vmatpush.bf16.msra.mxu0 0
      %564 = vmatpush.bf16.msra.mxu0 0
      %565 = vmatpush.bf16.msra.mxu0 0
      %566 = vmatpush.bf16.msra.mxu0 0
      %567 = vmatpush.bf16.msra.mxu0 0
      %568 = vmatpush.bf16.msra.mxu0 %v556
      %569 = vmatpush.bf16.msra.mxu0 %v555
      %570 = vmatmul.bf16.gmra.mxu0 %v560
      %v571 = vpop.f32.mrf.mxu0
      %v572 = vadd.f32 %v545, %v571
      %v573 = vpop.f32.mrf.mxu0
      %574 = vdwg.mxu0
      %v575 = vld [vmem:[%s449] sm:$0xff]
      %v576 = vld [vmem:[%s452] sm:$0x1]
      %578 = vset.pattern.permute.xlu0 0
      %579 = vperm.xlu0 %578, %v575
      %v580 = vpop.permute.xlu0 %579
      %v583 = vperm.slane %v576, 0
      %v585 = vmul.f32 %v580, %v583
      %v586 = vsub.f32 %v585, 1.0
      %v587 = vmul.f32 %v586, 1e+09
      %v588 = vld [vmem:[%s11] sm:$0x1]
      %v589 = vpack.c.bf16 %v536, %v536
      %v590 = vpack.c.bf16 %v572, %v572
      %vm591 = vcmask 64512
      %v593 = vsel %vm591, %v589, 0
      %v596 = vsel %vm591, %v590, 0
      %598 = vmatpush.bf16.xpose.msra.mxu0 0
      %599 = vmatpush.bf16.xpose.msra.mxu0 0
      %600 = vmatpush.bf16.xpose.msra.mxu0 0
      %601 = vmatpush.bf16.xpose.msra.mxu0 0
      %602 = vmatpush.bf16.xpose.msra.mxu0 0
      %603 = vmatpush.bf16.xpose.msra.mxu0 0
      %604 = vmatpush.bf16.xpose.msra.mxu0 0
      %605 = vmatpush.bf16.xpose.msra.mxu0 %v596
      %606 = vmatmul.bf16.gmra.mxu0 %v593
      %v607 = vpop.f32.mrf.mxu0
      %v608 = vadd.f32 %v587, %v607
      %v609 = vpop.f32.mrf.mxu0
      %610 = vdwg.mxu0
      %v611 = vsel %vm591, %v608, -inf
      %612 = vmax.xlane.f32.xlu0 %v611
      %v613 = vpop.xlane.xlu0 %612
      %v614 = vsub.f32 %v608, %v613
      %v615 = vmul.f32 %v614, 1.442695
      %v616 = vpow.pop %v615
      %v617 = vsel %vm591, %v616, 0.0
      %618 = vadd.xlane.f32.xlu0 %v617
      %v619 = vpop.xlane.xlu0 %618
      %v620 = vrcp.pop %v619
      %v621 = vmul.f32 %v616, %v620
      %v622 = vpack.c.bf16 %v621, %v621
      %624 = vrot.lane.b32.xlu0 %v590, 96
      %v625 = vpop.permute.xlu0 %624
      %v627 = vsel %vm591, %v622, 0
      %vm629 = vcmask 1043456
      %v631 = vsel %vm629, %v625, 0
      %633 = vmatpush.bf16.msra.mxu0 0
      %634 = vmatpush.bf16.msra.mxu0 0
      %635 = vmatpush.bf16.msra.mxu0 0
      %636 = vmatpush.bf16.msra.mxu0 0
      %637 = vmatpush.bf16.msra.mxu0 0
      %638 = vmatpush.bf16.msra.mxu0 0
      %639 = vmatpush.bf16.msra.mxu0 0
      %640 = vmatpush.bf16.msra.mxu0 %v631
      %641 = vmatmul.bf16.gmra.mxu0 %v627
      %v642 = vpop.f32.mrf.mxu0
      %v643 = vadd.f32 0.0, %v642
      %v644 = vpop.f32.mrf.mxu0
      %645 = vdwg.mxu0
      %v646 = vpack.c.bf16 %v643, %v643
      %v647 = vld [vmem:[%s10] sm:$0xf]
      %649 = vrot.lane.b32.xlu0 %v589, 120
      %v650 = vpop.permute.xlu0 %649
      %651 = vrot.lane.b32.xlu0 %v590, 120
      %v652 = vpop.permute.xlu0 %651
      %v654 = vsel %vm591, %v650, 0
      %v657 = vsel %vm591, %v652, 0
      %659 = vmatpush.bf16.xpose.msra.mxu0 0
      %660 = vmatpush.bf16.xpose.msra.mxu0 0
      %661 = vmatpush.bf16.xpose.msra.mxu0 0
      %662 = vmatpush.bf16.xpose.msra.mxu0 0
      %663 = vmatpush.bf16.xpose.msra.mxu0 0
      %664 = vmatpush.bf16.xpose.msra.mxu0 0
      %665 = vmatpush.bf16.xpose.msra.mxu0 0
      %666 = vmatpush.bf16.xpose.msra.mxu0 %v657
      %667 = vmatmul.bf16.gmra.mxu0 %v654
      %v668 = vpop.f32.mrf.mxu0
      %v669 = vadd.f32 %v587, %v668
      %v670 = vpop.f32.mrf.mxu0
      %671 = vdwg.mxu0
      %v672 = vsel %vm591, %v669, -inf
      %673 = vmax.xlane.f32.xlu0 %v672
      %v674 = vpop.xlane.xlu0 %673
      %v675 = vsub.f32 %v669, %v674
      %v676 = vmul.f32 %v675, 1.442695
      %v677 = vpow.pop %v676
      %v678 = vsel %vm591, %v677, 0.0
      %679 = vadd.xlane.f32.xlu0 %v678
      %v680 = vpop.xlane.xlu0 %679
      %v681 = vrcp.pop %v680
      %v682 = vmul.f32 %v677, %v681
      %v683 = vpack.c.bf16 %v682, %v682
      %684 = vrot.lane.b32.xlu0 %v590, 88
      %v685 = vpop.permute.xlu0 %684
      %v687 = vsel %vm591, %v683, 0
      %v690 = vsel %vm629, %v685, 0
      %692 = vmatpush.bf16.msra.mxu0 0
      %693 = vmatpush.bf16.msra.mxu0 0
      %694 = vmatpush.bf16.msra.mxu0 0
      %695 = vmatpush.bf16.msra.mxu0 0
      %696 = vmatpush.bf16.msra.mxu0 0
      %697 = vmatpush.bf16.msra.mxu0 0
      %698 = vmatpush.bf16.msra.mxu0 0
      %699 = vmatpush.bf16.msra.mxu0 %v690
      %700 = vmatmul.bf16.gmra.mxu0 %v687
      %v701 = vpop.f32.mrf.mxu0
      %v702 = vadd.f32 0.0, %v701
      %v703 = vpop.f32.mrf.mxu0
      %704 = vdwg.mxu0
      %v705 = vpack.c.bf16 %v702, %v702
      %v706 = vld [vmem:[%s10 + $0x4] sm:$0xf]
      %v708 = vsel %vm591, %v705, 0
      %v711 = vsel %vm629, %v706, 0
      %713 = vmatpush.bf16.msra.mxu0 0
      %714 = vmatpush.bf16.msra.mxu0 0
      %715 = vmatpush.bf16.msra.mxu0 0
      %716 = vmatpush.bf16.msra.mxu0 0
      %717 = vmatpush.bf16.msra.mxu0 0
      %718 = vmatpush.bf16.msra.mxu0 0
      %719 = vmatpush.bf16.msra.mxu0 0
      %720 = vmatpush.bf16.msra.mxu0 %v711
      %721 = vmatmul.bf16.gmra.mxu0 %v708
      %v722 = vpop.f32.mrf.mxu0
      %v723 = vadd.f32 0.0, %v722
      %v724 = vpop.f32.mrf.mxu0
      %725 = vdwg.mxu0
      %v727 = vsel %vm591, %v646, 0
      %v730 = vsel %vm629, %v647, 0
      %732 = vmatpush.bf16.msra.mxu0 0
      %733 = vmatpush.bf16.msra.mxu0 0
      %734 = vmatpush.bf16.msra.mxu0 0
      %735 = vmatpush.bf16.msra.mxu0 0
      %736 = vmatpush.bf16.msra.mxu0 0
      %737 = vmatpush.bf16.msra.mxu0 0
      %738 = vmatpush.bf16.msra.mxu0 0
      %739 = vmatpush.bf16.msra.mxu0 %v730
      %740 = vmatmul.bf16.gmra.mxu0 %v727
      %v741 = vpop.f32.mrf.mxu0
      %v742 = vadd.f32 %v723, %v741
      %v743 = vpop.f32.mrf.mxu0
      %744 = vdwg.mxu0
      %745 = vrot.lane.b32.xlu0 %v589, 112
      %v746 = vpop.permute.xlu0 %745
      %747 = vrot.lane.b32.xlu0 %v590, 112
      %v748 = vpop.permute.xlu0 %747
      %v750 = vsel %vm591, %v746, 0
      %v753 = vsel %vm591, %v748, 0
      %755 = vmatpush.bf16.xpose.msra.mxu0 0
      %756 = vmatpush.bf16.xpose.msra.mxu0 0
      %757 = vmatpush.bf16.xpose.msra.mxu0 0
      %758 = vmatpush.bf16.xpose.msra.mxu0 0
      %759 = vmatpush.bf16.xpose.msra.mxu0 0
      %760 = vmatpush.bf16.xpose.msra.mxu0 0
      %761 = vmatpush.bf16.xpose.msra.mxu0 0
      %762 = vmatpush.bf16.xpose.msra.mxu0 %v753
      %763 = vmatmul.bf16.gmra.mxu0 %v750
      %v764 = vpop.f32.mrf.mxu0
      %v765 = vadd.f32 %v587, %v764
      %v766 = vpop.f32.mrf.mxu0
      %767 = vdwg.mxu0
      %v768 = vsel %vm591, %v765, -inf
      %769 = vmax.xlane.f32.xlu0 %v768
      %v770 = vpop.xlane.xlu0 %769
      %v771 = vsub.f32 %v765, %v770
      %v772 = vmul.f32 %v771, 1.442695
      %v773 = vpow.pop %v772
      %v774 = vsel %vm591, %v773, 0.0
      %775 = vadd.xlane.f32.xlu0 %v774
      %v776 = vpop.xlane.xlu0 %775
      %v777 = vrcp.pop %v776
      %v778 = vmul.f32 %v773, %v777
      %v779 = vpack.c.bf16 %v778, %v778
      %780 = vrot.lane.b32.xlu0 %v590, 80
      %v781 = vpop.permute.xlu0 %780
      %v783 = vsel %vm591, %v779, 0
      %v786 = vsel %vm629, %v781, 0
      %788 = vmatpush.bf16.msra.mxu0 0
      %789 = vmatpush.bf16.msra.mxu0 0
      %790 = vmatpush.bf16.msra.mxu0 0
      %791 = vmatpush.bf16.msra.mxu0 0
      %792 = vmatpush.bf16.msra.mxu0 0
      %793 = vmatpush.bf16.msra.mxu0 0
      %794 = vmatpush.bf16.msra.mxu0 0
      %795 = vmatpush.bf16.msra.mxu0 %v786
      %796 = vmatmul.bf16.gmra.mxu0 %v783
      %v797 = vpop.f32.mrf.mxu0
      %v798 = vadd.f32 0.0, %v797
      %v799 = vpop.f32.mrf.mxu0
      %800 = vdwg.mxu0
      %v801 = vpack.c.bf16 %v798, %v798
      %v802 = vld [vmem:[%s10 + $0x8] sm:$0xf]
      %v804 = vsel %vm591, %v801, 0
      %v807 = vsel %vm629, %v802, 0
      %809 = vmatpush.bf16.msra.mxu0 0
      %810 = vmatpush.bf16.msra.mxu0 0
      %811 = vmatpush.bf16.msra.mxu0 0
      %812 = vmatpush.bf16.msra.mxu0 0
      %813 = vmatpush.bf16.msra.mxu0 0
      %814 = vmatpush.bf16.msra.mxu0 0
      %815 = vmatpush.bf16.msra.mxu0 0
      %816 = vmatpush.bf16.msra.mxu0 %v807
      %817 = vmatmul.bf16.gmra.mxu0 %v804
      %v818 = vpop.f32.mrf.mxu0
      %v819 = vadd.f32 0.0, %v818
      %v820 = vpop.f32.mrf.mxu0
      %821 = vdwg.mxu0
      %v822 = vadd.f32 %v742, %v819
      %823 = vrot.lane.b32.xlu0 %v589, 104
      %v824 = vpop.permute.xlu0 %823
      %825 = vrot.lane.b32.xlu0 %v590, 104
      %v826 = vpop.permute.xlu0 %825
      %v828 = vsel %vm591, %v824, 0
      %v831 = vsel %vm591, %v826, 0
      %833 = vmatpush.bf16.xpose.msra.mxu0 0
      %834 = vmatpush.bf16.xpose.msra.mxu0 0
      %835 = vmatpush.bf16.xpose.msra.mxu0 0
      %836 = vmatpush.bf16.xpose.msra.mxu0 0
      %837 = vmatpush.bf16.xpose.msra.mxu0 0
      %838 = vmatpush.bf16.xpose.msra.mxu0 0
      %839 = vmatpush.bf16.xpose.msra.mxu0 0
      %840 = vmatpush.bf16.xpose.msra.mxu0 %v831
      %841 = vmatmul.bf16.gmra.mxu0 %v828
      %v842 = vpop.f32.mrf.mxu0
      %v843 = vadd.f32 %v587, %v842
      %v844 = vpop.f32.mrf.mxu0
      %845 = vdwg.mxu0
      %v846 = vsel %vm591, %v843, -inf
      %847 = vmax.xlane.f32.xlu0 %v846
      %v848 = vpop.xlane.xlu0 %847
      %v849 = vsub.f32 %v843, %v848
      %v850 = vmul.f32 %v849, 1.442695
      %v851 = vpow.pop %v850
      %v852 = vsel %vm591, %v851, 0.0
      %853 = vadd.xlane.f32.xlu0 %v852
      %v854 = vpop.xlane.xlu0 %853
      %v855 = vrcp.pop %v854
      %v856 = vmul.f32 %v851, %v855
      %v857 = vpack.c.bf16 %v856, %v856
      %858 = vrot.lane.b32.xlu0 %v590, 72
      %v859 = vpop.permute.xlu0 %858
      %v861 = vsel %vm591, %v857, 0
      %v864 = vsel %vm629, %v859, 0
      %866 = vmatpush.bf16.msra.mxu0 0
      %867 = vmatpush.bf16.msra.mxu0 0
      %868 = vmatpush.bf16.msra.mxu0 0
      %869 = vmatpush.bf16.msra.mxu0 0
      %870 = vmatpush.bf16.msra.mxu0 0
      %871 = vmatpush.bf16.msra.mxu0 0
      %872 = vmatpush.bf16.msra.mxu0 0
      %873 = vmatpush.bf16.msra.mxu0 %v864
      %874 = vmatmul.bf16.gmra.mxu0 %v861
      %v875 = vpop.f32.mrf.mxu0
      %v876 = vadd.f32 0.0, %v875
      %v877 = vpop.f32.mrf.mxu0
      %878 = vdwg.mxu0
      %v879 = vpack.c.bf16 %v876, %v876
      %v880 = vld [vmem:[%s10 + $0xc] sm:$0xf]
      %v882 = vsel %vm591, %v879, 0
      %v885 = vsel %vm629, %v880, 0
      %887 = vmatpush.bf16.msra.mxu0 0
      %888 = vmatpush.bf16.msra.mxu0 0
      %889 = vmatpush.bf16.msra.mxu0 0
      %890 = vmatpush.bf16.msra.mxu0 0
      %891 = vmatpush.bf16.msra.mxu0 0
      %892 = vmatpush.bf16.msra.mxu0 0
      %893 = vmatpush.bf16.msra.mxu0 0
      %894 = vmatpush.bf16.msra.mxu0 %v885
      %895 = vmatmul.bf16.gmra.mxu0 %v882
      %v896 = vpop.f32.mrf.mxu0
      %v897 = vadd.f32 0.0, %v896
      %v898 = vpop.f32.mrf.mxu0
      %899 = vdwg.mxu0
      %v900 = vadd.f32 %v822, %v897
      %v902 = vperm.slane %v588, 0
      %v904 = vadd.f32 %v900, %v902
      %v905 = vadd.f32 %v458, %v904
      %906 = vst.msk [vmem:[%s456] sm:$0xff] %vm461, %v905
      %p907 = scmp.lt.s32.totalorder %s23, 1
      %s908 = scalar_select %p907, %s23, 1
      %s909 = smul.addr %s908, 8
      %s910 = scalar_lea.vmem %s12, %s909
      // Predicated region
      $region69: #{decoder_forward.7} parent=67 // pred_check
        %p911 = pneg %p313
      $region70: #{decoder_forward.7} parent=67 // pred_check_branch
        %913 = sbr.rel (%p911) target = $region72
      $region71: #{decoder_forward.7} parent=67 // pred_region
        _
      $region72: #{decoder_forward.7} parent=67 // pred_fallthru
        _
    $region68: #{decoder_forward.7} parent=5 // pred_fallthru
      _
    %p914 = scmp.le.s32.totalorder 2, %s18
    // Predicated region
    $region73: #{decoder_forward.7} parent=5 // pred_check
      %p915 = pneg %p914
    $region74: #{decoder_forward.7} parent=5 // pred_check_branch
      %917 = sbr.rel (%p915) target = $region76
    $region75: #{decoder_forward.7} parent=5 // pred_region
      %s918 = ssub.s32 %s18, 2
      // Predicated region
      $region77: #{decoder_forward.7} parent=75 // pred_check
        %p919 = pneg %p319
      $region78: #{decoder_forward.7} parent=75 // pred_check_branch
        %921 = sbr.rel (%p919) target = $region80
      $region79: #{decoder_forward.7} parent=75 // pred_region
        %p922 = scmp.lt.s32.totalorder %s24, 1
        %s923 = scalar_select %p922, %s24, 1
        %s924 = smul.addr %s923, 8
        %s925 = scalar_lea.vmem %s12, %s924
      $region80: #{decoder_forward.7} parent=75 // pred_fallthru
        _
    $region76: #{decoder_forward.7} parent=5 // pred_fallthru
      _
  $region6: #{decoder_forward.7} parent=0 // loop_footer
    %s22 = sadd.s32 1, %s18
  $region7: #{decoder_forward.7} parent=0 // loop_footer_branch
    %17 = sbr.rel target = $region3
  $region8: #{decoder_forward.7} parent=0 // loop_exit
    _

// kernel: decoder_forward.6
$region0: #{decoder_forward.6}
  #allocation0 [shape = 'u32[]', space=smem, size = 0x4, offset = 0x4, fixed_abs, tag = 'smem constant byte address 0x4 - core index']
  #allocation1 [shape = 'u32[72,128]{1,0:T(1,128)}', space=vmem, size = 0x9000, scoped, tag = 'internal scratch']
  %s0 = inlined_call_operand.vmem [shape: f32[2,8,32], index: 0, kind: input, shape index: {}]
  %s1 = inlined_call_operand.vmem [shape: f32[2,1,8], index: 1, kind: input, shape index: {}]
  %s2 = inlined_call_operand.vmem [shape: f32[1,32], index: 2, kind: input, shape index: {}]
  %s3 = inlined_call_operand.vmem [shape: f32[1,32], index: 3, kind: input, shape index: {}]
  %s4 = inlined_call_operand.vmem [shape: bf16[32,32], index: 4, kind: input, shape index: {}]
  %s5 = inlined_call_operand.vmem [shape: f32[1,32], index: 5, kind: input, shape index: {}]
  %s6 = inlined_call_operand.vmem [shape: bf16[32,64], index: 6, kind: input, shape index: {}]
  %s7 = inlined_call_operand.vmem [shape: f32[1,64], index: 7, kind: input, shape index: {}]
  %s8 = inlined_call_operand.vmem [shape: bf16[32,32], index: 8, kind: input, shape index: {}]
  %s9 = inlined_call_operand.vmem [shape: f32[1,32], index: 9, kind: input, shape index: {}]
  %s10 = inlined_call_operand.vmem [shape: f32[2,8,32], index: 10, kind: output, shape index: {}]
  %s11 = sld [smem:[#allocation0]]
  $region73: #{decoder_forward.6} parent=0
    _
  %s13 = ssub.s32 1, %s11
  %s14 = scalar_select 0, %s13, %s11
  loop: start=0, step=1, limit=4
  $region2: #{decoder_forward.6} parent=0 // loop_pre_header
    _
  $region3: #{decoder_forward.6} parent=0 // loop_header
    %s16 = sphi 0, %s20
    %p17 = scmp.ge.s32.totalorder %s16, 4
    %s26 = sphi 0, %s28
    %s29 = sphi 0, %s26
    %s30 = sphi 0, %s29
    %s46 = sphi 0, %s30
    %s52 = sphi 0, %s54
    %s55 = sphi 0, %s52
    %s56 = sphi 0, %s55
    %s72 = sphi 0, %s56
    %s76 = sphi 0, %s76
    %s78 = sphi 0, %s76
    %s79 = sphi 0, %s78
    %s93 = sphi 0, %s79
    %s97 = sphi 0, %s97
    %s99 = sphi 0, %s97
    %s100 = sphi 0, %s99
    %s114 = sphi 0, %s100
    %s118 = sphi 0, %s118
    %s120 = sphi 0, %s118
    %s121 = sphi 0, %s120
    %s135 = sphi 0, %s121
    %s139 = sphi 0, %s139
    %s141 = sphi 0, %s139
    %s142 = sphi 0, %s141
    %s156 = sphi 0, %s142
    %s160 = sphi 0, %s160
    %s162 = sphi 0, %s160
    %s163 = sphi 0, %s162
    %s177 = sphi 0, %s163
    %s181 = sphi 0, %s181
    %s183 = sphi 0, %s181
    %s184 = sphi 0, %s183
    %s198 = sphi 0, %s184
    %s202 = sphi 0, %s202
    %s204 = sphi 0, %s202
    %s205 = sphi 0, %s204
    %s219 = sphi 0, %s205
    %s223 = sphi 0, %s223
    %s225 = sphi 0, %s223
    %s226 = sphi 0, %s225
    %s240 = sphi 0, %s226
    %s246 = sphi 0, %s248
    %s249 = sphi 0, %s246
    %s250 = sphi 0, %s249
    %s266 = sphi 0, %s250
  $region4: #{decoder_forward.6} parent=0 // loop_header_branch
    %19 = sbr.rel (%p17) target = $region8
  $region5: #{decoder_forward.6} parent=0 // loop_body
    %s21 = ssub.s32 %s16, 1
    %s22 = ssub.s32 %s16, 2
    %s23 = sadd.s32 %s16, 1
    %s24 = ssub.s32 %s16, %s23
    %p25 = scmp.eq.s32.totalorder %s24, 0
    %s27 = sadd.s32 %s26, 1
    %s28 = scalar_select %p25, %s26, %s27
    %p31 = pneg %p25
    %p32 = scmp.eq.s32.totalorder %s16, 1
    %p33 = por %p31, %p32
    %p34 = scmp.ne.s32.totalorder %s26, %s29
    %p35 = scmp.eq.s32.totalorder %s16, 0
    %p36 = por %p34, %p35
    %p37 = scmp.ne.s32.totalorder %s26, %s29
    %p38 = scmp.eq.s32.totalorder %s21, 1
    %p39 = por %p37, %p38
    %p40 = scmp.ne.s32.totalorder %s29, %s30
    %p41 = scmp.eq.s32.totalorder %s21, 0
    %p42 = por %p40, %p41
    %p43 = scmp.ne.s32.totalorder %s29, %s30
    %p44 = scmp.eq.s32.totalorder %s22, 1
    %p45 = por %p43, %p44
    %p47 = scmp.ne.s32.totalorder %s30, %s46
    %p48 = scmp.eq.s32.totalorder %s22, 0
    %p49 = por %p47, %p48
    %s50 = ssub.s32 %s16, %s23
    %p51 = scmp.eq.s32.totalorder %s50, 0
    %s53 = sadd.s32 %s52, 1
    %s54 = scalar_select %p51, %s52, %s53
    %p57 = pneg %p51
    %p58 = scmp.eq.s32.totalorder %s16, 1
    %p59 = por %p57, %p58
    %p60 = scmp.ne.s32.totalorder %s52, %s55
    %p61 = scmp.eq.s32.totalorder %s16, 0
    %p62 = por %p60, %p61
    %p63 = scmp.ne.s32.totalorder %s52, %s55
    %p64 = scmp.eq.s32.totalorder %s21, 1
    %p65 = por %p63, %p64
    %p66 = scmp.ne.s32.totalorder %s55, %s56
    %p67 = scmp.eq.s32.totalorder %s21, 0
    %p68 = por %p66, %p67
    %p69 = scmp.ne.s32.totalorder %s55, %s56
    %p70 = scmp.eq.s32.totalorder %s22, 1
    %p71 = por %p69, %p70
    %p73 = scmp.ne.s32.totalorder %s56, %s72
    %p74 = scmp.eq.s32.totalorder %s22, 0
    %p75 = por %p73, %p74
    %s77 = sadd.s32 %s76, 1
    %p80 = scmp.eq.s32.totalorder %s16, 1
    %p81 = scmp.ne.s32.totalorder %s76, %s78
    %p82 = scmp.eq.s32.totalorder %s16, 0
    %p83 = por %p81, %p82
    %p84 = scmp.ne.s32.totalorder %s76, %s78
    %p85 = scmp.eq.s32.totalorder %s21, 1
    %p86 = por %p84, %p85
    %p87 = scmp.ne.s32.totalorder %s78, %s79
    %p88 = scmp.eq.s32.totalorder %s21, 0
    %p89 = por %p87, %p88
    %p90 = scmp.ne.s32.totalorder %s78, %s79
    %p91 = scmp.eq.s32.totalorder %s22, 1
    %p92 = por %p90, %p91
    %p94 = scmp.ne.s32.totalorder %s79, %s93
    %p95 = scmp.eq.s32.totalorder %s22, 0
    %p96 = por %p94, %p95
    %s98 = sadd.s32 %s97, 1
    %p101 = scmp.eq.s32.totalorder %s16, 1
    %p102 = scmp.ne.s32.totalorder %s97, %s99
    %p103 = scmp.eq.s32.totalorder %s16, 0
    %p104 = por %p102, %p103
    %p105 = scmp.ne.s32.totalorder %s97, %s99
    %p106 = scmp.eq.s32.totalorder %s21, 1
    %p107 = por %p105, %p106
    %p108 = scmp.ne.s32.totalorder %s99, %s100
    %p109 = scmp.eq.s32.totalorder %s21, 0
    %p110 = por %p108, %p109
    %p111 = scmp.ne.s32.totalorder %s99, %s100
    %p112 = scmp.eq.s32.totalorder %s22, 1
    %p113 = por %p111, %p112
    %p115 = scmp.ne.s32.totalorder %s100, %s114
    %p116 = scmp.eq.s32.totalorder %s22, 0
    %p117 = por %p115, %p116
    %s119 = sadd.s32 %s118, 1
    %p122 = scmp.eq.s32.totalorder %s16, 1
    %p123 = scmp.ne.s32.totalorder %s118, %s120
    %p124 = scmp.eq.s32.totalorder %s16, 0
    %p125 = por %p123, %p124
    %p126 = scmp.ne.s32.totalorder %s118, %s120
    %p127 = scmp.eq.s32.totalorder %s21, 1
    %p128 = por %p126, %p127
    %p129 = scmp.ne.s32.totalorder %s120, %s121
    %p130 = scmp.eq.s32.totalorder %s21, 0
    %p131 = por %p129, %p130
    %p132 = scmp.ne.s32.totalorder %s120, %s121
    %p133 = scmp.eq.s32.totalorder %s22, 1
    %p134 = por %p132, %p133
    %p136 = scmp.ne.s32.totalorder %s121, %s135
    %p137 = scmp.eq.s32.totalorder %s22, 0
    %p138 = por %p136, %p137
    %s140 = sadd.s32 %s139, 1
    %p143 = scmp.eq.s32.totalorder %s16, 1
    %p144 = scmp.ne.s32.totalorder %s139, %s141
    %p145 = scmp.eq.s32.totalorder %s16, 0
    %p146 = por %p144, %p145
    %p147 = scmp.ne.s32.totalorder %s139, %s141
    %p148 = scmp.eq.s32.totalorder %s21, 1
    %p149 = por %p147, %p148
    %p150 = scmp.ne.s32.totalorder %s141, %s142
    %p151 = scmp.eq.s32.totalorder %s21, 0
    %p152 = por %p150, %p151
    %p153 = scmp.ne.s32.totalorder %s141, %s142
    %p154 = scmp.eq.s32.totalorder %s22, 1
    %p155 = por %p153, %p154
    %p157 = scmp.ne.s32.totalorder %s142, %s156
    %p158 = scmp.eq.s32.totalorder %s22, 0
    %p159 = por %p157, %p158
    %s161 = sadd.s32 %s160, 1
    %p164 = scmp.eq.s32.totalorder %s16, 1
    %p165 = scmp.ne.s32.totalorder %s160, %s162
    %p166 = scmp.eq.s32.totalorder %s16, 0
    %p167 = por %p165, %p166
    %p168 = scmp.ne.s32.totalorder %s160, %s162
    %p169 = scmp.eq.s32.totalorder %s21, 1
    %p170 = por %p168, %p169
    %p171 = scmp.ne.s32.totalorder %s162, %s163
    %p172 = scmp.eq.s32.totalorder %s21, 0
    %p173 = por %p171, %p172
    %p174 = scmp.ne.s32.totalorder %s162, %s163
    %p175 = scmp.eq.s32.totalorder %s22, 1
    %p176 = por %p174, %p175
    %p178 = scmp.ne.s32.totalorder %s163, %s177
    %p179 = scmp.eq.s32.totalorder %s22, 0
    %p180 = por %p178, %p179
    %s182 = sadd.s32 %s181, 1
    %p185 = scmp.eq.s32.totalorder %s16, 1
    %p186 = scmp.ne.s32.totalorder %s181, %s183
    %p187 = scmp.eq.s32.totalorder %s16, 0
    %p188 = por %p186, %p187
    %p189 = scmp.ne.s32.totalorder %s181, %s183
    %p190 = scmp.eq.s32.totalorder %s21, 1
    %p191 = por %p189, %p190
    %p192 = scmp.ne.s32.totalorder %s183, %s184
    %p193 = scmp.eq.s32.totalorder %s21, 0
    %p194 = por %p192, %p193
    %p195 = scmp.ne.s32.totalorder %s183, %s184
    %p196 = scmp.eq.s32.totalorder %s22, 1
    %p197 = por %p195, %p196
    %p199 = scmp.ne.s32.totalorder %s184, %s198
    %p200 = scmp.eq.s32.totalorder %s22, 0
    %p201 = por %p199, %p200
    %s203 = sadd.s32 %s202, 1
    %p206 = scmp.eq.s32.totalorder %s16, 1
    %p207 = scmp.ne.s32.totalorder %s202, %s204
    %p208 = scmp.eq.s32.totalorder %s16, 0
    %p209 = por %p207, %p208
    %p210 = scmp.ne.s32.totalorder %s202, %s204
    %p211 = scmp.eq.s32.totalorder %s21, 1
    %p212 = por %p210, %p211
    %p213 = scmp.ne.s32.totalorder %s204, %s205
    %p214 = scmp.eq.s32.totalorder %s21, 0
    %p215 = por %p213, %p214
    %p216 = scmp.ne.s32.totalorder %s204, %s205
    %p217 = scmp.eq.s32.totalorder %s22, 1
    %p218 = por %p216, %p217
    %p220 = scmp.ne.s32.totalorder %s205, %s219
    %p221 = scmp.eq.s32.totalorder %s22, 0
    %p222 = por %p220, %p221
    %s224 = sadd.s32 %s223, 1
    %p227 = scmp.eq.s32.totalorder %s16, 1
    %p228 = scmp.ne.s32.totalorder %s223, %s225
    %p229 = scmp.eq.s32.totalorder %s16, 0
    %p230 = por %p228, %p229
    %p231 = scmp.ne.s32.totalorder %s223, %s225
    %p232 = scmp.eq.s32.totalorder %s21, 1
    %p233 = por %p231, %p232
    %p234 = scmp.ne.s32.totalorder %s225, %s226
    %p235 = scmp.eq.s32.totalorder %s21, 0
    %p236 = por %p234, %p235
    %p237 = scmp.ne.s32.totalorder %s225, %s226
    %p238 = scmp.eq.s32.totalorder %s22, 1
    %p239 = por %p237, %p238
    %p241 = scmp.ne.s32.totalorder %s226, %s240
    %p242 = scmp.eq.s32.totalorder %s22, 0
    %p243 = por %p241, %p242
    %s244 = ssub.s32 %s16, %s23
    %p245 = scmp.eq.s32.totalorder %s244, 0
    %s247 = sadd.s32 %s246, 1
    %s248 = scalar_select %p245, %s246, %s247
    %p251 = pneg %p245
    %p252 = scmp.eq.s32.totalorder %s16, 1
    %p253 = por %p251, %p252
    %p254 = scmp.ne.s32.totalorder %s246, %s249
    %p255 = scmp.eq.s32.totalorder %s16, 0
    %p256 = por %p254, %p255
    %p257 = scmp.ne.s32.totalorder %s246, %s249
    %p258 = scmp.eq.s32.totalorder %s21, 1
    %p259 = por %p257, %p258
    %p260 = scmp.ne.s32.totalorder %s249, %s250
    %p261 = scmp.eq.s32.totalorder %s21, 0
    %p262 = por %p260, %p261
    %p263 = scmp.ne.s32.totalorder %s249, %s250
    %p264 = scmp.eq.s32.totalorder %s22, 1
    %p265 = por %p263, %p264
    %p267 = scmp.ne.s32.totalorder %s250, %s266
    %p268 = scmp.eq.s32.totalorder %s22, 0
    %p269 = por %p267, %p268
    %p270 = scmp.le.s32.totalorder 1, %s16
    %p271 = scmp.lt.s32.totalorder %s16, 3
    %p272 = pnand %p270, %p271
    %p273 = pneg %p272
    // Predicated region
    $region9: #{decoder_forward.6} parent=5 // pred_check
      _
    $region10: #{decoder_forward.6} parent=5 // pred_check_branch
      %275 = sbr.rel (%p272) target = $region12
    $region11: #{decoder_forward.6} parent=5 // pred_region
      %s276 = ssub.s32 %s16, 1
      // Predicated region
      $region13: #{decoder_forward.6} parent=11 // pred_check
        %p277 = pneg %p89
      $region14: #{decoder_forward.6} parent=11 // pred_check_branch
        %279 = sbr.rel (%p277) target = $region16
      $region15: #{decoder_forward.6} parent=11 // pred_region
        _
      $region16: #{decoder_forward.6} parent=11 // pred_fallthru
        _
      // Predicated region
      $region17: #{decoder_forward.6} parent=11 // pred_check
        %p280 = pneg %p110
      $region18: #{decoder_forward.6} parent=11 // pred_check_branch
        %282 = sbr.rel (%p280) target = $region20
      $region19: #{decoder_forward.6} parent=11 // pred_region
        _
      $region20: #{decoder_forward.6} parent=11 // pred_fallthru
        _
      // Predicated region
      $region21: #{decoder_forward.6} parent=11 // pred_check
        %p283 = pneg %p131
      $region22: #{decoder_forward.6} parent=11 // pred_check_branch
        %285 = sbr.rel (%p283) target = $region24
      $region23: #{decoder_forward.6} parent=11 // pred_region
        _
      $region24: #{decoder_forward.6} parent=11 // pred_fallthru
        _
      // Predicated region
      $region25: #{decoder_forward.6} parent=11 // pred_check
        %p286 = pneg %p152
      $region26: #{decoder_forward.6} parent=11 // pred_check_branch
        %288 = sbr.rel (%p286) target = $region28
      $region27: #{decoder_forward.6} parent=11 // pred_region
        _
      $region28: #{decoder_forward.6} parent=11 // pred_fallthru
        _
      // Predicated region
      $region29: #{decoder_forward.6} parent=11 // pred_check
        %p289 = pneg %p173
      $region30: #{decoder_forward.6} parent=11 // pred_check_branch
        %291 = sbr.rel (%p289) target = $region32
      $region31: #{decoder_forward.6} parent=11 // pred_region
        _
      $region32: #{decoder_forward.6} parent=11 // pred_fallthru
        _
      // Predicated region
      $region33: #{decoder_forward.6} parent=11 // pred_check
        %p292 = pneg %p194
      $region34: #{decoder_forward.6} parent=11 // pred_check_branch
        %294 = sbr.rel (%p292) target = $region36
      $region35: #{decoder_forward.6} parent=11 // pred_region
        _
      $region36: #{decoder_forward.6} parent=11 // pred_fallthru
        _
      // Predicated region
      $region37: #{decoder_forward.6} parent=11 // pred_check
        %p295 = pneg %p215
      $region38: #{decoder_forward.6} parent=11 // pred_check_branch
        %297 = sbr.rel (%p295) target = $region40
      $region39: #{decoder_forward.6} parent=11 // pred_region
        _
      $region40: #{decoder_forward.6} parent=11 // pred_fallthru
        _
      // Predicated region
      $region41: #{decoder_forward.6} parent=11 // pred_check
        %p298 = pneg %p236
      $region42: #{decoder_forward.6} parent=11 // pred_check_branch
        %300 = sbr.rel (%p298) target = $region44
      $region43: #{decoder_forward.6} parent=11 // pred_region
        _
      $region44: #{decoder_forward.6} parent=11 // pred_fallthru
        _
    $region12: #{decoder_forward.6} parent=5 // pred_fallthru
      _
    %p301 = scmp.lt.s32.totalorder %s16, 2
    // Predicated region
    $region45: #{decoder_forward.6} parent=5 // pred_check
      %p302 = pneg %p301
    $region46: #{decoder_forward.6} parent=5 // pred_check_branch
      %304 = sbr.rel (%p302) target = $region48
    $region47: #{decoder_forward.6} parent=5 // pred_region
      // Predicated region
      $region49: #{decoder_forward.6} parent=47 // pred_check
        %p305 = pneg %p36
      $region50: #{decoder_forward.6} parent=47 // pred_check_branch
        %307 = sbr.rel (%p305) target = $region52
      $region51: #{decoder_forward.6} parent=47 // pred_region
        %p308 = scmp.lt.s32.totalorder %s16, 1
        %s309 = scalar_select %p308, %s16, 1
        %s310 = smul.addr %s309, 8
        %s311 = scalar_lea.vmem %s0, %s310
      $region52: #{decoder_forward.6} parent=47 // pred_fallthru
        _
      // Predicated region
      $region53: #{decoder_forward.6} parent=47 // pred_check
        %p312 = pneg %p62
      $region54: #{decoder_forward.6} parent=47 // pred_check_branch
        %314 = sbr.rel (%p312) target = $region56
      $region55: #{decoder_forward.6} parent=47 // pred_region
        %p315 = scmp.lt.s32.totalorder %s16, 1
        %s316 = scalar_select %p315, %s16, 1
        %s317 = scalar_lea.vmem %s1, %s316
      $region56: #{decoder_forward.6} parent=47 // pred_fallthru
        _
    $region48: #{decoder_forward.6} parent=5 // pred_fallthru
      _
    %p318 = scmp.le.s32.totalorder 1, %s16
    %p319 = scmp.lt.s32.totalorder %s16, 3
    %p320 = pnand %p318, %p319
    %p321 = pneg %p320
    // Predicated region
    $region57: #{decoder_forward.6} parent=5 // pred_check
      _
    $region58: #{decoder_forward.6} parent=5 // pred_check_branch
      %323 = sbr.rel (%p320) target = $region60
    $region59: #{decoder_forward.6} parent=5 // pred_region
      %s324 = ssub.s32 %s16, 1
      %p325 = scmp.lt.s32.totalorder %s21, 1
      %s326 = scalar_select %p325, %s21, 1
      %s327 = smul.addr %s326, 8
      %s328 = scalar_lea.vmem %s0, %s327
      %p329 = pneg %p42
      %p330 = pneg %p39
      %p331 = scmp.lt.s32.totalorder %s21, 1
      %s332 = scalar_select %p331, %s21, 1
      %s333 = scalar_lea.vmem %s1, %s332
      %p334 = pneg %p68
      %p335 = pneg %p65
      %p336 = pneg %p89
      %p337 = pneg %p86
      %p338 = pneg %p110
      %p339 = pneg %p107
      %p340 = pneg %p131
      %p341 = pneg %p128
      %p342 = pneg %p152
      %p343 = pneg %p149
      %p344 = pneg %p173
      %p345 = pneg %p170
      %p346 = pneg %p194
      %p347 = pneg %p191
      %p348 = pneg %p215
      %p349 = pneg %p212
      %p350 = pneg %p236
      %p351 = pneg %p233
      %p352 = pneg %p262
      %p353 = pneg %p259
      %p354 = scmp.lt.s32.totalorder %s21, 1
      %s355 = scalar_select %p354, %s21, 1
      %s356 = smul.addr %s355, 8
      %s357 = scalar_lea.vmem %s10, %s356
      %p358 = scmp.lt.s32.totalorder %s21, 1
      %s359 = scalar_select %p358, %s21, 1
      %s360 = smul.addr %s359, 8
      %s361 = scalar_lea.vmem %s0, %s360
      %p362 = scmp.lt.s32.totalorder %s21, 1
      %s363 = scalar_select %p362, %s21, 1
      %s364 = scalar_lea.vmem %s1, %s363
      %p365 = scmp.lt.s32.totalorder %s21, 1
      %s366 = scalar_select %p365, %s21, 1
      %s367 = smul.addr %s366, 8
      %s368 = scalar_lea.vmem %s10, %s367
      %v370 = vld [vmem:[%s361] sm:$0xff]
      %v371 = vld [vmem:[%s2] sm:$0x1]
      %v372 = vld [vmem:[%s3] sm:$0x1]
      %vm373 = vcmask 261120
      %v374 = vsel %vm373, %v370, 0.0
      %375 = vadd.xlane.f32.xlu0 %v374
      %v376 = vpop.xlane.xlu0 %375
      %v377 = vrcp.pop 32.0
      %v378 = vmul.f32 32.0, %v377
      %v379 = vsub.f32 1.0, %v378
      %v380 = vmul.f32 %v377, %v379
      %v381 = vadd.f32 %v377, %v380
      %vm382 = vweird.f32 %v377
      %v383 = vsel %vm382, %v377, %v381
      %v384 = vmul.f32 %v376, %v383
      %v385 = vsub.f32 %v370, %v384
      %v386 = vmul.f32 %v385, %v385
      %v387 = vsel %vm373, %v386, 0.0
      %388 = vadd.xlane.f32.xlu0 %v387
      %v389 = vpop.xlane.xlu0 %388
      %v390 = vmul.f32 %v389, %v383
      %v391 = vadd.f32 %v390, 1e-05
      %v392 = vrsqrt.pop %v391
      %v393 = vmul.f32 %v392, %v391
      %v394 = vmul.f32 %v393, %v392
      %v395 = vmul.f32 0.5, %v394
      %v396 = vsub.f32 1.5, %v395
      %v397 = vmul.f32 %v392, %v396
      %vm398 = vweird.f32 %v391
      %vm399 = vweird.f32 %v392
      %vm400 = vmor %vm398, %vm399
      %v401 = vsel %vm400, %v392, %v397
      %v402 = vmul.f32 %v385, %v401
      %v404 = vperm.slane %v371, 0
      %v406 = vmul.f32 %v402, %v404
      %v408 = vperm.slane %v372, 0
      %v410 = vadd.f32 %v406, %v408
      %v411 = vpack.c.bf16 %v410, %v410
      %v412 = vld [vmem:[%s4] sm:$0xf]
      %v413 = vld [vmem:[%s4 + $0x4] sm:$0xf]
      %v414 = vld [vmem:[%s4 + $0x8] sm:$0xf]
      %v415 = vld [vmem:[%s4 + $0xc] sm:$0xf]
      %v416 = vld [vmem:[%s5] sm:$0x1]
      %v418 = vperm.slane %v416, 0
      %v424 = vunpack.c.l.b16 %v412
      %v425 = vunpack.c.l.b16 %v413
      %v426 = vunpack.c.l.b16 %v414
      %v427 = vunpack.c.l.b16 %v415
      %v428 = vpack.c.b16 %v425, %v424
      %v429 = vpack.c.b16 %v427, %v426
      %v433 = vsel %vm373, %v411, 0
      %435 = vmatpush.bf16.msra.mxu0 0
      %436 = vmatpush.bf16.msra.mxu0 0
      %437 = vmatpush.bf16.msra.mxu0 0
      %438 = vmatpush.bf16.msra.mxu0 0
      %439 = vmatpush.bf16.msra.mxu0 0
      %440 = vmatpush.bf16.msra.mxu0 0
      %441 = vmatpush.bf16.msra.mxu0 %v429
      %442 = vmatpush.bf16.msra.mxu0 %v428
      %443 = vmatmul.bf16.gmra.mxu0 %v433
      %v444 = vpop.f32.mrf.mxu0
      %v445 = vadd.f32 %v418, %v444
      %v446 = vpop.f32.mrf.mxu0
      %447 = vdwg.mxu0
      %v448 = vmul.f32 %v445, 0.35355338
      %v449 = vld [vmem:[%s6] sm:$0xf]
      %v450 = vld [vmem:[%s6 + $0x4] sm:$0xf]
      %v451 = vld [vmem:[%s6 + $0x8] sm:$0xf]
      %v452 = vld [vmem:[%s6 + $0xc] sm:$0xf]
      %v453 = vld [vmem:[%s7] sm:$0x1]
      %v455 = vperm.slane %v453, 0
      %v461 = vunpack.c.l.b16 %v449
      %v462 = vunpack.c.l.b16 %v450
      %v463 = vunpack.c.l.b16 %v451
      %v464 = vunpack.c.l.b16 %v452
      %v465 = vpack.c.b16 %v462, %v461
      %v466 = vpack.c.b16 %v464, %v463
      %469 = vmatpush.bf16.msra.mxu0 0
      %470 = vmatpush.bf16.msra.mxu0 0
      %471 = vmatpush.bf16.msra.mxu0 0
      %472 = vmatpush.bf16.msra.mxu0 0
      %473 = vmatpush.bf16.msra.mxu0 0
      %474 = vmatpush.bf16.msra.mxu0 0
      %475 = vmatpush.bf16.msra.mxu0 %v466
      %476 = vmatpush.bf16.msra.mxu0 %v465
      %477 = vmatmul.bf16.gmra.mxu0 %v433
      %v478 = vpop.f32.mrf.mxu0
      %v479 = vadd.f32 %v455, %v478
      %v480 = vpop.f32.mrf.mxu0
      %481 = vdwg.mxu0
      %v482 = vlaneseq
      %v483 = vshrl.u32 %v482, 7
      %v484 = vlaneseq
      %v485 = vand.u32 %v484, 127
      %vm486 = vcmp.ge.s32.totalorder %v483, %v485
      %v487 = vsel %vm486, 1, 0
      %v488 = vcvt.s32.f32 %v487
      %v489 = vld [vmem:[%s364] sm:$0x1]
      %v491 = vperm.slane %v489, 0
      %v493 = vmul.f32 %v488, %v491
      %v494 = vsub.f32 %v493, 1.0
      %v495 = vmul.f32 %v494, 1e+09
      %v496 = vld [vmem:[%s9] sm:$0x1]
      %v497 = vpack.c.bf16 %v448, %v448
      %v498 = vpack.c.bf16 %v479, %v479
      %vm499 = vcmask 64512
      %v501 = vsel %vm499, %v497, 0
      %v504 = vsel %vm499, %v498, 0
      %506 = vmatpush.bf16.xpose.msra.mxu0 0
      %507 = vmatpush.bf16.xpose.msra.mxu0 0
      %508 = vmatpush.bf16.xpose.msra.mxu0 0
      %509 = vmatpush.bf16.xpose.msra.mxu0 0
      %510 = vmatpush.bf16.xpose.msra.mxu0 0
      %511 = vmatpush.bf16.xpose.msra.mxu0 0
      %512 = vmatpush.bf16.xpose.msra.mxu0 0
      %513 = vmatpush.bf16.xpose.msra.mxu0 %v504
      %514 = vmatmul.bf16.gmra.mxu0 %v501
      %v515 = vpop.f32.mrf.mxu0
      %v516 = vadd.f32 %v495, %v515
      %v517 = vpop.f32.mrf.mxu0
      %518 = vdwg.mxu0
      %v519 = vsel %vm499, %v516, -inf
      %520 = vmax.xlane.f32.xlu0 %v519
      %v521 = vpop.xlane.xlu0 %520
      %v522 = vsub.f32 %v516, %v521
      %v523 = vmul.f32 %v522, 1.442695
      %v524 = vpow.pop %v523
      %v525 = vsel %vm499, %v524, 0.0
      %526 = vadd.xlane.f32.xlu0 %v525
      %v527 = vpop.xlane.xlu0 %526
      %v528 = vrcp.pop %v527
      %v529 = vmul.f32 %v524, %v528
      %v530 = vpack.c.bf16 %v529, %v529
      %532 = vrot.lane.b32.xlu0 %v498, 96
      %v533 = vpop.permute.xlu0 %532
      %v535 = vsel %vm499, %v530, 0
      %vm537 = vcmask 1043456
      %v539 = vsel %vm537, %v533, 0
      %541 = vmatpush.bf16.msra.mxu0 0
      %542 = vmatpush.bf16.msra.mxu0 0
      %543 = vmatpush.bf16.msra.mxu0 0
      %544 = vmatpush.bf16.msra.mxu0 0
      %545 = vmatpush.bf16.msra.mxu0 0
      %546 = vmatpush.bf16.msra.mxu0 0
      %547 = vmatpush.bf16.msra.mxu0 0
      %548 = vmatpush.bf16.msra.mxu0 %v539
      %549 = vmatmul.bf16.gmra.mxu0 %v535
      %v550 = vpop.f32.mrf.mxu0
      %v551 = vadd.f32 0.0, %v550
      %v552 = vpop.f32.mrf.mxu0
      %553 = vdwg.mxu0
      %v554 = vpack.c.bf16 %v551, %v551
      %v555 = vld [vmem:[%s8] sm:$0xf]
      %557 = vrot.lane.b32.xlu0 %v497, 120
      %v558 = vpop.permute.xlu0 %557
      %559 = vrot.lane.b32.xlu0 %v498, 120
      %v560 = vpop.permute.xlu0 %559
      %v562 = vsel %vm499, %v558, 0
      %v565 = vsel %vm499, %v560, 0
      %567 = vmatpush.bf16.xpose.msra.mxu0 0
      %568 = vmatpush.bf16.xpose.msra.mxu0 0
      %569 = vmatpush.bf16.xpose.msra.mxu0 0
      %570 = vmatpush.bf16.xpose.msra.mxu0 0
      %571 = vmatpush.bf16.xpose.msra.mxu0 0
      %572 = vmatpush.bf16.xpose.msra.mxu0 0
      %573 = vmatpush.bf16.xpose.msra.mxu0 0
      %574 = vmatpush.bf16.xpose.msra.mxu0 %v565
      %575 = vmatmul.bf16.gmra.mxu0 %v562
      %v576 = vpop.f32.mrf.mxu0
      %v577 = vadd.f32 %v495, %v576
      %v578 = vpop.f32.mrf.mxu0
      %579 = vdwg.mxu0
      %v580 = vsel %vm499, %v577, -inf
      %581 = vmax.xlane.f32.xlu0 %v580
      %v582 = vpop.xlane.xlu0 %581
      %v583 = vsub.f32 %v577, %v582
      %v584 = vmul.f32 %v583, 1.442695
      %v585 = vpow.pop %v584
      %v586 = vsel %vm499, %v585, 0.0
      %587 = vadd.xlane.f32.xlu0 %v586
      %v588 = vpop.xlane.xlu0 %587
      %v589 = vrcp.pop %v588
      %v590 = vmul.f32 %v585, %v589
      %v591 = vpack.c.bf16 %v590, %v590
      %592 = vrot.lane.b32.xlu0 %v498, 88
      %v593 = vpop.permute.xlu0 %592
      %v595 = vsel %vm499, %v591, 0
      %v598 = vsel %vm537, %v593, 0
      %600 = vmatpush.bf16.msra.mxu0 0
      %601 = vmatpush.bf16.msra.mxu0 0
      %602 = vmatpush.bf16.msra.mxu0 0
      %603 = vmatpush.bf16.msra.mxu0 0
      %604 = vmatpush.bf16.msra.mxu0 0
      %605 = vmatpush.bf16.msra.mxu0 0
      %606 = vmatpush.bf16.msra.mxu0 0
      %607 = vmatpush.bf16.msra.mxu0 %v598
      %608 = vmatmul.bf16.gmra.mxu0 %v595
      %v609 = vpop.f32.mrf.mxu0
      %v610 = vadd.f32 0.0, %v609
      %v611 = vpop.f32.mrf.mxu0
      %612 = vdwg.mxu0
      %v613 = vpack.c.bf16 %v610, %v610
      %v614 = vld [vmem:[%s8 + $0x4] sm:$0xf]
      %v616 = vsel %vm499, %v613, 0
      %v619 = vsel %vm537, %v614, 0
      %621 = vmatpush.bf16.msra.mxu0 0
      %622 = vmatpush.bf16.msra.mxu0 0
      %623 = vmatpush.bf16.msra.mxu0 0
      %624 = vmatpush.bf16.msra.mxu0 0
      %625 = vmatpush.bf16.msra.mxu0 0
      %626 = vmatpush.bf16.msra.mxu0 0
      %627 = vmatpush.bf16.msra.mxu0 0
      %628 = vmatpush.bf16.msra.mxu0 %v619
      %629 = vmatmul.bf16.gmra.mxu0 %v616
      %v630 = vpop.f32.mrf.mxu0
      %v631 = vadd.f32 0.0, %v630
      %v632 = vpop.f32.mrf.mxu0
      %633 = vdwg.mxu0
      %v635 = vsel %vm499, %v554, 0
      %v638 = vsel %vm537, %v555, 0
      %640 = vmatpush.bf16.msra.mxu0 0
      %641 = vmatpush.bf16.msra.mxu0 0
      %642 = vmatpush.bf16.msra.mxu0 0
      %643 = vmatpush.bf16.msra.mxu0 0
      %644 = vmatpush.bf16.msra.mxu0 0
      %645 = vmatpush.bf16.msra.mxu0 0
      %646 = vmatpush.bf16.msra.mxu0 0
      %647 = vmatpush.bf16.msra.mxu0 %v638
      %648 = vmatmul.bf16.gmra.mxu0 %v635
      %v649 = vpop.f32.mrf.mxu0
      %v650 = vadd.f32 %v631, %v649
      %v651 = vpop.f32.mrf.mxu0
      %652 = vdwg.mxu0
      %653 = vrot.lane.b32.xlu0 %v497, 112
      %v654 = vpop.permute.xlu0 %653
      %655 = vrot.lane.b32.xlu0 %v498, 112
      %v656 = vpop.permute.xlu0 %655
      %v658 = vsel %vm499, %v654, 0
      %v661 = vsel %vm499, %v656, 0
      %663 = vmatpush.bf16.xpose.msra.mxu0 0
      %664 = vmatpush.bf16.xpose.msra.mxu0 0
      %665 = vmatpush.bf16.xpose.msra.mxu0 0
      %666 = vmatpush.bf16.xpose.msra.mxu0 0
      %667 = vmatpush.bf16.xpose.msra.mxu0 0
      %668 = vmatpush.bf16.xpose.msra.mxu0 0
      %669 = vmatpush.bf16.xpose.msra.mxu0 0
      %670 = vmatpush.bf16.xpose.msra.mxu0 %v661
      %671 = vmatmul.bf16.gmra.mxu0 %v658
      %v672 = vpop.f32.mrf.mxu0
      %v673 = vadd.f32 %v495, %v672
      %v674 = vpop.f32.mrf.mxu0
      %675 = vdwg.mxu0
      %v676 = vsel %vm499, %v673, -inf
      %677 = vmax.xlane.f32.xlu0 %v676
      %v678 = vpop.xlane.xlu0 %677
      %v679 = vsub.f32 %v673, %v678
      %v680 = vmul.f32 %v679, 1.442695
      %v681 = vpow.pop %v680
      %v682 = vsel %vm499, %v681, 0.0
      %683 = vadd.xlane.f32.xlu0 %v682
      %v684 = vpop.xlane.xlu0 %683
      %v685 = vrcp.pop %v684
      %v686 = vmul.f32 %v681, %v685
      %v687 = vpack.c.bf16 %v686, %v686
      %688 = vrot.lane.b32.xlu0 %v498, 80
      %v689 = vpop.permute.xlu0 %688
      %v691 = vsel %vm499, %v687, 0
      %v694 = vsel %vm537, %v689, 0
      %696 = vmatpush.bf16.msra.mxu0 0
      %697 = vmatpush.bf16.msra.mxu0 0
      %698 = vmatpush.bf16.msra.mxu0 0
      %699 = vmatpush.bf16.msra.mxu0 0
      %700 = vmatpush.bf16.msra.mxu0 0
      %701 = vmatpush.bf16.msra.mxu0 0
      %702 = vmatpush.bf16.msra.mxu0 0
      %703 = vmatpush.bf16.msra.mxu0 %v694
      %704 = vmatmul.bf16.gmra.mxu0 %v691
      %v705 = vpop.f32.mrf.mxu0
      %v706 = vadd.f32 0.0, %v705
      %v707 = vpop.f32.mrf.mxu0
      %708 = vdwg.mxu0
      %v709 = vpack.c.bf16 %v706, %v706
      %v710 = vld [vmem:[%s8 + $0x8] sm:$0xf]
      %v712 = vsel %vm499, %v709, 0
      %v715 = vsel %vm537, %v710, 0
      %717 = vmatpush.bf16.msra.mxu0 0
      %718 = vmatpush.bf16.msra.mxu0 0
      %719 = vmatpush.bf16.msra.mxu0 0
      %720 = vmatpush.bf16.msra.mxu0 0
      %721 = vmatpush.bf16.msra.mxu0 0
      %722 = vmatpush.bf16.msra.mxu0 0
      %723 = vmatpush.bf16.msra.mxu0 0
      %724 = vmatpush.bf16.msra.mxu0 %v715
      %725 = vmatmul.bf16.gmra.mxu0 %v712
      %v726 = vpop.f32.mrf.mxu0
      %v727 = vadd.f32 0.0, %v726
      %v728 = vpop.f32.mrf.mxu0
      %729 = vdwg.mxu0
      %v730 = vadd.f32 %v650, %v727
      %731 = vrot.lane.b32.xlu0 %v497, 104
      %v732 = vpop.permute.xlu0 %731
      %733 = vrot.lane.b32.xlu0 %v498, 104
      %v734 = vpop.permute.xlu0 %733
      %v736 = vsel %vm499, %v732, 0
      %v739 = vsel %vm499, %v734, 0
      %741 = vmatpush.bf16.xpose.msra.mxu0 0
      %742 = vmatpush.bf16.xpose.msra.mxu0 0
      %743 = vmatpush.bf16.xpose.msra.mxu0 0
      %744 = vmatpush.bf16.xpose.msra.mxu0 0
      %745 = vmatpush.bf16.xpose.msra.mxu0 0
      %746 = vmatpush.bf16.xpose.msra.mxu0 0
      %747 = vmatpush.bf16.xpose.msra.mxu0 0
      %748 = vmatpush.bf16.xpose.msra.mxu0 %v739
      %749 = vmatmul.bf16.gmra.mxu0 %v736
      %v750 = vpop.f32.mrf.mxu0
      %v751 = vadd.f32 %v495, %v750
      %v752 = vpop.f32.mrf.mxu0
      %753 = vdwg.mxu0
      %v754 = vsel %vm499, %v751, -inf
      %755 = vmax.xlane.f32.xlu0 %v754
      %v756 = vpop.xlane.xlu0 %755
      %v757 = vsub.f32 %v751, %v756
      %v758 = vmul.f32 %v757, 1.442695
      %v759 = vpow.pop %v758
      %v760 = vsel %vm499, %v759, 0.0
      %761 = vadd.xlane.f32.xlu0 %v760
      %v762 = vpop.xlane.xlu0 %761
      %v763 = vrcp.pop %v762
      %v764 = vmul.f32 %v759, %v763
      %v765 = vpack.c.bf16 %v764, %v764
      %766 = vrot.lane.b32.xlu0 %v498, 72
      %v767 = vpop.permute.xlu0 %766
      %v769 = vsel %vm499, %v765, 0
      %v772 = vsel %vm537, %v767, 0
      %774 = vmatpush.bf16.msra.mxu0 0
      %775 = vmatpush.bf16.msra.mxu0 0
      %776 = vmatpush.bf16.msra.mxu0 0
      %777 = vmatpush.bf16.msra.mxu0 0
      %778 = vmatpush.bf16.msra.mxu0 0
      %779 = vmatpush.bf16.msra.mxu0 0
      %780 = vmatpush.bf16.msra.mxu0 0
      %781 = vmatpush.bf16.msra.mxu0 %v772
      %782 = vmatmul.bf16.gmra.mxu0 %v769
      %v783 = vpop.f32.mrf.mxu0
      %v784 = vadd.f32 0.0, %v783
      %v785 = vpop.f32.mrf.mxu0
      %786 = vdwg.mxu0
      %v787 = vpack.c.bf16 %v784, %v784
      %v788 = vld [vmem:[%s8 + $0xc] sm:$0xf]
      %v790 = vsel %vm499, %v787, 0
      %v793 = vsel %vm537, %v788, 0
      %795 = vmatpush.bf16.msra.mxu0 0
      %796 = vmatpush.bf16.msra.mxu0 0
      %797 = vmatpush.bf16.msra.mxu0 0
      %798 = vmatpush.bf16.msra.mxu0 0
      %799 = vmatpush.bf16.msra.mxu0 0
      %800 = vmatpush.bf16.msra.mxu0 0
      %801 = vmatpush.bf16.msra.mxu0 0
      %802 = vmatpush.bf16.msra.mxu0 %v793
      %803 = vmatmul.bf16.gmra.mxu0 %v790
      %v804 = vpop.f32.mrf.mxu0
      %v805 = vadd.f32 0.0, %v804
      %v806 = vpop.f32.mrf.mxu0
      %807 = vdwg.mxu0
      %v808 = vadd.f32 %v730, %v805
      %v810 = vperm.slane %v496, 0
      %v812 = vadd.f32 %v808, %v810
      %v813 = vadd.f32 %v370, %v812
      %814 = vst.msk [vmem:[%s368] sm:$0xff] %vm373, %v813
      %p815 = scmp.lt.s32.totalorder %s21, 1
      %s816 = scalar_select %p815, %s21, 1
      %s817 = smul.addr %s816, 8
      %s818 = scalar_lea.vmem %s10, %s817
      // Predicated region
      $region61: #{decoder_forward.6} parent=59 // pred_check
        %p819 = pneg %p259
      $region62: #{decoder_forward.6} parent=59 // pred_check_branch
        %821 = sbr.rel (%p819) target = $region64
      $region63: #{decoder_forward.6} parent=59 // pred_region
        _
      $region64: #{decoder_forward.6} parent=59 // pred_fallthru
        _
    $region60: #{decoder_forward.6} parent=5 // pred_fallthru
      _
    %p822 = scmp.le.s32.totalorder 2, %s16
    // Predicated region
    $region65: #{decoder_forward.6} parent=5 // pred_check
      %p823 = pneg %p822
    $region66: #{decoder_forward.6} parent=5 // pred_check_branch
      %825 = sbr.rel (%p823) target = $region68
    $region67: #{decoder_forward.6} parent=5 // pred_region
      %s826 = ssub.s32 %s16, 2
      // Predicated region
      $region69: #{decoder_forward.6} parent=67 // pred_check
        %p827 = pneg %p265
      $region70: #{decoder_forward.6} parent=67 // pred_check_branch
        %829 = sbr.rel (%p827) target = $region72
      $region71: #{decoder_forward.6} parent=67 // pred_region
        %p830 = scmp.lt.s32.totalorder %s22, 1
        %s831 = scalar_select %p830, %s22, 1
        %s832 = smul.addr %s831, 8
        %s833 = scalar_lea.vmem %s10, %s832
      $region72: #{decoder_forward.6} parent=67 // pred_fallthru
        _
    $region68: #{decoder_forward.6} parent=5 // pred_fallthru
      _
  $region6: #{decoder_forward.6} parent=0 // loop_footer
    %s20 = sadd.s32 1, %s16
  $region7: #{decoder_forward.6} parent=0 // loop_footer_branch
    %15 = sbr.rel target = $region3
  $region8: #{decoder_forward.6} parent=0 // loop_exit
    _

// kernel: decoder_forward.10
$region0: #{decoder_forward.10}
  #allocation0 [shape = 'u32[]', space=smem, size = 0x4, offset = 0x4, fixed_abs, tag = 'smem constant byte address 0x4 - core index']
  #allocation1 [shape = 'u32[72,128]{1,0:T(1,128)}', space=vmem, size = 0x9000, scoped, tag = 'internal scratch']
  %s0 = inlined_call_operand.vmem [shape: f32[2,8,32], index: 0, kind: input, shape index: {}]
  %s1 = inlined_call_operand.vmem [shape: f32[2,8,32], index: 1, kind: input, shape index: {}]
  %s2 = inlined_call_operand.vmem [shape: f32[2,8,1], index: 2, kind: input, shape index: {}]
  %s3 = inlined_call_operand.vmem [shape: f32[2,1,8], index: 3, kind: input, shape index: {}]
  %s4 = inlined_call_operand.vmem [shape: f32[1,32], index: 4, kind: input, shape index: {}]
  %s5 = inlined_call_operand.vmem [shape: f32[1,32], index: 5, kind: input, shape index: {}]
  %s6 = inlined_call_operand.vmem [shape: bf16[32,32], index: 6, kind: input, shape index: {}]
  %s7 = inlined_call_operand.vmem [shape: f32[1,32], index: 7, kind: input, shape index: {}]
  %s8 = inlined_call_operand.vmem [shape: bf16[32,64], index: 8, kind: input, shape index: {}]
  %s9 = inlined_call_operand.vmem [shape: f32[1,64], index: 9, kind: input, shape index: {}]
  %s10 = inlined_call_operand.vmem [shape: bf16[32,32], index: 10, kind: input, shape index: {}]
  %s11 = inlined_call_operand.hbm [shape: f32[1,32], index: 11, kind: input, shape index: {}]
  %s12 = inlined_call_operand.vmem [shape: f32[2,8,32], index: 12, kind: output, shape index: {}]
  %s13 = sld [smem:[#allocation0]]
  $region85: #{decoder_forward.10} parent=0
    _
  %s15 = ssub.s32 1, %s13
  %s16 = scalar_select 0, %s15, %s13
  $region1: #{decoder_forward.10} parent=0
    #allocation2 [shape = 'u8[512]{0}', space=vmem, size = 0x400, scoped, tag = 'input window, operand 11, single buffered']
    #allocation3 [shape = 's32[2]{0}', space=sflag, size = 0x8, scoped, tag = 'scoped memory for decoder_forward.10']
    %17 = vsyncpa [#allocation3], 0
    loop: start=0, step=1, limit=4
    $region2: #{decoder_forward.10} parent=1 // loop_pre_header
      _
    $region3: #{decoder_forward.10} parent=1 // loop_header
      %s19 = sphi 0, %s23
      %p20 = scmp.ge.s32.totalorder %s19, 4
      %s29 = sphi 0, %s31
      %s32 = sphi 0, %s29
      %s33 = sphi 0, %s32
      %s49 = sphi 0, %s33
      %s55 = sphi 0, %s57
      %s58 = sphi 0, %s55
      %s59 = sphi 0, %s58
      %s75 = sphi 0, %s59
      %s81 = sphi 0, %s83
      %s84 = sphi 0, %s81
      %s85 = sphi 0, %s84
      %s101 = sphi 0, %s85
      %s107 = sphi 0, %s109
      %s110 = sphi 0, %s107
      %s111 = sphi 0, %s110
      %s127 = sphi 0, %s111
      %s131 = sphi 0, %s131
      %s133 = sphi 0, %s131
      %s134 = sphi 0, %s133
      %s148 = sphi 0, %s134
      %s152 = sphi 0, %s152
      %s154 = sphi 0, %s152
      %s155 = sphi 0, %s154
      %s169 = sphi 0, %s155
      %s173 = sphi 0, %s173
      %s175 = sphi 0, %s173
      %s176 = sphi 0, %s175
      %s190 = sphi 0, %s176
      %s194 = sphi 0, %s194
      %s196 = sphi 0, %s194
      %s197 = sphi 0, %s196
      %s211 = sphi 0, %s197
      %s215 = sphi 0, %s215
      %s217 = sphi 0, %s215
      %s218 = sphi 0, %s217
      %s232 = sphi 0, %s218
      %s236 = sphi 0, %s236
      %s238 = sphi 0, %s236
      %s239 = sphi 0, %s238
      %s253 = sphi 0, %s239
      %s257 = sphi 0, %s257
      %s259 = sphi 0, %s257
      %s260 = sphi 0, %s259
      %s274 = sphi 0, %s260
      %s278 = sphi 0, %s278
      %s280 = sphi 0, %s278
      %s281 = sphi 0, %s280
      %s295 = sphi 0, %s281
      %s301 = sphi 0, %s303
      %s304 = sphi 0, %s301
      %s305 = sphi 0, %s304
      %s321 = sphi 0, %s305
    $region4: #{decoder_forward.10} parent=1 // loop_header_branch
      %22 = sbr.rel (%p20) target = $region8
    $region5: #{decoder_forward.10} parent=1 // loop_body
      %s24 = ssub.s32 %s19, 1
      %s25 = ssub.s32 %s19, 2
      %s26 = sadd.s32 %s19, 1
      %s27 = ssub.s32 %s19, %s26
      %p28 = scmp.eq.s32.totalorder %s27, 0
      %s30 = sadd.s32 %s29, 1
      %s31 = scalar_select %p28, %s29, %s30
      %p34 = pneg %p28
      %p35 = scmp.eq.s32.totalorder %s19, 1
      %p36 = por %p34, %p35
      %p37 = scmp.ne.s32.totalorder %s29, %s32
      %p38 = scmp.eq.s32.totalorder %s19, 0
      %p39 = por %p37, %p38
      %p40 = scmp.ne.s32.totalorder %s29, %s32
      %p41 = scmp.eq.s32.totalorder %s24, 1
      %p42 = por %p40, %p41
      %p43 = scmp.ne.s32.totalorder %s32, %s33
      %p44 = scmp.eq.s32.totalorder %s24, 0
      %p45 = por %p43, %p44
      %p46 = scmp.ne.s32.totalorder %s32, %s33
      %p47 = scmp.eq.s32.totalorder %s25, 1
      %p48 = por %p46, %p47
      %p50 = scmp.ne.s32.totalorder %s33, %s49
      %p51 = scmp.eq.s32.totalorder %s25, 0
      %p52 = por %p50, %p51
      %s53 = ssub.s32 %s19, %s26
      %p54 = scmp.eq.s32.totalorder %s53, 0
      %s56 = sadd.s32 %s55, 1
      %s57 = scalar_select %p54, %s55, %s56
      %p60 = pneg %p54
      %p61 = scmp.eq.s32.totalorder %s19, 1
      %p62 = por %p60, %p61
      %p63 = scmp.ne.s32.totalorder %s55, %s58
      %p64 = scmp.eq.s32.totalorder %s19, 0
      %p65 = por %p63, %p64
      %p66 = scmp.ne.s32.totalorder %s55, %s58
      %p67 = scmp.eq.s32.totalorder %s24, 1
      %p68 = por %p66, %p67
      %p69 = scmp.ne.s32.totalorder %s58, %s59
      %p70 = scmp.eq.s32.totalorder %s24, 0
      %p71 = por %p69, %p70
      %p72 = scmp.ne.s32.totalorder %s58, %s59
      %p73 = scmp.eq.s32.totalorder %s25, 1
      %p74 = por %p72, %p73
      %p76 = scmp.ne.s32.totalorder %s59, %s75
      %p77 = scmp.eq.s32.totalorder %s25, 0
      %p78 = por %p76, %p77
      %s79 = ssub.s32 %s19, %s26
      %p80 = scmp.eq.s32.totalorder %s79, 0
      %s82 = sadd.s32 %s81, 1
      %s83 = scalar_select %p80, %s81, %s82
      %p86 = pneg %p80
      %p87 = scmp.eq.s32.totalorder %s19, 1
      %p88 = por %p86, %p87
      %p89 = scmp.ne.s32.totalorder %s81, %s84
      %p90 = scmp.eq.s32.totalorder %s19, 0
      %p91 = por %p89, %p90
      %p92 = scmp.ne.s32.totalorder %s81, %s84
      %p93 = scmp.eq.s32.totalorder %s24, 1
      %p94 = por %p92, %p93
      %p95 = scmp.ne.s32.totalorder %s84, %s85
      %p96 = scmp.eq.s32.totalorder %s24, 0
      %p97 = por %p95, %p96
      %p98 = scmp.ne.s32.totalorder %s84, %s85
      %p99 = scmp.eq.s32.totalorder %s25, 1
      %p100 = por %p98, %p99
      %p102 = scmp.ne.s32.totalorder %s85, %s101
      %p103 = scmp.eq.s32.totalorder %s25, 0
      %p104 = por %p102, %p103
      %s105 = ssub.s32 %s19, %s26
      %p106 = scmp.eq.s32.totalorder %s105, 0
      %s108 = sadd.s32 %s107, 1
      %s109 = scalar_select %p106, %s107, %s108
      %p112 = pneg %p106
      %p113 = scmp.eq.s32.totalorder %s19, 1
      %p114 = por %p112, %p113
      %p115 = scmp.ne.s32.totalorder %s107, %s110
      %p116 = scmp.eq.s32.totalorder %s19, 0
      %p117 = por %p115, %p116
      %p118 = scmp.ne.s32.totalorder %s107, %s110
      %p119 = scmp.eq.s32.totalorder %s24, 1
      %p120 = por %p118, %p119
      %p121 = scmp.ne.s32.totalorder %s110, %s111
      %p122 = scmp.eq.s32.totalorder %s24, 0
      %p123 = por %p121, %p122
      %p124 = scmp.ne.s32.totalorder %s110, %s111
      %p125 = scmp.eq.s32.totalorder %s25, 1
      %p126 = por %p124, %p125
      %p128 = scmp.ne.s32.totalorder %s111, %s127
      %p129 = scmp.eq.s32.totalorder %s25, 0
      %p130 = por %p128, %p129
      %s132 = sadd.s32 %s131, 1
      %p135 = scmp.eq.s32.totalorder %s19, 1
      %p136 = scmp.ne.s32.totalorder %s131, %s133
      %p137 = scmp.eq.s32.totalorder %s19, 0
      %p138 = por %p136, %p137
      %p139 = scmp.ne.s32.totalorder %s131, %s133
      %p140 = scmp.eq.s32.totalorder %s24, 1
      %p141 = por %p139, %p140
      %p142 = scmp.ne.s32.totalorder %s133, %s134
      %p143 = scmp.eq.s32.totalorder %s24, 0
      %p144 = por %p142, %p143
      %p145 = scmp.ne.s32.totalorder %s133, %s134
      %p146 = scmp.eq.s32.totalorder %s25, 1
      %p147 = por %p145, %p146
      %p149 = scmp.ne.s32.totalorder %s134, %s148
      %p150 = scmp.eq.s32.totalorder %s25, 0
      %p151 = por %p149, %p150
      %s153 = sadd.s32 %s152, 1
      %p156 = scmp.eq.s32.totalorder %s19, 1
      %p157 = scmp.ne.s32.totalorder %s152, %s154
      %p158 = scmp.eq.s32.totalorder %s19, 0
      %p159 = por %p157, %p158
      %p160 = scmp.ne.s32.totalorder %s152, %s154
      %p161 = scmp.eq.s32.totalorder %s24, 1
      %p162 = por %p160, %p161
      %p163 = scmp.ne.s32.totalorder %s154, %s155
      %p164 = scmp.eq.s32.totalorder %s24, 0
      %p165 = por %p163, %p164
      %p166 = scmp.ne.s32.totalorder %s154, %s155
      %p167 = scmp.eq.s32.totalorder %s25, 1
      %p168 = por %p166, %p167
      %p170 = scmp.ne.s32.totalorder %s155, %s169
      %p171 = scmp.eq.s32.totalorder %s25, 0
      %p172 = por %p170, %p171
      %s174 = sadd.s32 %s173, 1
      %p177 = scmp.eq.s32.totalorder %s19, 1
      %p178 = scmp.ne.s32.totalorder %s173, %s175
      %p179 = scmp.eq.s32.totalorder %s19, 0
      %p180 = por %p178, %p179
      %p181 = scmp.ne.s32.totalorder %s173, %s175
      %p182 = scmp.eq.s32.totalorder %s24, 1
      %p183 = por %p181, %p182
      %p184 = scmp.ne.s32.totalorder %s175, %s176
      %p185 = scmp.eq.s32.totalorder %s24, 0
      %p186 = por %p184, %p185
      %p187 = scmp.ne.s32.totalorder %s175, %s176
      %p188 = scmp.eq.s32.totalorder %s25, 1
      %p189 = por %p187, %p188
      %p191 = scmp.ne.s32.totalorder %s176, %s190
      %p192 = scmp.eq.s32.totalorder %s25, 0
      %p193 = por %p191, %p192
      %s195 = sadd.s32 %s194, 1
      %p198 = scmp.eq.s32.totalorder %s19, 1
      %p199 = scmp.ne.s32.totalorder %s194, %s196
      %p200 = scmp.eq.s32.totalorder %s19, 0
      %p201 = por %p199, %p200
      %p202 = scmp.ne.s32.totalorder %s194, %s196
      %p203 = scmp.eq.s32.totalorder %s24, 1
      %p204 = por %p202, %p203
      %p205 = scmp.ne.s32.totalorder %s196, %s197
      %p206 = scmp.eq.s32.totalorder %s24, 0
      %p207 = por %p205, %p206
      %p208 = scmp.ne.s32.totalorder %s196, %s197
      %p209 = scmp.eq.s32.totalorder %s25, 1
      %p210 = por %p208, %p209
      %p212 = scmp.ne.s32.totalorder %s197, %s211
      %p213 = scmp.eq.s32.totalorder %s25, 0
      %p214 = por %p212, %p213
      %s216 = sadd.s32 %s215, 1
      %p219 = scmp.eq.s32.totalorder %s19, 1
      %p220 = scmp.ne.s32.totalorder %s215, %s217
      %p221 = scmp.eq.s32.totalorder %s19, 0
      %p222 = por %p220, %p221
      %p223 = scmp.ne.s32.totalorder %s215, %s217
      %p224 = scmp.eq.s32.totalorder %s24, 1
      %p225 = por %p223, %p224
      %p226 = scmp.ne.s32.totalorder %s217, %s218
      %p227 = scmp.eq.s32.totalorder %s24, 0
      %p228 = por %p226, %p227
      %p229 = scmp.ne.s32.totalorder %s217, %s218
      %p230 = scmp.eq.s32.totalorder %s25, 1
      %p231 = por %p229, %p230
      %p233 = scmp.ne.s32.totalorder %s218, %s232
      %p234 = scmp.eq.s32.totalorder %s25, 0
      %p235 = por %p233, %p234
      %s237 = sadd.s32 %s236, 1
      %p240 = scmp.eq.s32.totalorder %s19, 1
      %p241 = scmp.ne.s32.totalorder %s236, %s238
      %p242 = scmp.eq.s32.totalorder %s19, 0
      %p243 = por %p241, %p242
      %p244 = scmp.ne.s32.totalorder %s236, %s238
      %p245 = scmp.eq.s32.totalorder %s24, 1
      %p246 = por %p244, %p245
      %p247 = scmp.ne.s32.totalorder %s238, %s239
      %p248 = scmp.eq.s32.totalorder %s24, 0
      %p249 = por %p247, %p248
      %p250 = scmp.ne.s32.totalorder %s238, %s239
      %p251 = scmp.eq.s32.totalorder %s25, 1
      %p252 = por %p250, %p251
      %p254 = scmp.ne.s32.totalorder %s239, %s253
      %p255 = scmp.eq.s32.totalorder %s25, 0
      %p256 = por %p254, %p255
      %s258 = sadd.s32 %s257, 1
      %p261 = scmp.eq.s32.totalorder %s19, 1
      %p262 = scmp.ne.s32.totalorder %s257, %s259
      %p263 = scmp.eq.s32.totalorder %s19, 0
      %p264 = por %p262, %p263
      %p265 = scmp.ne.s32.totalorder %s257, %s259
      %p266 = scmp.eq.s32.totalorder %s24, 1
      %p267 = por %p265, %p266
      %p268 = scmp.ne.s32.totalorder %s259, %s260
      %p269 = scmp.eq.s32.totalorder %s24, 0
      %p270 = por %p268, %p269
      %p271 = scmp.ne.s32.totalorder %s259, %s260
      %p272 = scmp.eq.s32.totalorder %s25, 1
      %p273 = por %p271, %p272
      %p275 = scmp.ne.s32.totalorder %s260, %s274
      %p276 = scmp.eq.s32.totalorder %s25, 0
      %p277 = por %p275, %p276
      %s279 = sadd.s32 %s278, 1
      %p282 = scmp.eq.s32.totalorder %s19, 1
      %p283 = scmp.ne.s32.totalorder %s278, %s280
      %p284 = scmp.eq.s32.totalorder %s19, 0
      %p285 = por %p283, %p284
      %p286 = scmp.ne.s32.totalorder %s278, %s280
      %p287 = scmp.eq.s32.totalorder %s24, 1
      %p288 = por %p286, %p287
      %p289 = scmp.ne.s32.totalorder %s280, %s281
      %p290 = scmp.eq.s32.totalorder %s24, 0
      %p291 = por %p289, %p290
      %p292 = scmp.ne.s32.totalorder %s280, %s281
      %p293 = scmp.eq.s32.totalorder %s25, 1
      %p294 = por %p292, %p293
      %p296 = scmp.ne.s32.totalorder %s281, %s295
      %p297 = scmp.eq.s32.totalorder %s25, 0
      %p298 = por %p296, %p297
      %s299 = ssub.s32 %s19, %s26
      %p300 = scmp.eq.s32.totalorder %s299, 0
      %s302 = sadd.s32 %s301, 1
      %s303 = scalar_select %p300, %s301, %s302
      %p306 = pneg %p300
      %p307 = scmp.eq.s32.totalorder %s19, 1
      %p308 = por %p306, %p307
      %p309 = scmp.ne.s32.totalorder %s301, %s304
      %p310 = scmp.eq.s32.totalorder %s19, 0
      %p311 = por %p309, %p310
      %p312 = scmp.ne.s32.totalorder %s301, %s304
      %p313 = scmp.eq.s32.totalorder %s24, 1
      %p314 = por %p312, %p313
      %p315 = scmp.ne.s32.totalorder %s304, %s305
      %p316 = scmp.eq.s32.totalorder %s24, 0
      %p317 = por %p315, %p316
      %p318 = scmp.ne.s32.totalorder %s304, %s305
      %p319 = scmp.eq.s32.totalorder %s25, 1
      %p320 = por %p318, %p319
      %p322 = scmp.ne.s32.totalorder %s305, %s321
      %p323 = scmp.eq.s32.totalorder %s25, 0
      %p324 = por %p322, %p323
      %p325 = scmp.le.s32.totalorder 1, %s19
      %p326 = scmp.lt.s32.totalorder %s19, 3
      %p327 = pnand %p325, %p326
      %p328 = pneg %p327
      // Predicated region
      $region9: #{decoder_forward.10} parent=5 // pred_check
        _
      $region10: #{decoder_forward.10} parent=5 // pred_check_branch
        %330 = sbr.rel (%p327) target = $region12
      $region11: #{decoder_forward.10} parent=5 // pred_region
        %s331 = ssub.s32 %s19, 1
        // Predicated region
        $region13: #{decoder_forward.10} parent=11 // pred_check
          %p332 = pneg %p144
        $region14: #{decoder_forward.10} parent=11 // pred_check_branch
          %334 = sbr.rel (%p332) target = $region16
        $region15: #{decoder_forward.10} parent=11 // pred_region
          _
        $region16: #{decoder_forward.10} parent=11 // pred_fallthru
          _
        // Predicated region
        $region17: #{decoder_forward.10} parent=11 // pred_check
          %p335 = pneg %p165
        $region18: #{decoder_forward.10} parent=11 // pred_check_branch
          %337 = sbr.rel (%p335) target = $region20
        $region19: #{decoder_forward.10} parent=11 // pred_region
          _
        $region20: #{decoder_forward.10} parent=11 // pred_fallthru
          _
        // Predicated region
        $region21: #{decoder_forward.10} parent=11 // pred_check
          %p338 = pneg %p186
        $region22: #{decoder_forward.10} parent=11 // pred_check_branch
          %340 = sbr.rel (%p338) target = $region24
        $region23: #{decoder_forward.10} parent=11 // pred_region
          _
        $region24: #{decoder_forward.10} parent=11 // pred_fallthru
          _
        // Predicated region
        $region25: #{decoder_forward.10} parent=11 // pred_check
          %p341 = pneg %p207
        $region26: #{decoder_forward.10} parent=11 // pred_check_branch
          %343 = sbr.rel (%p341) target = $region28
        $region27: #{decoder_forward.10} parent=11 // pred_region
          _
        $region28: #{decoder_forward.10} parent=11 // pred_fallthru
          _
        // Predicated region
        $region29: #{decoder_forward.10} parent=11 // pred_check
          %p344 = pneg %p228
        $region30: #{decoder_forward.10} parent=11 // pred_check_branch
          %346 = sbr.rel (%p344) target = $region32
        $region31: #{decoder_forward.10} parent=11 // pred_region
          _
        $region32: #{decoder_forward.10} parent=11 // pred_fallthru
          _
        // Predicated region
        $region33: #{decoder_forward.10} parent=11 // pred_check
          %p347 = pneg %p249
        $region34: #{decoder_forward.10} parent=11 // pred_check_branch
          %349 = sbr.rel (%p347) target = $region36
        $region35: #{decoder_forward.10} parent=11 // pred_region
          _
        $region36: #{decoder_forward.10} parent=11 // pred_fallthru
          _
        // Predicated region
        $region37: #{decoder_forward.10} parent=11 // pred_check
          %p350 = pneg %p270
        $region38: #{decoder_forward.10} parent=11 // pred_check_branch
          %352 = sbr.rel (%p350) target = $region40
        $region39: #{decoder_forward.10} parent=11 // pred_region
          _
        $region40: #{decoder_forward.10} parent=11 // pred_fallthru
          _
        // Predicated region
        $region41: #{decoder_forward.10} parent=11 // pred_check
          %p353 = pneg %p291
        $region42: #{decoder_forward.10} parent=11 // pred_check_branch
          %355 = sbr.rel (%p353) target = $region44
        $region43: #{decoder_forward.10} parent=11 // pred_region
          %357 = vsyncadd [#allocation3], 0
          %s359 = sshll.u32 %s11, 4
          %s360 = int_to_ptr.hbm [resolvable:$true] %s359
          %s361 = sshll.u32 [#allocation2], 4
          %s362 = int_to_ptr.vmem [resolvable:$true] %s361
          %364 = dma.hbm_to_vmem [thread:$0]  %s360, 16, %s362, [#allocation3]
        $region44: #{decoder_forward.10} parent=11 // pred_fallthru
          _
      $region12: #{decoder_forward.10} parent=5 // pred_fallthru
        _
      %p365 = scmp.lt.s32.totalorder %s19, 2
      // Predicated region
      $region45: #{decoder_forward.10} parent=5 // pred_check
        %p366 = pneg %p365
      $region46: #{decoder_forward.10} parent=5 // pred_check_branch
        %368 = sbr.rel (%p366) target = $region48
      $region47: #{decoder_forward.10} parent=5 // pred_region
        // Predicated region
        $region49: #{decoder_forward.10} parent=47 // pred_check
          %p369 = pneg %p39
        $region50: #{decoder_forward.10} parent=47 // pred_check_branch
          %371 = sbr.rel (%p369) target = $region52
        $region51: #{decoder_forward.10} parent=47 // pred_region
          %p372 = scmp.lt.s32.totalorder %s19, 1
          %s373 = scalar_select %p372, %s19, 1
          %s374 = smul.addr %s373, 8
          %s375 = scalar_lea.vmem %s0, %s374
        $region52: #{decoder_forward.10} parent=47 // pred_fallthru
          _
        // Predicated region
        $region53: #{decoder_forward.10} parent=47 // pred_check
          %p376 = pneg %p65
        $region54: #{decoder_forward.10} parent=47 // pred_check_branch
          %378 = sbr.rel (%p376) target = $region56
        $region55: #{decoder_forward.10} parent=47 // pred_region
          %p379 = scmp.lt.s32.totalorder %s19, 1
          %s380 = scalar_select %p379, %s19, 1
          %s381 = smul.addr %s380, 8
          %s382 = scalar_lea.vmem %s1, %s381
        $region56: #{decoder_forward.10} parent=47 // pred_fallthru
          _
        // Predicated region
        $region57: #{decoder_forward.10} parent=47 // pred_check
          %p383 = pneg %p91
        $region58: #{decoder_forward.10} parent=47 // pred_check_branch
          %385 = sbr.rel (%p383) target = $region60
        $region59: #{decoder_forward.10} parent=47 // pred_region
          %p386 = scmp.lt.s32.totalorder %s19, 1
          %s387 = scalar_select %p386, %s19, 1
          %s388 = smul.addr %s387, 8
          %s389 = scalar_lea.vmem %s2, %s388
        $region60: #{decoder_forward.10} parent=47 // pred_fallthru
          _
        // Predicated region
        $region61: #{decoder_forward.10} parent=47 // pred_check
          %p390 = pneg %p117
        $region62: #{decoder_forward.10} parent=47 // pred_check_branch
          %392 = sbr.rel (%p390) target = $region64
        $region63: #{decoder_forward.10} parent=47 // pred_region
          %p393 = scmp.lt.s32.totalorder %s19, 1
          %s394 = scalar_select %p393, %s19, 1
          %s395 = scalar_lea.vmem %s3, %s394
        $region64: #{decoder_forward.10} parent=47 // pred_fallthru
          _
      $region48: #{decoder_forward.10} parent=5 // pred_fallthru
        _
      %p396 = scmp.le.s32.totalorder 1, %s19
      %p397 = scmp.lt.s32.totalorder %s19, 3
      %p398 = pnand %p396, %p397
      %p399 = pneg %p398
      // Predicated region
      $region65: #{decoder_forward.10} parent=5 // pred_check
        _
      $region66: #{decoder_forward.10} parent=5 // pred_check_branch
        %401 = sbr.rel (%p398) target = $region68
      $region67: #{decoder_forward.10} parent=5 // pred_region
        %s402 = ssub.s32 %s19, 1
        // Predicated region
        $region69: #{decoder_forward.10} parent=67 // pred_check
          %p403 = pneg %p291
        $region70: #{decoder_forward.10} parent=67 // pred_check_branch
          %405 = sbr.rel (%p403) target = $region72
        $region71: #{decoder_forward.10} parent=67 // pred_region
          %407 = dma.done [#allocation3], 16
        $region72: #{decoder_forward.10} parent=67 // pred_fallthru
          _
        %p408 = scmp.lt.s32.totalorder %s24, 1
        %s409 = scalar_select %p408, %s24, 1
        %s410 = smul.addr %s409, 8
        %s411 = scalar_lea.vmem %s0, %s410
        %p412 = pneg %p45
        %p413 = pneg %p42
        %p414 = scmp.lt.s32.totalorder %s24, 1
        %s415 = scalar_select %p414, %s24, 1
        %s416 = smul.addr %s415, 8
        %s417 = scalar_lea.vmem %s1, %s416
        %p418 = pneg %p71
        %p419 = pneg %p68
        %p420 = scmp.lt.s32.totalorder %s24, 1
        %s421 = scalar_select %p420, %s24, 1
        %s422 = smul.addr %s421, 8
        %s423 = scalar_lea.vmem %s2, %s422
        %p424 = pneg %p97
        %p425 = pneg %p94
        %p426 = scmp.lt.s32.totalorder %s24, 1
        %s427 = scalar_select %p426, %s24, 1
        %s428 = scalar_lea.vmem %s3, %s427
        %p429 = pneg %p123
        %p430 = pneg %p120
        %p431 = pneg %p144
        %p432 = pneg %p141
        %p433 = pneg %p165
        %p434 = pneg %p162
        %p435 = pneg %p186
        %p436 = pneg %p183
        %p437 = pneg %p207
        %p438 = pneg %p204
        %p439 = pneg %p228
        %p440 = pneg %p225
        %p441 = pneg %p249
        %p442 = pneg %p246
        %p443 = pneg %p270
        %p444 = pneg %p267
        %p445 = pneg %p291
        %p446 = pneg %p288
        %p447 = pneg %p317
        %p448 = pneg %p314
        %p449 = scmp.lt.s32.totalorder %s24, 1
        %s450 = scalar_select %p449, %s24, 1
        %s451 = smul.addr %s450, 8
        %s452 = scalar_lea.vmem %s12, %s451
        %p453 = scmp.lt.s32.totalorder %s24, 1
        %s454 = scalar_select %p453, %s24, 1
        %s455 = smul.addr %s454, 8
        %s456 = scalar_lea.vmem %s0, %s455
        %p457 = scmp.lt.s32.totalorder %s24, 1
        %s458 = scalar_select %p457, %s24, 1
        %s459 = smul.addr %s458, 8
        %s460 = scalar_lea.vmem %s1, %s459
        %p461 = scmp.lt.s32.totalorder %s24, 1
        %s462 = scalar_select %p461, %s24, 1
        %s463 = smul.addr %s462, 8
        %s464 = scalar_lea.vmem %s2, %s463
        %p465 = scmp.lt.s32.totalorder %s24, 1
        %s466 = scalar_select %p465, %s24, 1
        %s467 = scalar_lea.vmem %s3, %s466
        %p468 = scmp.lt.s32.totalorder %s24, 1
        %s469 = scalar_select %p468, %s24, 1
        %s470 = smul.addr %s469, 8
        %s471 = scalar_lea.vmem %s12, %s470
        %v473 = vld [vmem:[%s456] sm:$0xff]
        %v474 = vld [vmem:[%s4] sm:$0x1]
        %v475 = vld [vmem:[%s5] sm:$0x1]
        %vm476 = vcmask 261120
        %v477 = vsel %vm476, %v473, 0.0
        %478 = vadd.xlane.f32.xlu0 %v477
        %v479 = vpop.xlane.xlu0 %478
        %v480 = vrcp.pop 32.0
        %v481 = vmul.f32 32.0, %v480
        %v482 = vsub.f32 1.0, %v481
        %v483 = vmul.f32 %v480, %v482
        %v484 = vadd.f32 %v480, %v483
        %vm485 = vweird.f32 %v480
        %v486 = vsel %vm485, %v480, %v484
        %v487 = vmul.f32 %v479, %v486
        %v488 = vsub.f32 %v473, %v487
        %v489 = vmul.f32 %v488, %v488
        %v490 = vsel %vm476, %v489, 0.0
        %491 = vadd.xlane.f32.xlu0 %v490
        %v492 = vpop.xlane.xlu0 %491
        %v493 = vmul.f32 %v492, %v486
        %v494 = vadd.f32 %v493, 1e-05
        %v495 = vrsqrt.pop %v494
        %v496 = vmul.f32 %v495, %v494
        %v497 = vmul.f32 %v496, %v495
        %v498 = vmul.f32 0.5, %v497
        %v499 = vsub.f32 1.5, %v498
        %v500 = vmul.f32 %v495, %v499
        %vm501 = vweird.f32 %v494
        %vm502 = vweird.f32 %v495
        %vm503 = vmor %vm501, %vm502
        %v504 = vsel %vm503, %v495, %v500
        %v505 = vmul.f32 %v488, %v504
        %v507 = vperm.slane %v474, 0
        %v509 = vmul.f32 %v505, %v507
        %v511 = vperm.slane %v475, 0
        %v513 = vadd.f32 %v509, %v511
        %v514 = vpack.c.bf16 %v513, %v513
        %v515 = vld [vmem:[%s6] sm:$0xf]
        %v516 = vld [vmem:[%s6 + $0x4] sm:$0xf]
        %v517 = vld [vmem:[%s6 + $0x8] sm:$0xf]
        %v518 = vld [vmem:[%s6 + $0xc] sm:$0xf]
        %v519 = vld [vmem:[%s7] sm:$0x1]
        %v521 = vperm.slane %v519, 0
        %v527 = vunpack.c.l.b16 %v515
        %v528 = vunpack.c.l.b16 %v516
        %v529 = vunpack.c.l.b16 %v517
        %v530 = vunpack.c.l.b16 %v518
        %v531 = vpack.c.b16 %v528, %v527
        %v532 = vpack.c.b16 %v530, %v529
        %v536 = vsel %vm476, %v514, 0
        %538 = vmatpush.bf16.msra.mxu0 0
        %539 = vmatpush.bf16.msra.mxu0 0
        %540 = vmatpush.bf16.msra.mxu0 0
        %541 = vmatpush.bf16.msra.mxu0 0
        %542 = vmatpush.bf16.msra.mxu0 0
        %543 = vmatpush.bf16.msra.mxu0 0
        %544 = vmatpush.bf16.msra.mxu0 %v532
        %545 = vmatpush.bf16.msra.mxu0 %v531
        %546 = vmatmul.bf16.gmra.mxu0 %v536
        %v547 = vpop.f32.mrf.mxu0
        %v548 = vadd.f32 %v521, %v547
        %v549 = vpop.f32.mrf.mxu0
        %550 = vdwg.mxu0
        %v551 = vmul.f32 %v548, 0.35355338
        %v552 = vld [vmem:[%s460] sm:$0xff]
        %v553 = vpack.c.bf16 %v552, %v552
        %v554 = vld [vmem:[%s8] sm:$0xf]
        %v555 = vld [vmem:[%s8 + $0x4] sm:$0xf]
        %v556 = vld [vmem:[%s8 + $0x8] sm:$0xf]
        %v557 = vld [vmem:[%s8 + $0xc] sm:$0xf]
        %v558 = vld [vmem:[%s9] sm:$0x1]
        %v560 = vperm.slane %v558, 0
        %v566 = vunpack.c.l.b16 %v554
        %v567 = vunpack.c.l.b16 %v555
        %v568 = vunpack.c.l.b16 %v556
        %v569 = vunpack.c.l.b16 %v557
        %v570 = vpack.c.b16 %v567, %v566
        %v571 = vpack.c.b16 %v569, %v568
        %v575 = vsel %vm476, %v553, 0
        %577 = vmatpush.bf16.msra.mxu0 0
        %578 = vmatpush.bf16.msra.mxu0 0
        %579 = vmatpush.bf16.msra.mxu0 0
        %580 = vmatpush.bf16.msra.mxu0 0
        %581 = vmatpush.bf16.msra.mxu0 0
        %582 = vmatpush.bf16.msra.mxu0 0
        %583 = vmatpush.bf16.msra.mxu0 %v571
        %584 = vmatpush.bf16.msra.mxu0 %v570
        %585 = vmatmul.bf16.gmra.mxu0 %v575
        %v586 = vpop.f32.mrf.mxu0
        %v587 = vadd.f32 %v560, %v586
        %v588 = vpop.f32.mrf.mxu0
        %589 = vdwg.mxu0
        %v590 = vld [vmem:[%s464] sm:$0xff]
        %v591 = vld [vmem:[%s467] sm:$0x1]
        %593 = vset.pattern.permute.xlu0 0
        %594 = vperm.xlu0 %593, %v590
        %v595 = vpop.permute.xlu0 %594
        %v598 = vperm.slane %v591, 0
        %v600 = vmul.f32 %v595, %v598
        %v601 = vsub.f32 %v600, 1.0
        %v602 = vmul.f32 %v601, 1e+09
        %v603 = vld [vmem:[#allocation2] sm:$0x1]
        %v604 = vpack.c.bf16 %v551, %v551
        %v605 = vpack.c.bf16 %v587, %v587
        %vm606 = vcmask 64512
        %v608 = vsel %vm606, %v604, 0
        %v611 = vsel %vm606, %v605, 0
        %613 = vmatpush.bf16.xpose.msra.mxu0 0
        %614 = vmatpush.bf16.xpose.msra.mxu0 0
        %615 = vmatpush.bf16.xpose.msra.mxu0 0
        %616 = vmatpush.bf16.xpose.msra.mxu0 0
        %617 = vmatpush.bf16.xpose.msra.mxu0 0
        %618 = vmatpush.bf16.xpose.msra.mxu0 0
        %619 = vmatpush.bf16.xpose.msra.mxu0 0
        %620 = vmatpush.bf16.xpose.msra.mxu0 %v611
        %621 = vmatmul.bf16.gmra.mxu0 %v608
        %v622 = vpop.f32.mrf.mxu0
        %v623 = vadd.f32 %v602, %v622
        %v624 = vpop.f32.mrf.mxu0
        %625 = vdwg.mxu0
        %v626 = vsel %vm606, %v623, -inf
        %627 = vmax.xlane.f32.xlu0 %v626
        %v628 = vpop.xlane.xlu0 %627
        %v629 = vsub.f32 %v623, %v628
        %v630 = vmul.f32 %v629, 1.442695
        %v631 = vpow.pop %v630
        %v632 = vsel %vm606, %v631, 0.0
        %633 = vadd.xlane.f32.xlu0 %v632
        %v634 = vpop.xlane.xlu0 %633
        %v635 = vrcp.pop %v634
        %v636 = vmul.f32 %v631, %v635
        %v637 = vpack.c.bf16 %v636, %v636
        %639 = vrot.lane.b32.xlu0 %v605, 96
        %v640 = vpop.permute.xlu0 %639
        %v642 = vsel %vm606, %v637, 0
        %vm644 = vcmask 1043456
        %v646 = vsel %vm644, %v640, 0
        %648 = vmatpush.bf16.msra.mxu0 0
        %649 = vmatpush.bf16.msra.mxu0 0
        %650 = vmatpush.bf16.msra.mxu0 0
        %651 = vmatpush.bf16.msra.mxu0 0
        %652 = vmatpush.bf16.msra.mxu0 0
        %653 = vmatpush.bf16.msra.mxu0 0
        %654 = vmatpush.bf16.msra.mxu0 0
        %655 = vmatpush.bf16.msra.mxu0 %v646
        %656 = vmatmul.bf16.gmra.mxu0 %v642
        %v657 = vpop.f32.mrf.mxu0
        %v658 = vadd.f32 0.0, %v657
        %v659 = vpop.f32.mrf.mxu0
        %660 = vdwg.mxu0
        %v661 = vpack.c.bf16 %v658, %v658
        %v662 = vld [vmem:[%s10] sm:$0xf]
        %664 = vrot.lane.b32.xlu0 %v604, 120
        %v665 = vpop.permute.xlu0 %664
        %666 = vrot.lane.b32.xlu0 %v605, 120
        %v667 = vpop.permute.xlu0 %666
        %v669 = vsel %vm606, %v665, 0
        %v672 = vsel %vm606, %v667, 0
        %674 = vmatpush.bf16.xpose.msra.mxu0 0
        %675 = vmatpush.bf16.xpose.msra.mxu0 0
        %676 = vmatpush.bf16.xpose.msra.mxu0 0
        %677 = vmatpush.bf16.xpose.msra.mxu0 0
        %678 = vmatpush.bf16.xpose.msra.mxu0 0
        %679 = vmatpush.bf16.xpose.msra.mxu0 0
        %680 = vmatpush.bf16.xpose.msra.mxu0 0
        %681 = vmatpush.bf16.xpose.msra.mxu0 %v672
        %682 = vmatmul.bf16.gmra.mxu0 %v669
        %v683 = vpop.f32.mrf.mxu0
        %v684 = vadd.f32 %v602, %v683
        %v685 = vpop.f32.mrf.mxu0
        %686 = vdwg.mxu0
        %v687 = vsel %vm606, %v684, -inf
        %688 = vmax.xlane.f32.xlu0 %v687
        %v689 = vpop.xlane.xlu0 %688
        %v690 = vsub.f32 %v684, %v689
        %v691 = vmul.f32 %v690, 1.442695
        %v692 = vpow.pop %v691
        %v693 = vsel %vm606, %v692, 0.0
        %694 = vadd.xlane.f32.xlu0 %v693
        %v695 = vpop.xlane.xlu0 %694
        %v696 = vrcp.pop %v695
        %v697 = vmul.f32 %v692, %v696
        %v698 = vpack.c.bf16 %v697, %v697
        %699 = vrot.lane.b32.xlu0 %v605, 88
        %v700 = vpop.permute.xlu0 %699
        %v702 = vsel %vm606, %v698, 0
        %v705 = vsel %vm644, %v700, 0
        %707 = vmatpush.bf16.msra.mxu0 0
        %708 = vmatpush.bf16.msra.mxu0 0
        %709 = vmatpush.bf16.msra.mxu0 0
        %710 = vmatpush.bf16.msra.mxu0 0
        %711 = vmatpush.bf16.msra.mxu0 0
        %712 = vmatpush.bf16.msra.mxu0 0
        %713 = vmatpush.bf16.msra.mxu0 0
        %714 = vmatpush.bf16.msra.mxu0 %v705
        %715 = vmatmul.bf16.gmra.mxu0 %v702
        %v716 = vpop.f32.mrf.mxu0
        %v717 = vadd.f32 0.0, %v716
        %v718 = vpop.f32.mrf.mxu0
        %719 = vdwg.mxu0
        %v720 = vpack.c.bf16 %v717, %v717
        %v721 = vld [vmem:[%s10 + $0x4] sm:$0xf]
        %v723 = vsel %vm606, %v720, 0
        %v726 = vsel %vm644, %v721, 0
        %728 = vmatpush.bf16.msra.mxu0 0
        %729 = vmatpush.bf16.msra.mxu0 0
        %730 = vmatpush.bf16.msra.mxu0 0
        %731 = vmatpush.bf16.msra.mxu0 0
        %732 = vmatpush.bf16.msra.mxu0 0
        %733 = vmatpush.bf16.msra.mxu0 0
        %734 = vmatpush.bf16.msra.mxu0 0
        %735 = vmatpush.bf16.msra.mxu0 %v726
        %736 = vmatmul.bf16.gmra.mxu0 %v723
        %v737 = vpop.f32.mrf.mxu0
        %v738 = vadd.f32 0.0, %v737
        %v739 = vpop.f32.mrf.mxu0
        %740 = vdwg.mxu0
        %v742 = vsel %vm606, %v661, 0
        %v745 = vsel %vm644, %v662, 0
        %747 = vmatpush.bf16.msra.mxu0 0
        %748 = vmatpush.bf16.msra.mxu0 0
        %749 = vmatpush.bf16.msra.mxu0 0
        %750 = vmatpush.bf16.msra.mxu0 0
        %751 = vmatpush.bf16.msra.mxu0 0
        %752 = vmatpush.bf16.msra.mxu0 0
        %753 = vmatpush.bf16.msra.mxu0 0
        %754 = vmatpush.bf16.msra.mxu0 %v745
        %755 = vmatmul.bf16.gmra.mxu0 %v742
        %v756 = vpop.f32.mrf.mxu0
        %v757 = vadd.f32 %v738, %v756
        %v758 = vpop.f32.mrf.mxu0
        %759 = vdwg.mxu0
        %760 = vrot.lane.b32.xlu0 %v604, 112
        %v761 = vpop.permute.xlu0 %760
        %762 = vrot.lane.b32.xlu0 %v605, 112
        %v763 = vpop.permute.xlu0 %762
        %v765 = vsel %vm606, %v761, 0
        %v768 = vsel %vm606, %v763, 0
        %770 = vmatpush.bf16.xpose.msra.mxu0 0
        %771 = vmatpush.bf16.xpose.msra.mxu0 0
        %772 = vmatpush.bf16.xpose.msra.mxu0 0
        %773 = vmatpush.bf16.xpose.msra.mxu0 0
        %774 = vmatpush.bf16.xpose.msra.mxu0 0
        %775 = vmatpush.bf16.xpose.msra.mxu0 0
        %776 = vmatpush.bf16.xpose.msra.mxu0 0
        %777 = vmatpush.bf16.xpose.msra.mxu0 %v768
        %778 = vmatmul.bf16.gmra.mxu0 %v765
        %v779 = vpop.f32.mrf.mxu0
        %v780 = vadd.f32 %v602, %v779
        %v781 = vpop.f32.mrf.mxu0
        %782 = vdwg.mxu0
        %v783 = vsel %vm606, %v780, -inf
        %784 = vmax.xlane.f32.xlu0 %v783
        %v785 = vpop.xlane.xlu0 %784
        %v786 = vsub.f32 %v780, %v785
        %v787 = vmul.f32 %v786, 1.442695
        %v788 = vpow.pop %v787
        %v789 = vsel %vm606, %v788, 0.0
        %790 = vadd.xlane.f32.xlu0 %v789
        %v791 = vpop.xlane.xlu0 %790
        %v792 = vrcp.pop %v791
        %v793 = vmul.f32 %v788, %v792
        %v794 = vpack.c.bf16 %v793, %v793
        %795 = vrot.lane.b32.xlu0 %v605, 80
        %v796 = vpop.permute.xlu0 %795
        %v798 = vsel %vm606, %v794, 0
        %v801 = vsel %vm644, %v796, 0
        %803 = vmatpush.bf16.msra.mxu0 0
        %804 = vmatpush.bf16.msra.mxu0 0
        %805 = vmatpush.bf16.msra.mxu0 0
        %806 = vmatpush.bf16.msra.mxu0 0
        %807 = vmatpush.bf16.msra.mxu0 0
        %808 = vmatpush.bf16.msra.mxu0 0
        %809 = vmatpush.bf16.msra.mxu0 0
        %810 = vmatpush.bf16.msra.mxu0 %v801
        %811 = vmatmul.bf16.gmra.mxu0 %v798
        %v812 = vpop.f32.mrf.mxu0
        %v813 = vadd.f32 0.0, %v812
        %v814 = vpop.f32.mrf.mxu0
        %815 = vdwg.mxu0
        %v816 = vpack.c.bf16 %v813, %v813
        %v817 = vld [vmem:[%s10 + $0x8] sm:$0xf]
        %v819 = vsel %vm606, %v816, 0
        %v822 = vsel %vm644, %v817, 0
        %824 = vmatpush.bf16.msra.mxu0 0
        %825 = vmatpush.bf16.msra.mxu0 0
        %826 = vmatpush.bf16.msra.mxu0 0
        %827 = vmatpush.bf16.msra.mxu0 0
        %828 = vmatpush.bf16.msra.mxu0 0
        %829 = vmatpush.bf16.msra.mxu0 0
        %830 = vmatpush.bf16.msra.mxu0 0
        %831 = vmatpush.bf16.msra.mxu0 %v822
        %832 = vmatmul.bf16.gmra.mxu0 %v819
        %v833 = vpop.f32.mrf.mxu0
        %v834 = vadd.f32 0.0, %v833
        %v835 = vpop.f32.mrf.mxu0
        %836 = vdwg.mxu0
        %v837 = vadd.f32 %v757, %v834
        %838 = vrot.lane.b32.xlu0 %v604, 104
        %v839 = vpop.permute.xlu0 %838
        %840 = vrot.lane.b32.xlu0 %v605, 104
        %v841 = vpop.permute.xlu0 %840
        %v843 = vsel %vm606, %v839, 0
        %v846 = vsel %vm606, %v841, 0
        %848 = vmatpush.bf16.xpose.msra.mxu0 0
        %849 = vmatpush.bf16.xpose.msra.mxu0 0
        %850 = vmatpush.bf16.xpose.msra.mxu0 0
        %851 = vmatpush.bf16.xpose.msra.mxu0 0
        %852 = vmatpush.bf16.xpose.msra.mxu0 0
        %853 = vmatpush.bf16.xpose.msra.mxu0 0
        %854 = vmatpush.bf16.xpose.msra.mxu0 0
        %855 = vmatpush.bf16.xpose.msra.mxu0 %v846
        %856 = vmatmul.bf16.gmra.mxu0 %v843
        %v857 = vpop.f32.mrf.mxu0
        %v858 = vadd.f32 %v602, %v857
        %v859 = vpop.f32.mrf.mxu0
        %860 = vdwg.mxu0
        %v861 = vsel %vm606, %v858, -inf
        %862 = vmax.xlane.f32.xlu0 %v861
        %v863 = vpop.xlane.xlu0 %862
        %v864 = vsub.f32 %v858, %v863
        %v865 = vmul.f32 %v864, 1.442695
        %v866 = vpow.pop %v865
        %v867 = vsel %vm606, %v866, 0.0
        %868 = vadd.xlane.f32.xlu0 %v867
        %v869 = vpop.xlane.xlu0 %868
        %v870 = vrcp.pop %v869
        %v871 = vmul.f32 %v866, %v870
        %v872 = vpack.c.bf16 %v871, %v871
        %873 = vrot.lane.b32.xlu0 %v605, 72
        %v874 = vpop.permute.xlu0 %873
        %v876 = vsel %vm606, %v872, 0
        %v879 = vsel %vm644, %v874, 0
        %881 = vmatpush.bf16.msra.mxu0 0
        %882 = vmatpush.bf16.msra.mxu0 0
        %883 = vmatpush.bf16.msra.mxu0 0
        %884 = vmatpush.bf16.msra.mxu0 0
        %885 = vmatpush.bf16.msra.mxu0 0
        %886 = vmatpush.bf16.msra.mxu0 0
        %887 = vmatpush.bf16.msra.mxu0 0
        %888 = vmatpush.bf16.msra.mxu0 %v879
        %889 = vmatmul.bf16.gmra.mxu0 %v876
        %v890 = vpop.f32.mrf.mxu0
        %v891 = vadd.f32 0.0, %v890
        %v892 = vpop.f32.mrf.mxu0
        %893 = vdwg.mxu0
        %v894 = vpack.c.bf16 %v891, %v891
        %v895 = vld [vmem:[%s10 + $0xc] sm:$0xf]
        %v897 = vsel %vm606, %v894, 0
        %v900 = vsel %vm644, %v895, 0
        %902 = vmatpush.bf16.msra.mxu0 0
        %903 = vmatpush.bf16.msra.mxu0 0
        %904 = vmatpush.bf16.msra.mxu0 0
        %905 = vmatpush.bf16.msra.mxu0 0
        %906 = vmatpush.bf16.msra.mxu0 0
        %907 = vmatpush.bf16.msra.mxu0 0
        %908 = vmatpush.bf16.msra.mxu0 0
        %909 = vmatpush.bf16.msra.mxu0 %v900
        %910 = vmatmul.bf16.gmra.mxu0 %v897
        %v911 = vpop.f32.mrf.mxu0
        %v912 = vadd.f32 0.0, %v911
        %v913 = vpop.f32.mrf.mxu0
        %914 = vdwg.mxu0
        %v915 = vadd.f32 %v837, %v912
        %v917 = vperm.slane %v603, 0
        %v919 = vadd.f32 %v915, %v917
        %v920 = vadd.f32 %v473, %v919
        %921 = vst.msk [vmem:[%s471] sm:$0xff] %vm476, %v920
        %p922 = scmp.lt.s32.totalorder %s24, 1
        %s923 = scalar_select %p922, %s24, 1
        %s924 = smul.addr %s923, 8
        %s925 = scalar_lea.vmem %s12, %s924
        // Predicated region
        $region73: #{decoder_forward.10} parent=67 // pred_check
          %p926 = pneg %p314
        $region74: #{decoder_forward.10} parent=67 // pred_check_branch
          %928 = sbr.rel (%p926) target = $region76
        $region75: #{decoder_forward.10} parent=67 // pred_region
          _
        $region76: #{decoder_forward.10} parent=67 // pred_fallthru
          _
      $region68: #{decoder_forward.10} parent=5 // pred_fallthru
        _
      %p929 = scmp.le.s32.totalorder 2, %s19
      // Predicated region
      $region77: #{decoder_forward.10} parent=5 // pred_check
        %p930 = pneg %p929
      $region78: #{decoder_forward.10} parent=5 // pred_check_branch
        %932 = sbr.rel (%p930) target = $region80
      $region79: #{decoder_forward.10} parent=5 // pred_region
        %s933 = ssub.s32 %s19, 2
        // Predicated region
        $region81: #{decoder_forward.10} parent=79 // pred_check
          %p934 = pneg %p320
        $region82: #{decoder_forward.10} parent=79 // pred_check_branch
          %936 = sbr.rel (%p934) target = $region84
        $region83: #{decoder_forward.10} parent=79 // pred_region
          %p937 = scmp.lt.s32.totalorder %s25, 1
          %s938 = scalar_select %p937, %s25, 1
          %s939 = smul.addr %s938, 8
          %s940 = scalar_lea.vmem %s12, %s939
        $region84: #{decoder_forward.10} parent=79 // pred_fallthru
          _
      $region80: #{decoder_forward.10} parent=5 // pred_fallthru
        _
    $region6: #{decoder_forward.10} parent=1 // loop_footer
      %s23 = sadd.s32 1, %s19
    $region7: #{decoder_forward.10} parent=1 // loop_footer_branch
      %18 = sbr.rel target = $region3
    $region8: #{decoder_forward.10} parent=1 // loop_exit
      _
    %941 = vsyncpa [#allocation3], 1
    %s942 = scalar_lea.sflag [#allocation3], 1
    %943 = vsyncpa %s942, 1

// kernel: decoder_forward.11
$region0: #{decoder_forward.11}
  #allocation0 [shape = 'u32[]', space=smem, size = 0x4, offset = 0x4, fixed_abs, tag = 'smem constant byte address 0x4 - core index']
  #allocation1 [shape = 'u32[72,128]{1,0:T(1,128)}', space=vmem, size = 0x9000, scoped, tag = 'internal scratch']
  %s0 = inlined_call_operand.vmem [shape: f32[16,32], index: 0, kind: input, shape index: {}]
  %s1 = inlined_call_operand.vmem [shape: f32[1,32], index: 1, kind: input, shape index: {}]
  %s2 = inlined_call_operand.vmem [shape: f32[1,32], index: 2, kind: input, shape index: {}]
  %s3 = inlined_call_operand.vmem [shape: bf16[32,64], index: 3, kind: input, shape index: {}]
  %s4 = inlined_call_operand.vmem [shape: f32[1,64], index: 4, kind: input, shape index: {}]
  %s5 = inlined_call_operand.vmem [shape: bf16[64,32], index: 5, kind: input, shape index: {}]
  %s6 = inlined_call_operand.vmem [shape: f32[1,32], index: 6, kind: input, shape index: {}]
  %s7 = inlined_call_operand.hbm [shape: f32[16,32], index: 7, kind: output, shape index: {}]
  %s8 = sld [smem:[#allocation0]]
  $region38: #{decoder_forward.11} parent=0
    _
  %s10 = ssub.s32 1, %s8
  %s11 = scalar_select 0, %s10, %s8
  $region1: #{decoder_forward.11} parent=0
    #allocation2 [shape = 'u8[8192]{0}', space=vmem, size = 0x2000, scoped, tag = 'output window, operand 0, single buffered']
    #allocation3 [shape = 's32[1]{0}', space=sflag, size = 0x4, scoped, tag = 'scoped memory for decoder_forward.11']
    %12 = vsyncpa [#allocation3], 0
    // Predicated region
    $region2: #{decoder_forward.11} parent=1 // pred_check
      _
    $region3: #{decoder_forward.11} parent=1 // pred_check_branch
      %14 = sbr.rel (0) target = $region5
    $region4: #{decoder_forward.11} parent=1 // pred_region
      _
    $region5: #{decoder_forward.11} parent=1 // pred_fallthru
      _
    // Predicated region
    $region6: #{decoder_forward.11} parent=1 // pred_check
      _
    $region7: #{decoder_forward.11} parent=1 // pred_check_branch
      %16 = sbr.rel (0) target = $region9
    $region8: #{decoder_forward.11} parent=1 // pred_region
      _
    $region9: #{decoder_forward.11} parent=1 // pred_fallthru
      _
    // Predicated region
    $region10: #{decoder_forward.11} parent=1 // pred_check
      _
    $region11: #{decoder_forward.11} parent=1 // pred_check_branch
      %18 = sbr.rel (0) target = $region13
    $region12: #{decoder_forward.11} parent=1 // pred_region
      _
    $region13: #{decoder_forward.11} parent=1 // pred_fallthru
      _
    // Predicated region
    $region14: #{decoder_forward.11} parent=1 // pred_check
      _
    $region15: #{decoder_forward.11} parent=1 // pred_check_branch
      %20 = sbr.rel (0) target = $region17
    $region16: #{decoder_forward.11} parent=1 // pred_region
      _
    $region17: #{decoder_forward.11} parent=1 // pred_fallthru
      _
    // Predicated region
    $region18: #{decoder_forward.11} parent=1 // pred_check
      _
    $region19: #{decoder_forward.11} parent=1 // pred_check_branch
      %22 = sbr.rel (0) target = $region21
    $region20: #{decoder_forward.11} parent=1 // pred_region
      _
    $region21: #{decoder_forward.11} parent=1 // pred_fallthru
      _
    // Predicated region
    $region22: #{decoder_forward.11} parent=1 // pred_check
      _
    $region23: #{decoder_forward.11} parent=1 // pred_check_branch
      %24 = sbr.rel (0) target = $region25
    $region24: #{decoder_forward.11} parent=1 // pred_region
      _
    $region25: #{decoder_forward.11} parent=1 // pred_fallthru
      _
    // Predicated region
    $region26: #{decoder_forward.11} parent=1 // pred_check
      _
    $region27: #{decoder_forward.11} parent=1 // pred_check_branch
      %26 = sbr.rel (0) target = $region29
    $region28: #{decoder_forward.11} parent=1 // pred_region
      _
    $region29: #{decoder_forward.11} parent=1 // pred_fallthru
      _
    %v28 = vld [vmem:[%s0] sm:$0xff]
    %v29 = vld [vmem:[%s0 + $0x8] sm:$0xff]
    %v30 = vld [vmem:[%s1] sm:$0x1]
    %v31 = vld [vmem:[%s2] sm:$0x1]
    %vm32 = vcmask 261120
    %v33 = vsel %vm32, %v28, 0.0
    %34 = vadd.xlane.f32.xlu0 %v33
    %v35 = vpop.xlane.xlu0 %34
    %v36 = vsel %vm32, %v29, 0.0
    %37 = vadd.xlane.f32.xlu0 %v36
    %v38 = vpop.xlane.xlu0 %37
    %v39 = vrcp.pop 32.0
    %v40 = vmul.f32 32.0, %v39
    %v41 = vsub.f32 1.0, %v40
    %v42 = vmul.f32 %v39, %v41
    %v43 = vadd.f32 %v39, %v42
    %vm44 = vweird.f32 %v39
    %v45 = vsel %vm44, %v39, %v43
    %v46 = vmul.f32 %v35, %v45
    %v47 = vmul.f32 %v38, %v45
    %v48 = vsub.f32 %v28, %v46
    %v49 = vsub.f32 %v29, %v47
    %v50 = vmul.f32 %v48, %v48
    %v51 = vmul.f32 %v49, %v49
    %v52 = vsel %vm32, %v50, 0.0
    %53 = vadd.xlane.f32.xlu0 %v52
    %v54 = vpop.xlane.xlu0 %53
    %v55 = vsel %vm32, %v51, 0.0
    %56 = vadd.xlane.f32.xlu0 %v55
    %v57 = vpop.xlane.xlu0 %56
    %v58 = vmul.f32 %v54, %v45
    %v59 = vmul.f32 %v57, %v45
    %v60 = vadd.f32 %v58, 1e-05
    %v61 = vadd.f32 %v59, 1e-05
    %v62 = vrsqrt.pop %v60
    %v63 = vmul.f32 %v62, %v60
    %v64 = vmul.f32 %v63, %v62
    %v65 = vmul.f32 0.5, %v64
    %v66 = vsub.f32 1.5, %v65
    %v67 = vmul.f32 %v62, %v66
    %vm68 = vweird.f32 %v60
    %vm69 = vweird.f32 %v62
    %vm70 = vmor %vm68, %vm69
    %v71 = vsel %vm70, %v62, %v67
    %v72 = vrsqrt.pop %v61
    %v73 = vmul.f32 %v72, %v61
    %v74 = vmul.f32 %v73, %v72
    %v75 = vmul.f32 0.5, %v74
    %v76 = vsub.f32 1.5, %v75
    %v77 = vmul.f32 %v72, %v76
    %vm78 = vweird.f32 %v61
    %vm79 = vweird.f32 %v72
    %vm80 = vmor %vm78, %vm79
    %v81 = vsel %vm80, %v72, %v77
    %v82 = vmul.f32 %v48, %v71
    %v83 = vmul.f32 %v49, %v81
    %v85 = vperm.slane %v30, 0
    %v87 = vmul.f32 %v82, %v85
    %v88 = vmul.f32 %v83, %v85
    %v90 = vperm.slane %v31, 0
    %v92 = vadd.f32 %v87, %v90
    %v93 = vadd.f32 %v88, %v90
    %v94 = vpack.c.bf16 %v93, %v92
    %v95 = vld [vmem:[%s3] sm:$0xf]
    %v96 = vld [vmem:[%s3 + $0x4] sm:$0xf]
    %v97 = vld [vmem:[%s3 + $0x8] sm:$0xf]
    %v98 = vld [vmem:[%s3 + $0xc] sm:$0xf]
    %v99 = vld [vmem:[%s4] sm:$0x1]
    %v101 = vperm.slane %v99, 0
    %v107 = vunpack.c.l.b16 %v95
    %v108 = vunpack.c.l.b16 %v96
    %v109 = vunpack.c.l.b16 %v97
    %v110 = vunpack.c.l.b16 %v98
    %v111 = vpack.c.b16 %v108, %v107
    %v112 = vpack.c.b16 %v110, %v109
    %v116 = vsel %vm32, %v94, 0
    %118 = vmatpush.bf16.msra.mxu0 0
    %119 = vmatpush.bf16.msra.mxu0 0
    %120 = vmatpush.bf16.msra.mxu0 0
    %121 = vmatpush.bf16.msra.mxu0 0
    %122 = vmatpush.bf16.msra.mxu0 0
    %123 = vmatpush.bf16.msra.mxu0 0
    %124 = vmatpush.bf16.msra.mxu0 %v112
    %125 = vmatpush.bf16.msra.mxu0 %v111
    %126 = vmatmul.bf16.gmra.mxu0 %v116
    %v127 = vpop.f32.mrf.mxu0
    %v128 = vadd.f32 %v101, %v127
    %v129 = vpop.f32.mrf.mxu0
    %v130 = vadd.f32 %v101, %v129
    %131 = vdwg.mxu0
    %v132 = vmax.f32 %v128, 0.0
    %v133 = vmax.f32 %v130, 0.0
    %v134 = vpack.c.bf16 %v133, %v132
    %v135 = vld [vmem:[%s5] sm:$0xf]
    %v136 = vld [vmem:[%s5 + $0x4] sm:$0xf]
    %v137 = vld [vmem:[%s5 + $0x8] sm:$0xf]
    %v138 = vld [vmem:[%s5 + $0xc] sm:$0xf]
    %v139 = vld [vmem:[%s5 + $0x10] sm:$0xf]
    %v140 = vld [vmem:[%s5 + $0x14] sm:$0xf]
    %v141 = vld [vmem:[%s5 + $0x18] sm:$0xf]
    %v142 = vld [vmem:[%s5 + $0x1c] sm:$0xf]
    %v143 = vld [vmem:[%s6] sm:$0x1]
    %v145 = vperm.slane %v143, 0
    %v155 = vunpack.c.l.b16 %v135
    %v156 = vunpack.c.l.b16 %v136
    %v157 = vunpack.c.l.b16 %v137
    %v158 = vunpack.c.l.b16 %v138
    %v159 = vunpack.c.l.b16 %v139
    %v160 = vunpack.c.l.b16 %v140
    %v161 = vunpack.c.l.b16 %v141
    %v162 = vunpack.c.l.b16 %v142
    %v163 = vpack.c.b16 %v156, %v155
    %v164 = vpack.c.b16 %v158, %v157
    %v165 = vpack.c.b16 %v160, %v159
    %v166 = vpack.c.b16 %v162, %v161
    %vm171 = vcmask 523264
    %v173 = vsel %vm171, %v134, 0
    %175 = vmatpush.bf16.msra.mxu0 0
    %176 = vmatpush.bf16.msra.mxu0 0
    %177 = vmatpush.bf16.msra.mxu0 0
    %178 = vmatpush.bf16.msra.mxu0 0
    %179 = vmatpush.bf16.msra.mxu0 %v166
    %180 = vmatpush.bf16.msra.mxu0 %v165
    %181 = vmatpush.bf16.msra.mxu0 %v164
    %182 = vmatpush.bf16.msra.mxu0 %v163
    %183 = vmatmul.bf16.gmra.mxu0 %v173
    %v184 = vpop.f32.mrf.mxu0
    %v185 = vadd.f32 %v145, %v184
    %v186 = vpop.f32.mrf.mxu0
    %v187 = vadd.f32 %v145, %v186
    %188 = vdwg.mxu0
    %v189 = vadd.f32 %v28, %v185
    %v190 = vadd.f32 %v29, %v187
    %191 = vst.msk [vmem:[#allocation2] sm:$0xff] %vm32, %v189
    %192 = vst.msk [vmem:[#allocation2 + $0x8] sm:$0xff] %vm32, %v190
    // Predicated region
    $region30: #{decoder_forward.11} parent=1 // pred_check
      _
    $region31: #{decoder_forward.11} parent=1 // pred_check_branch
      %194 = sbr.rel (0) target = $region33
    $region32: #{decoder_forward.11} parent=1 // pred_region
      %196 = vsyncadd [#allocation3], 0
      %s197 = sshll.u32 [#allocation2], 4
      %s198 = int_to_ptr.vmem [resolvable:$true] %s197
      %s199 = sshll.u32 %s7, 4
      %s200 = int_to_ptr.hbm [resolvable:$true] %s199
      %205 = dma.vmem_to_hbm [thread:$0]  %s198, 256, %s200, [#allocation3], 128, 128, 8
    $region33: #{decoder_forward.11} parent=1 // pred_fallthru
      _
    // Predicated region
    $region34: #{decoder_forward.11} parent=1 // pred_check
      _
    $region35: #{decoder_forward.11} parent=1 // pred_check_branch
      %207 = sbr.rel (0) target = $region37
    $region36: #{decoder_forward.11} parent=1 // pred_region
      %209 = dma.done [#allocation3], 256
    $region37: #{decoder_forward.11} parent=1 // pred_fallthru
      _
    %210 = vsyncpa [#allocation3], 1

</llo_original>
